<compile_context>
chip_gen: v7x
topology: tpu7x:2x2x1
jax: 0.10.0
libtpu: 0.0.40
codegen_flags: <defaults>
</compile_context>

<pallas_src>
import functools
from typing import NamedTuple

import jax
import jax.numpy as jnp
from jax.experimental import pallas as pl
from jax.experimental.pallas import tpu as pltpu


# ----------------------------------------------------------------------------
# Kernels (K fully resident -> single dot per grid step, fused f32 epilogue)
# ----------------------------------------------------------------------------
def _linear_relu_kernel(x_ref, w_ref, b_ref, o_ref):
    """o = relu(x @ w + b); x,w bf16 tiles, f32 accumulate, bf16 out."""
    acc = jnp.dot(x_ref[...], w_ref[...], preferred_element_type=jnp.float32)
    o_ref[...] = jnp.maximum(acc + b_ref[...], 0.0).astype(o_ref.dtype)


def _linear_residual_kernel(h_ref, w_ref, b_ref, r_ref, o_ref):
    """o = h @ w + b + residual; h,w bf16 tiles, f32 accumulate + f32 residual."""
    acc = jnp.dot(h_ref[...], w_ref[...], preferred_element_type=jnp.float32)
    o_ref[...] = (acc + b_ref[...] + r_ref[...]).astype(o_ref.dtype)


# ----------------------------------------------------------------------------
# Per-chip configuration
# ----------------------------------------------------------------------------
def _select_chip_config():
    """Returns (tn, vmem_limit_bytes) tuned per TPU generation."""
    tn, vmem_limit = 512, 48 * 1024 * 1024          # safe default (v7x: 64 MiB VMEM/TC)
    try:
        info = pltpu.get_tpu_info()
        vmem_cap = getattr(info, "vmem_capacity_bytes", None)
        if vmem_cap is not None and vmem_cap >= 100 * 1024 * 1024:
            tn, vmem_limit = 1024, 96 * 1024 * 1024  # v5e / v6e: 128 MiB VMEM
    except Exception:
        pass                                         # conservative default everywhere
    return tn, vmem_limit


def _choose_tm(batch, tm_max=256):
    b8 = max(8, -(-batch // 8) * 8)
    return b8 if b8 <= tm_max else tm_max


# ----------------------------------------------------------------------------
# One-time weight preparation (cast + pad + slab-pack) — NOT in the forward path
# ----------------------------------------------------------------------------
class ResNetParams(NamedTuple):
    w1: jax.Array      # (n_pad // tn, k1_pad, tn) bf16 contiguous slabs
    b1: jax.Array      # (1, n_pad) f32
    w2: jax.Array      # (n_pad // tn, n_pad, tn) bf16 contiguous slabs
    b2: jax.Array      # (1, n_pad) f32
    d: int
    tn: int
    vmem_limit: int


def prepare_resnet_params(w1, b1, w2, b2, *, tm_max=256):
    """Pre-cast to bf16, zero-pad, and pack weights into contiguous N-slabs."""
    D = w1.shape[0]
    assert w1.shape == (D, D) and w2.shape == (D, D)
    tn, vmem_limit = _select_chip_config()

    # K only needs the bf16 sublane multiple (16); only N needs a tn multiple.
    k1_pad = -(-D // 16) * 16

    # VMEM-fit guard for the K-resident design: shrink tn rather than fail.
    while tn > 128:
        n_pad = -(-D // tn) * tn
        k_worst = n_pad                                 # layer-2 K == n_pad
        est = (2 * k_worst * tn * 2                     # double-buffered weight slab
               + 2 * tm_max * k_worst * 2               # activation block (bf16)
               + 2 * tm_max * tn * 4 * 2                # output + residual blocks (f32)
               + 2 * tn * 4)                            # bias block
        if est <= int(vmem_limit * 0.8):
            break
        tn //= 2
    n_pad = -(-D // tn) * tn

    def pack(w, k_pad):
        wp = jnp.pad(w.astype(jnp.bfloat16), ((0, k_pad - D), (0, n_pad - D)))
        # (k_pad, n_pad) -> (n_pad//tn, k_pad, tn): each slab j == w[:, j*tn:(j+1)*tn],
        # stored contiguously so the weight DMA per grid step is one big segment.
        return wp.reshape(k_pad, n_pad // tn, tn).transpose(1, 0, 2)

    w1p = pack(w1, k1_pad)                              # layer-1 K padded only to 16
    w2p = pack(w2, n_pad)                               # layer-2 K is the hidden n_pad
    b1p = jnp.pad(b1.astype(jnp.float32), (0, n_pad - D)).reshape(1, n_pad)
    b2p = jnp.pad(b2.astype(jnp.float32), (0, n_pad - D)).reshape(1, n_pad)
    w1p, b1p, w2p, b2p = jax.block_until_ready((w1p, b1p, w2p, b2p))
    return ResNetParams(w1p, b1p, w2p, b2p, D, tn, vmem_limit)


# ----------------------------------------------------------------------------
# pallas_call wrappers
# ----------------------------------------------------------------------------
def _compiler_params(vmem_limit):
    return pltpu.CompilerParams(
        # Outer N axis "parallel": v7x megacore splits disjoint weight slabs.
        # Inner M axis "arbitrary": weight block index is unchanged across it,
        # so Pallas keeps the slab resident (no re-streaming as batch grows).
        dimension_semantics=("parallel", "arbitrary"),
        vmem_limit_bytes=vmem_limit,
    )


def _linear_relu(x, w, b, *, tm, tn, vmem_limit):
    m, k = x.shape
    nt = w.shape[0]
    n = nt * tn
    cost = pl.CostEstimate(flops=2 * m * k * n, transcendentals=0,
                           bytes_accessed=w.size * 2 + x.size * 2 + b.size * 4 + m * n * 2)
    return pl.pallas_call(
        _linear_relu_kernel,
        out_shape=jax.ShapeDtypeStruct((m, n), jnp.bfloat16),
        grid_spec=pltpu.PrefetchScalarGridSpec(
            num_scalar_prefetch=0,
            grid=(nt, m // tm),                                   # (N slabs, M tiles)
            in_specs=[
                pl.BlockSpec((tm, k), lambda j, i: (i, 0)),       # activations, K resident
                pl.BlockSpec((None, k, tn), lambda j, i: (j, 0, 0)),  # contiguous weight slab
                pl.BlockSpec((1, tn), lambda j, i: (0, j)),       # bias
            ],
            out_specs=pl.BlockSpec((tm, tn), lambda j, i: (i, j)),
        ),
        compiler_params=_compiler_params(vmem_limit),
        cost_estimate=cost,
    )(x, w, b)


def _linear_residual(h, w, b, res, *, tm, tn, vmem_limit):
    m, k = h.shape
    nt = w.shape[0]
    n = nt * tn
    cost = pl.CostEstimate(flops=2 * m * k * n, transcendentals=0,
                           bytes_accessed=w.size * 2 + h.size * 2 + b.size * 4
                           + res.size * 4 + m * n * 4)
    return pl.pallas_call(
        _linear_residual_kernel,
        out_shape=jax.ShapeDtypeStruct((m, n), res.dtype),
        grid_spec=pltpu.PrefetchScalarGridSpec(
            num_scalar_prefetch=0,
            grid=(nt, m // tm),
            in_specs=[
                pl.BlockSpec((tm, k), lambda j, i: (i, 0)),       # hidden acts, K resident
                pl.BlockSpec((None, k, tn), lambda j, i: (j, 0, 0)),  # contiguous weight slab
                pl.BlockSpec((1, tn), lambda j, i: (0, j)),       # bias
                pl.BlockSpec((tm, tn), lambda j, i: (i, j)),      # skip / residual (f32)
            ],
            out_specs=pl.BlockSpec((tm, tn), lambda j, i: (i, j)),
        ),
        compiler_params=_compiler_params(vmem_limit),
        cost_estimate=cost,
    )(h, w, b, res)


@functools.partial(jax.jit, static_argnames=("tm", "tn", "vmem_limit"))
def _forward_impl(x, w1, b1, w2, b2, *, tm, tn, vmem_limit):
    B, D = x.shape
    k1_pad = w1.shape[1]
    n_pad = b1.shape[1]
    b_pad = -(-B // tm) * tm

    # Only cheap activation padding happens per call (weights are pre-packed).
    x_res = jnp.pad(x.astype(jnp.float32), ((0, b_pad - B), (0, n_pad - D)))   # residual
    x_in = jnp.pad(x, ((0, b_pad - B), (0, k1_pad - D))).astype(jnp.bfloat16)  # layer-1 input

    h = _linear_relu(x_in, w1, b1, tm=tm, tn=tn, vmem_limit=vmem_limit)        # bf16 hidden
    y = _linear_residual(h, w2, b2, x_res, tm=tm, tn=tn, vmem_limit=vmem_limit)
    return y[:B, :D]


def resnet_forward(x, params: ResNetParams):
    """y = relu(x @ w1 + b1) @ w2 + b2 + x  (weights stored as (in, out))."""
    tm = _choose_tm(x.shape[0])
    return _forward_impl(x, params.w1, params.b1, params.w2, params.b2,
                         tm=tm, tn=params.tn, vmem_limit=params.vmem_limit)


def resnet_forward_ref(x, w1, b1, w2, b2):
    h = jnp.maximum(x @ w1 + b1, 0.0)
    return h @ w2 + b2 + x


# ----------------------------------------------------------------------------
# Main
# ----------------------------------------------------------------------------
if __name__ == "__main__":
    # Small shapes consistent with the module (Linear(D, D) + skip); D is
    # deliberately NOT a multiple of 128 to exercise the padding path that the
    # real D=10000 needs.
    B, D = 4, 1000
    key = jax.random.PRNGKey(0)
    kx, k1, kb1, k2, kb2 = jax.random.split(key, 5)

    scale = 1.0 / jnp.sqrt(jnp.float32(D))
    x = jax.random.normal(kx, (B, D), dtype=jnp.float32)
    # Weights stored as (in, out); equivalent to torch Linear weight.T
    w1 = jax.random.normal(k1, (D, D), dtype=jnp.float32) * scale
    b1 = jax.random.normal(kb1, (D,), dtype=jnp.float32) * scale
    w2 = jax.random.normal(k2, (D, D), dtype=jnp.float32) * scale
    b2 = jax.random.normal(kb2, (D,), dtype=jnp.float32) * scale

    # One-time weight preparation (cast / pad / slab-pack) — outside the hot path.
    params = prepare_resnet_params(w1, b1, w2, b2)

    out = resnet_forward(x, params)
    out = jax.block_until_ready(out)

    ref = resnet_forward_ref(x, w1, b1, w2, b2)
    assert out.shape == (B, D)
    # bf16 weight/activation streaming with f32 accumulation: ~1e-2 level error
    assert jnp.allclose(out, ref, atol=5e-2, rtol=5e-2), "mismatch vs reference"

    print("KERNEL_OK")
</pallas_src>

<mosaic_0001>
module attributes {stable_mosaic.version = 11 : i64} {
  func.func @_linear_relu_kernel(%arg0: i32, %arg1: i32, %arg2: memref<8x1008xbf16, #tpu.memory_space<vmem>>, %arg3: memref<1x1008x512xbf16, #tpu.memory_space<vmem>>, %arg4: memref<1x512xf32, #tpu.memory_space<vmem>>, %arg5: memref<8x512xbf16, #tpu.memory_space<vmem>>) attributes {dimension_semantics = [#tpu.dimension_semantics<parallel>, #tpu.dimension_semantics<arbitrary>], iteration_bounds = array<i64: 2, 1>, scalar_prefetch = 0 : i64, scratch_operands = 0 : i64, tpu.core_type = #tpu.core_type<tc>, window_params = [{transform_indices = @transform_0, window_bounds = array<i64: 8, 1008>}, {transform_indices = @transform_1, window_bounds = array<i64: 1, 1008, 512>}, {transform_indices = @transform_2, window_bounds = array<i64: 1, 512>}, {transform_indices = @transform_3, window_bounds = array<i64: 8, 512>}]} {
    %c0 = arith.constant 0 : index
    %c0_0 = arith.constant 0 : index
    %0 = vector.load %arg2[%c0, %c0_0] : memref<8x1008xbf16, #tpu.memory_space<vmem>>, vector<8x1008xbf16>
    %c0_1 = arith.constant 0 : index
    %c0_2 = arith.constant 0 : index
    %c0_3 = arith.constant 0 : index
    %1 = vector.load %arg3[%c0_1, %c0_2, %c0_3] : memref<1x1008x512xbf16, #tpu.memory_space<vmem>>, vector<1x1008x512xbf16>
    %2 = vector.shape_cast %1 : vector<1x1008x512xbf16> to vector<1008x512xbf16>
    %cst = arith.constant dense<0.000000e+00> : vector<8x512xf32>
    %3 = tpu.matmul %0, %2, %cst {dimension_numbers = #tpu.dot_dimension_numbers<[1], [0], [0], [1], [0, 0, 1, 1], [], []>} : vector<8x1008xbf16>, vector<1008x512xbf16>, vector<8x512xf32> -> vector<8x512xf32>
    %c0_4 = arith.constant 0 : index
    %c0_5 = arith.constant 0 : index
    %4 = vector.load %arg4[%c0_4, %c0_5] : memref<1x512xf32, #tpu.memory_space<vmem>>, vector<1x512xf32>
    %5 = vector.broadcast %4 : vector<1x512xf32> to vector<8x512xf32>
    %6 = arith.addf %3, %5 : vector<8x512xf32>
    %cst_6 = arith.constant 0.000000e+00 : f32
    %7 = vector.broadcast %cst_6 : f32 to vector<8x512xf32>
    %8 = arith.maximumf %6, %7 : vector<8x512xf32>
    %9 = arith.truncf %8 : vector<8x512xf32> to vector<8x512xbf16>
    %c0_7 = arith.constant 0 : index
    %c0_8 = arith.constant 0 : index
    %10 = vector.load %arg5[%c0_7, %c0_8] : memref<8x512xbf16, #tpu.memory_space<vmem>>, vector<8x512xbf16>
    tpu.vector_store %arg5[%c0_7, %c0_8], %9 {strides = array<i32>} : memref<8x512xbf16, #tpu.memory_space<vmem>>, vector<8x512xbf16>,
    return
  }
  func.func @transform_0(%arg0: i32, %arg1: i32) -> (i32, i32) {
    %c0_i32 = arith.constant 0 : i32
    %c0_i32_0 = arith.constant 0 : i32
    return %arg1, %c0_i32 : i32, i32
  }
  func.func @transform_1(%arg0: i32, %arg1: i32) -> (i32, i32, i32) {
    %c0_i32 = arith.constant 0 : i32
    %c0_i32_0 = arith.constant 0 : i32
    %c0_i32_1 = arith.constant 0 : i32
    return %arg0, %c0_i32, %c0_i32_0 : i32, i32, i32
  }
  func.func @transform_2(%arg0: i32, %arg1: i32) -> (i32, i32) {
    %c0_i32 = arith.constant 0 : i32
    %c0_i32_0 = arith.constant 0 : i32
    return %c0_i32, %arg0 : i32, i32
  }
  func.func @transform_3(%arg0: i32, %arg1: i32) -> (i32, i32) {
    %c0_i32 = arith.constant 0 : i32
    return %arg1, %arg0 : i32, i32
  }
}

module attributes {stable_mosaic.version = 11 : i64} {
  func.func @_linear_residual_kernel(%arg0: i32, %arg1: i32, %arg2: memref<8x1024xbf16, #tpu.memory_space<vmem>>, %arg3: memref<1x1024x512xbf16, #tpu.memory_space<vmem>>, %arg4: memref<1x512xf32, #tpu.memory_space<vmem>>, %arg5: memref<8x512xf32, #tpu.memory_space<vmem>>, %arg6: memref<8x512xf32, #tpu.memory_space<vmem>>) attributes {dimension_semantics = [#tpu.dimension_semantics<parallel>, #tpu.dimension_semantics<arbitrary>], iteration_bounds = array<i64: 2, 1>, scalar_prefetch = 0 : i64, scratch_operands = 0 : i64, tpu.core_type = #tpu.core_type<tc>, window_params = [{transform_indices = @transform_0, window_bounds = array<i64: 8, 1024>}, {transform_indices = @transform_1, window_bounds = array<i64: 1, 1024, 512>}, {transform_indices = @transform_2, window_bounds = array<i64: 1, 512>}, {transform_indices = @transform_3, window_bounds = array<i64: 8, 512>}, {transform_indices = @transform_4, window_bounds = array<i64: 8, 512>}]} {
    %c0 = arith.constant 0 : index
    %c0_0 = arith.constant 0 : index
    %0 = vector.load %arg2[%c0, %c0_0] : memref<8x1024xbf16, #tpu.memory_space<vmem>>, vector<8x1024xbf16>
    %c0_1 = arith.constant 0 : index
    %c0_2 = arith.constant 0 : index
    %c0_3 = arith.constant 0 : index
    %1 = vector.load %arg3[%c0_1, %c0_2, %c0_3] : memref<1x1024x512xbf16, #tpu.memory_space<vmem>>, vector<1x1024x512xbf16>
    %2 = vector.shape_cast %1 : vector<1x1024x512xbf16> to vector<1024x512xbf16>
    %cst = arith.constant dense<0.000000e+00> : vector<8x512xf32>
    %3 = tpu.matmul %0, %2, %cst {dimension_numbers = #tpu.dot_dimension_numbers<[1], [0], [0], [1], [0, 0, 1, 1], [], []>} : vector<8x1024xbf16>, vector<1024x512xbf16>, vector<8x512xf32> -> vector<8x512xf32>
    %c0_4 = arith.constant 0 : index
    %c0_5 = arith.constant 0 : index
    %4 = vector.load %arg4[%c0_4, %c0_5] : memref<1x512xf32, #tpu.memory_space<vmem>>, vector<1x512xf32>
    %5 = vector.broadcast %4 : vector<1x512xf32> to vector<8x512xf32>
    %6 = arith.addf %3, %5 : vector<8x512xf32>
    %c0_6 = arith.constant 0 : index
    %c0_7 = arith.constant 0 : index
    %7 = vector.load %arg5[%c0_6, %c0_7] : memref<8x512xf32, #tpu.memory_space<vmem>>, vector<8x512xf32>
    %8 = arith.addf %6, %7 : vector<8x512xf32>
    %c0_8 = arith.constant 0 : index
    %c0_9 = arith.constant 0 : index
    %9 = vector.load %arg6[%c0_8, %c0_9] : memref<8x512xf32, #tpu.memory_space<vmem>>, vector<8x512xf32>
    tpu.vector_store %arg6[%c0_8, %c0_9], %8 {strides = array<i32>} : memref<8x512xf32, #tpu.memory_space<vmem>>, vector<8x512xf32>,
    return
  }
  func.func @transform_0(%arg0: i32, %arg1: i32) -> (i32, i32) {
    %c0_i32 = arith.constant 0 : i32
    %c0_i32_0 = arith.constant 0 : i32
    return %arg1, %c0_i32 : i32, i32
  }
  func.func @transform_1(%arg0: i32, %arg1: i32) -> (i32, i32, i32) {
    %c0_i32 = arith.constant 0 : i32
    %c0_i32_0 = arith.constant 0 : i32
    %c0_i32_1 = arith.constant 0 : i32
    return %arg0, %c0_i32, %c0_i32_0 : i32, i32, i32
  }
  func.func @transform_2(%arg0: i32, %arg1: i32) -> (i32, i32) {
    %c0_i32 = arith.constant 0 : i32
    %c0_i32_0 = arith.constant 0 : i32
    return %c0_i32, %arg0 : i32, i32
  }
  func.func @transform_3(%arg0: i32, %arg1: i32) -> (i32, i32) {
    %c0_i32 = arith.constant 0 : i32
    return %arg1, %arg0 : i32, i32
  }
  func.func @transform_4(%arg0: i32, %arg1: i32) -> (i32, i32) {
    %c0_i32 = arith.constant 0 : i32
    return %arg1, %arg0 : i32, i32
  }
}

</mosaic_0001>

<llo_original>
// kernel: _forward_impl.3
$region0: #{_forward_impl.3}
  #allocation0 [shape = 'u32[]', space=smem, size = 0x4, offset = 0x4, fixed_abs, tag = 'smem constant byte address 0x4 - core index']
  #allocation1 [shape = 'u32[144,128]{1,0:T(1,128)}', space=vmem, size = 0x12000, scoped, tag = 'internal scratch']
  %s0 = inlined_call_operand.vmem [shape: bf16[8,1024], index: 0, kind: input, shape index: {}]
  %s1 = inlined_call_operand.vmem [shape: bf16[2,1024,512], index: 1, kind: input, shape index: {}]
  %s2 = inlined_call_operand.vmem [shape: f32[1,1024], index: 2, kind: input, shape index: {}]
  %s3 = inlined_call_operand.vmem [shape: f32[8,1024], index: 3, kind: input, shape index: {}]
  %s4 = inlined_call_operand.vmem [shape: f32[8,1024], index: 4, kind: output, shape index: {}]
  %s5 = sld [smem:[#allocation0]]
  $region49: #{_forward_impl.3} parent=0
    _
  %s7 = ssub.s32 1, %s5
  %s8 = scalar_select 0, %s7, %s5
  loop: start=0, step=1, limit=4
  $region2: #{_forward_impl.3} parent=0 // loop_pre_header
    _
  $region3: #{_forward_impl.3} parent=0 // loop_header
    %s10 = sphi 0, %s14
    %p11 = scmp.ge.s32.totalorder %s10, 4
    %s17 = sphi 0, %s29
    %s18 = sphi 0, %s25
    %s19 = sphi 0, %s17
    %s20 = sphi 0, %s18
    %s21 = sphi 0, %s19
    %s22 = sphi 0, %s20
    %s32 = sphi 0, %s34
    %s35 = sphi 0, %s32
    %s36 = sphi 0, %s35
    %s52 = sphi 0, %s36
    %s58 = sphi 0, %s60
    %s61 = sphi 0, %s58
    %s62 = sphi 0, %s61
    %s78 = sphi 0, %s62
    %s84 = sphi 0, %s86
    %s87 = sphi 0, %s84
    %s88 = sphi 0, %s87
    %s104 = sphi 0, %s88
    %s112 = sphi 0, %s114
    %s115 = sphi 0, %s112
    %s116 = sphi 0, %s115
    %s132 = sphi 0, %s116
    %s140 = sphi 0, %s142
    %s143 = sphi 0, %s140
    %s144 = sphi 0, %s143
    %s160 = sphi 0, %s144
  $region4: #{_forward_impl.3} parent=0 // loop_header_branch
    %13 = sbr.rel (%p11) target = $region8
  $region5: #{_forward_impl.3} parent=0 // loop_body
    %s15 = ssub.s32 %s10, 1
    %s16 = ssub.s32 %s10, 2
    %s23 = sadd.s32 1, %s18
    %p24 = scmp.ge.s32.totalorder %s23, 1
    %s25 = scalar_select %p24, 0, %s23
    %s26 = sadd.s32 1, %s17
    %s27 = scalar_select %p24, %s26, %s17
    %p28 = scmp.ge.s32.totalorder %s27, 2
    %s29 = scalar_select %p28, 0, %s27
    %s30 = ssub.s32 %s18, %s25
    %p31 = scmp.eq.s32.totalorder %s30, 0
    %s33 = sadd.s32 %s32, 1
    %s34 = scalar_select %p31, %s32, %s33
    %p37 = pneg %p31
    %p38 = scmp.eq.s32.totalorder %s10, 1
    %p39 = por %p37, %p38
    %p40 = scmp.ne.s32.totalorder %s32, %s35
    %p41 = scmp.eq.s32.totalorder %s10, 0
    %p42 = por %p40, %p41
    %p43 = scmp.ne.s32.totalorder %s32, %s35
    %p44 = scmp.eq.s32.totalorder %s15, 1
    %p45 = por %p43, %p44
    %p46 = scmp.ne.s32.totalorder %s35, %s36
    %p47 = scmp.eq.s32.totalorder %s15, 0
    %p48 = por %p46, %p47
    %p49 = scmp.ne.s32.totalorder %s35, %s36
    %p50 = scmp.eq.s32.totalorder %s16, 1
    %p51 = por %p49, %p50
    %p53 = scmp.ne.s32.totalorder %s36, %s52
    %p54 = scmp.eq.s32.totalorder %s16, 0
    %p55 = por %p53, %p54
    %s56 = ssub.s32 %s17, %s29
    %p57 = scmp.eq.s32.totalorder %s56, 0
    %s59 = sadd.s32 %s58, 1
    %s60 = scalar_select %p57, %s58, %s59
    %p63 = pneg %p57
    %p64 = scmp.eq.s32.totalorder %s10, 1
    %p65 = por %p63, %p64
    %p66 = scmp.ne.s32.totalorder %s58, %s61
    %p67 = scmp.eq.s32.totalorder %s10, 0
    %p68 = por %p66, %p67
    %p69 = scmp.ne.s32.totalorder %s58, %s61
    %p70 = scmp.eq.s32.totalorder %s15, 1
    %p71 = por %p69, %p70
    %p72 = scmp.ne.s32.totalorder %s61, %s62
    %p73 = scmp.eq.s32.totalorder %s15, 0
    %p74 = por %p72, %p73
    %p75 = scmp.ne.s32.totalorder %s61, %s62
    %p76 = scmp.eq.s32.totalorder %s16, 1
    %p77 = por %p75, %p76
    %p79 = scmp.ne.s32.totalorder %s62, %s78
    %p80 = scmp.eq.s32.totalorder %s16, 0
    %p81 = por %p79, %p80
    %s82 = ssub.s32 %s17, %s29
    %p83 = scmp.eq.s32.totalorder %s82, 0
    %s85 = sadd.s32 %s84, 1
    %s86 = scalar_select %p83, %s84, %s85
    %p89 = pneg %p83
    %p90 = scmp.eq.s32.totalorder %s10, 1
    %p91 = por %p89, %p90
    %p92 = scmp.ne.s32.totalorder %s84, %s87
    %p93 = scmp.eq.s32.totalorder %s10, 0
    %p94 = por %p92, %p93
    %p95 = scmp.ne.s32.totalorder %s84, %s87
    %p96 = scmp.eq.s32.totalorder %s15, 1
    %p97 = por %p95, %p96
    %p98 = scmp.ne.s32.totalorder %s87, %s88
    %p99 = scmp.eq.s32.totalorder %s15, 0
    %p100 = por %p98, %p99
    %p101 = scmp.ne.s32.totalorder %s87, %s88
    %p102 = scmp.eq.s32.totalorder %s16, 1
    %p103 = por %p101, %p102
    %p105 = scmp.ne.s32.totalorder %s88, %s104
    %p106 = scmp.eq.s32.totalorder %s16, 0
    %p107 = por %p105, %p106
    %s108 = ssub.s32 %s18, %s25
    %s109 = ssub.s32 %s17, %s29
    %s110 = sor.u32 %s108, %s109
    %p111 = scmp.eq.s32.totalorder %s110, 0
    %s113 = sadd.s32 %s112, 1
    %s114 = scalar_select %p111, %s112, %s113
    %p117 = pneg %p111
    %p118 = scmp.eq.s32.totalorder %s10, 1
    %p119 = por %p117, %p118
    %p120 = scmp.ne.s32.totalorder %s112, %s115
    %p121 = scmp.eq.s32.totalorder %s10, 0
    %p122 = por %p120, %p121
    %p123 = scmp.ne.s32.totalorder %s112, %s115
    %p124 = scmp.eq.s32.totalorder %s15, 1
    %p125 = por %p123, %p124
    %p126 = scmp.ne.s32.totalorder %s115, %s116
    %p127 = scmp.eq.s32.totalorder %s15, 0
    %p128 = por %p126, %p127
    %p129 = scmp.ne.s32.totalorder %s115, %s116
    %p130 = scmp.eq.s32.totalorder %s16, 1
    %p131 = por %p129, %p130
    %p133 = scmp.ne.s32.totalorder %s116, %s132
    %p134 = scmp.eq.s32.totalorder %s16, 0
    %p135 = por %p133, %p134
    %s136 = ssub.s32 %s18, %s25
    %s137 = ssub.s32 %s17, %s29
    %s138 = sor.u32 %s136, %s137
    %p139 = scmp.eq.s32.totalorder %s138, 0
    %s141 = sadd.s32 %s140, 1
    %s142 = scalar_select %p139, %s140, %s141
    %p145 = pneg %p139
    %p146 = scmp.eq.s32.totalorder %s10, 1
    %p147 = por %p145, %p146
    %p148 = scmp.ne.s32.totalorder %s140, %s143
    %p149 = scmp.eq.s32.totalorder %s10, 0
    %p150 = por %p148, %p149
    %p151 = scmp.ne.s32.totalorder %s140, %s143
    %p152 = scmp.eq.s32.totalorder %s15, 1
    %p153 = por %p151, %p152
    %p154 = scmp.ne.s32.totalorder %s143, %s144
    %p155 = scmp.eq.s32.totalorder %s15, 0
    %p156 = por %p154, %p155
    %p157 = scmp.ne.s32.totalorder %s143, %s144
    %p158 = scmp.eq.s32.totalorder %s16, 1
    %p159 = por %p157, %p158
    %p161 = scmp.ne.s32.totalorder %s144, %s160
    %p162 = scmp.eq.s32.totalorder %s16, 0
    %p163 = por %p161, %p162
    %p164 = scmp.le.s32.totalorder 1, %s10
    %p165 = scmp.lt.s32.totalorder %s10, 3
    %p166 = pnand %p164, %p165
    %p167 = pneg %p166
    // Predicated region
    $region9: #{_forward_impl.3} parent=5 // pred_check
      _
    $region10: #{_forward_impl.3} parent=5 // pred_check_branch
      %169 = sbr.rel (%p166) target = $region12
    $region11: #{_forward_impl.3} parent=5 // pred_region
      %s170 = ssub.s32 %s10, 1
      // Predicated region
      $region13: #{_forward_impl.3} parent=11 // pred_check
        %p171 = pneg %p48
      $region14: #{_forward_impl.3} parent=11 // pred_check_branch
        %173 = sbr.rel (%p171) target = $region16
      $region15: #{_forward_impl.3} parent=11 // pred_region
        %p174 = scmp.lt.s32.totalorder %s20, 0
        %s175 = scalar_select %p174, %s20, 0
        %s176 = smul.addr %s175, 8
        %s177 = smul.addr %s176, 4
        %s178 = scalar_lea.vmem %s0, %s177
      $region16: #{_forward_impl.3} parent=11 // pred_fallthru
        _
    $region12: #{_forward_impl.3} parent=5 // pred_fallthru
      _
    %p179 = scmp.lt.s32.totalorder %s10, 2
    // Predicated region
    $region17: #{_forward_impl.3} parent=5 // pred_check
      %p180 = pneg %p179
    $region18: #{_forward_impl.3} parent=5 // pred_check_branch
      %182 = sbr.rel (%p180) target = $region20
    $region19: #{_forward_impl.3} parent=5 // pred_region
      // Predicated region
      $region21: #{_forward_impl.3} parent=19 // pred_check
        %p183 = pneg %p68
      $region22: #{_forward_impl.3} parent=19 // pred_check_branch
        %185 = sbr.rel (%p183) target = $region24
      $region23: #{_forward_impl.3} parent=19 // pred_region
        %p186 = scmp.lt.s32.totalorder %s17, 1
        %s187 = scalar_select %p186, %s17, 1
        %s188 = smul.addr %s187, 512
        %s189 = smul.addr %s188, 4
        %s190 = scalar_lea.vmem %s1, %s189
      $region24: #{_forward_impl.3} parent=19 // pred_fallthru
        _
      // Predicated region
      $region25: #{_forward_impl.3} parent=19 // pred_check
        %p191 = pneg %p94
      $region26: #{_forward_impl.3} parent=19 // pred_check_branch
        %193 = sbr.rel (%p191) target = $region28
      $region27: #{_forward_impl.3} parent=19 // pred_region
        %s194 = smul.u32 4, %s17
        %p195 = scmp.lt.s32.totalorder %s194, 7
        %s196 = scalar_select %p195, %s194, 7
        %s197 = scalar_lea.vmem %s2, %s196
        %s198 = smul.u32 4, %s17
      $region28: #{_forward_impl.3} parent=19 // pred_fallthru
        _
      // Predicated region
      $region29: #{_forward_impl.3} parent=19 // pred_check
        %p199 = pneg %p122
      $region30: #{_forward_impl.3} parent=19 // pred_check_branch
        %201 = sbr.rel (%p199) target = $region32
      $region31: #{_forward_impl.3} parent=19 // pred_region
        %s202 = smul.u32 4, %s17
        %p203 = scmp.lt.s32.totalorder %s18, 0
        %s204 = scalar_select %p203, %s18, 0
        %p205 = scmp.lt.s32.totalorder %s202, 7
        %s206 = scalar_select %p205, %s202, 7
        %s207 = smul.addr %s204, 8
        %s208 = sadd.s32 %s206, %s207
        %s209 = smul.addr %s208, 8
        %s210 = scalar_lea.vmem %s3, %s209
        %s211 = smul.u32 4, %s17
      $region32: #{_forward_impl.3} parent=19 // pred_fallthru
        _
    $region20: #{_forward_impl.3} parent=5 // pred_fallthru
      _
    %p212 = scmp.le.s32.totalorder 1, %s10
    %p213 = scmp.lt.s32.totalorder %s10, 3
    %p214 = pnand %p212, %p213
    %p215 = pneg %p214
    // Predicated region
    $region33: #{_forward_impl.3} parent=5 // pred_check
      _
    $region34: #{_forward_impl.3} parent=5 // pred_check_branch
      %217 = sbr.rel (%p214) target = $region36
    $region35: #{_forward_impl.3} parent=5 // pred_region
      %s218 = ssub.s32 %s10, 1
      %p219 = scmp.lt.s32.totalorder %s20, 0
      %s220 = scalar_select %p219, %s20, 0
      %s221 = smul.addr %s220, 8
      %s222 = smul.addr %s221, 4
      %s223 = scalar_lea.vmem %s0, %s222
      %p224 = pneg %p48
      %p225 = pneg %p45
      %p226 = scmp.lt.s32.totalorder %s19, 1
      %s227 = scalar_select %p226, %s19, 1
      %s228 = smul.addr %s227, 512
      %s229 = smul.addr %s228, 4
      %s230 = scalar_lea.vmem %s1, %s229
      %p231 = pneg %p74
      %p232 = pneg %p71
      %s233 = smul.u32 4, %s19
      %p234 = scmp.lt.s32.totalorder %s233, 7
      %s235 = scalar_select %p234, %s233, 7
      %s236 = scalar_lea.vmem %s2, %s235
      %p237 = pneg %p100
      %p238 = pneg %p97
      %s239 = smul.u32 4, %s19
      %p240 = scmp.lt.s32.totalorder %s20, 0
      %s241 = scalar_select %p240, %s20, 0
      %p242 = scmp.lt.s32.totalorder %s239, 7
      %s243 = scalar_select %p242, %s239, 7
      %s244 = smul.addr %s241, 8
      %s245 = sadd.s32 %s243, %s244
      %s246 = smul.addr %s245, 8
      %s247 = scalar_lea.vmem %s3, %s246
      %p248 = pneg %p128
      %p249 = pneg %p125
      %p250 = pneg %p156
      %p251 = pneg %p153
      %s252 = smul.u32 4, %s19
      %p253 = scmp.lt.s32.totalorder %s20, 0
      %s254 = scalar_select %p253, %s20, 0
      %p255 = scmp.lt.s32.totalorder %s252, 7
      %s256 = scalar_select %p255, %s252, 7
      %s257 = smul.addr %s254, 8
      %s258 = sadd.s32 %s256, %s257
      %s259 = smul.addr %s258, 8
      %s260 = scalar_lea.vmem %s4, %s259
      %p261 = scmp.lt.s32.totalorder %s20, 0
      %s262 = scalar_select %p261, %s20, 0
      %s263 = smul.addr %s262, 8
      %s264 = smul.addr %s263, 4
      %s265 = scalar_lea.vmem %s0, %s264
      %p266 = scmp.lt.s32.totalorder %s19, 1
      %s267 = scalar_select %p266, %s19, 1
      %s268 = smul.addr %s267, 512
      %s269 = smul.addr %s268, 4
      %s270 = scalar_lea.vmem %s1, %s269
      %s271 = smul.u32 4, %s19
      %p272 = scmp.lt.s32.totalorder %s271, 7
      %s273 = scalar_select %p272, %s271, 7
      %s274 = scalar_lea.vmem %s2, %s273
      %s275 = smul.u32 4, %s19
      %s276 = smul.u32 4, %s19
      %p277 = scmp.lt.s32.totalorder %s20, 0
      %s278 = scalar_select %p277, %s20, 0
      %p279 = scmp.lt.s32.totalorder %s276, 7
      %s280 = scalar_select %p279, %s276, 7
      %s281 = smul.addr %s278, 8
      %s282 = sadd.s32 %s280, %s281
      %s283 = smul.addr %s282, 8
      %s284 = scalar_lea.vmem %s3, %s283
      %s285 = smul.u32 4, %s19
      %s286 = smul.u32 4, %s19
      %p287 = scmp.lt.s32.totalorder %s20, 0
      %s288 = scalar_select %p287, %s20, 0
      %p289 = scmp.lt.s32.totalorder %s286, 7
      %s290 = scalar_select %p289, %s286, 7
      %s291 = smul.addr %s288, 8
      %s292 = sadd.s32 %s290, %s291
      %s293 = smul.addr %s292, 8
      %s294 = scalar_lea.vmem %s4, %s293
      %s295 = smul.u32 4, %s19
      %v296 = vld [vmem:[%s265] sm:$0xff]
      %v297 = vld [vmem:[%s265 + $0x8] sm:$0xff]
      %v298 = vld [vmem:[%s265 + $0x10] sm:$0xff]
      %v299 = vld [vmem:[%s265 + $0x18] sm:$0xff]
      %v300 = vld [vmem:[%s270] sm:$0xff]
      %v301 = vld [vmem:[%s270 + $0x8] sm:$0xff]
      %v302 = vld [vmem:[%s270 + $0x10] sm:$0xff]
      %v303 = vld [vmem:[%s270 + $0x18] sm:$0xff]
      %v304 = vld [vmem:[%s270 + $0x20] sm:$0xff]
      %v305 = vld [vmem:[%s270 + $0x28] sm:$0xff]
      %v306 = vld [vmem:[%s270 + $0x30] sm:$0xff]
      %v307 = vld [vmem:[%s270 + $0x38] sm:$0xff]
      %v308 = vld [vmem:[%s270 + $0x40] sm:$0xff]
      %v309 = vld [vmem:[%s270 + $0x48] sm:$0xff]
      %v310 = vld [vmem:[%s270 + $0x50] sm:$0xff]
      %v311 = vld [vmem:[%s270 + $0x58] sm:$0xff]
      %v312 = vld [vmem:[%s270 + $0x60] sm:$0xff]
      %v313 = vld [vmem:[%s270 + $0x68] sm:$0xff]
      %v314 = vld [vmem:[%s270 + $0x70] sm:$0xff]
      %v315 = vld [vmem:[%s270 + $0x78] sm:$0xff]
      %v316 = vld [vmem:[%s270 + $0x80] sm:$0xff]
      %v317 = vld [vmem:[%s270 + $0x88] sm:$0xff]
      %v318 = vld [vmem:[%s270 + $0x90] sm:$0xff]
      %v319 = vld [vmem:[%s270 + $0x98] sm:$0xff]
      %v320 = vld [vmem:[%s270 + $0xa0] sm:$0xff]
      %v321 = vld [vmem:[%s270 + $0xa8] sm:$0xff]
      %v322 = vld [vmem:[%s270 + $0xb0] sm:$0xff]
      %v323 = vld [vmem:[%s270 + $0xb8] sm:$0xff]
      %v324 = vld [vmem:[%s270 + $0xc0] sm:$0xff]
      %v325 = vld [vmem:[%s270 + $0xc8] sm:$0xff]
      %v326 = vld [vmem:[%s270 + $0xd0] sm:$0xff]
      %v327 = vld [vmem:[%s270 + $0xd8] sm:$0xff]
      %v328 = vld [vmem:[%s270 + $0xe0] sm:$0xff]
      %v329 = vld [vmem:[%s270 + $0xe8] sm:$0xff]
      %v330 = vld [vmem:[%s270 + $0xf0] sm:$0xff]
      %v331 = vld [vmem:[%s270 + $0xf8] sm:$0xff]
      %v332 = vld [vmem:[%s270 + $0x100] sm:$0xff]
      %v333 = vld [vmem:[%s270 + $0x108] sm:$0xff]
      %v334 = vld [vmem:[%s270 + $0x110] sm:$0xff]
      %v335 = vld [vmem:[%s270 + $0x118] sm:$0xff]
      %v336 = vld [vmem:[%s270 + $0x120] sm:$0xff]
      %v337 = vld [vmem:[%s270 + $0x128] sm:$0xff]
      %v338 = vld [vmem:[%s270 + $0x130] sm:$0xff]
      %v339 = vld [vmem:[%s270 + $0x138] sm:$0xff]
      %v340 = vld [vmem:[%s270 + $0x140] sm:$0xff]
      %v341 = vld [vmem:[%s270 + $0x148] sm:$0xff]
      %v342 = vld [vmem:[%s270 + $0x150] sm:$0xff]
      %v343 = vld [vmem:[%s270 + $0x158] sm:$0xff]
      %v344 = vld [vmem:[%s270 + $0x160] sm:$0xff]
      %v345 = vld [vmem:[%s270 + $0x168] sm:$0xff]
      %v346 = vld [vmem:[%s270 + $0x170] sm:$0xff]
      %v347 = vld [vmem:[%s270 + $0x178] sm:$0xff]
      %v348 = vld [vmem:[%s270 + $0x180] sm:$0xff]
      %v349 = vld [vmem:[%s270 + $0x188] sm:$0xff]
      %v350 = vld [vmem:[%s270 + $0x190] sm:$0xff]
      %v351 = vld [vmem:[%s270 + $0x198] sm:$0xff]
      %v352 = vld [vmem:[%s270 + $0x1a0] sm:$0xff]
      %v353 = vld [vmem:[%s270 + $0x1a8] sm:$0xff]
      %v354 = vld [vmem:[%s270 + $0x1b0] sm:$0xff]
      %v355 = vld [vmem:[%s270 + $0x1b8] sm:$0xff]
      %v356 = vld [vmem:[%s270 + $0x1c0] sm:$0xff]
      %v357 = vld [vmem:[%s270 + $0x1c8] sm:$0xff]
      %v358 = vld [vmem:[%s270 + $0x1d0] sm:$0xff]
      %v359 = vld [vmem:[%s270 + $0x1d8] sm:$0xff]
      %v360 = vld [vmem:[%s270 + $0x1e0] sm:$0xff]
      %v361 = vld [vmem:[%s270 + $0x1e8] sm:$0xff]
      %v362 = vld [vmem:[%s270 + $0x1f0] sm:$0xff]
      %v363 = vld [vmem:[%s270 + $0x1f8] sm:$0xff]
      %v364 = vld [vmem:[%s270 + $0x200] sm:$0xff]
      %v365 = vld [vmem:[%s270 + $0x208] sm:$0xff]
      %v366 = vld [vmem:[%s270 + $0x210] sm:$0xff]
      %v367 = vld [vmem:[%s270 + $0x218] sm:$0xff]
      %v368 = vld [vmem:[%s270 + $0x220] sm:$0xff]
      %v369 = vld [vmem:[%s270 + $0x228] sm:$0xff]
      %v370 = vld [vmem:[%s270 + $0x230] sm:$0xff]
      %v371 = vld [vmem:[%s270 + $0x238] sm:$0xff]
      %v372 = vld [vmem:[%s270 + $0x240] sm:$0xff]
      %v373 = vld [vmem:[%s270 + $0x248] sm:$0xff]
      %v374 = vld [vmem:[%s270 + $0x250] sm:$0xff]
      %v375 = vld [vmem:[%s270 + $0x258] sm:$0xff]
      %v376 = vld [vmem:[%s270 + $0x260] sm:$0xff]
      %v377 = vld [vmem:[%s270 + $0x268] sm:$0xff]
      %v378 = vld [vmem:[%s270 + $0x270] sm:$0xff]
      %v379 = vld [vmem:[%s270 + $0x278] sm:$0xff]
      %v380 = vld [vmem:[%s270 + $0x280] sm:$0xff]
      %v381 = vld [vmem:[%s270 + $0x288] sm:$0xff]
      %v382 = vld [vmem:[%s270 + $0x290] sm:$0xff]
      %v383 = vld [vmem:[%s270 + $0x298] sm:$0xff]
      %v384 = vld [vmem:[%s270 + $0x2a0] sm:$0xff]
      %v385 = vld [vmem:[%s270 + $0x2a8] sm:$0xff]
      %v386 = vld [vmem:[%s270 + $0x2b0] sm:$0xff]
      %v387 = vld [vmem:[%s270 + $0x2b8] sm:$0xff]
      %v388 = vld [vmem:[%s270 + $0x2c0] sm:$0xff]
      %v389 = vld [vmem:[%s270 + $0x2c8] sm:$0xff]
      %v390 = vld [vmem:[%s270 + $0x2d0] sm:$0xff]
      %v391 = vld [vmem:[%s270 + $0x2d8] sm:$0xff]
      %v392 = vld [vmem:[%s270 + $0x2e0] sm:$0xff]
      %v393 = vld [vmem:[%s270 + $0x2e8] sm:$0xff]
      %v394 = vld [vmem:[%s270 + $0x2f0] sm:$0xff]
      %v395 = vld [vmem:[%s270 + $0x2f8] sm:$0xff]
      %v396 = vld [vmem:[%s270 + $0x300] sm:$0xff]
      %v397 = vld [vmem:[%s270 + $0x308] sm:$0xff]
      %v398 = vld [vmem:[%s270 + $0x310] sm:$0xff]
      %v399 = vld [vmem:[%s270 + $0x318] sm:$0xff]
      %v400 = vld [vmem:[%s270 + $0x320] sm:$0xff]
      %v401 = vld [vmem:[%s270 + $0x328] sm:$0xff]
      %v402 = vld [vmem:[%s270 + $0x330] sm:$0xff]
      %v403 = vld [vmem:[%s270 + $0x338] sm:$0xff]
      %v404 = vld [vmem:[%s270 + $0x340] sm:$0xff]
      %v405 = vld [vmem:[%s270 + $0x348] sm:$0xff]
      %v406 = vld [vmem:[%s270 + $0x350] sm:$0xff]
      %v407 = vld [vmem:[%s270 + $0x358] sm:$0xff]
      %v408 = vld [vmem:[%s270 + $0x360] sm:$0xff]
      %v409 = vld [vmem:[%s270 + $0x368] sm:$0xff]
      %v410 = vld [vmem:[%s270 + $0x370] sm:$0xff]
      %v411 = vld [vmem:[%s270 + $0x378] sm:$0xff]
      %v412 = vld [vmem:[%s270 + $0x380] sm:$0xff]
      %v413 = vld [vmem:[%s270 + $0x388] sm:$0xff]
      %v414 = vld [vmem:[%s270 + $0x390] sm:$0xff]
      %v415 = vld [vmem:[%s270 + $0x398] sm:$0xff]
      %v416 = vld [vmem:[%s270 + $0x3a0] sm:$0xff]
      %v417 = vld [vmem:[%s270 + $0x3a8] sm:$0xff]
      %v418 = vld [vmem:[%s270 + $0x3b0] sm:$0xff]
      %v419 = vld [vmem:[%s270 + $0x3b8] sm:$0xff]
      %v420 = vld [vmem:[%s270 + $0x3c0] sm:$0xff]
      %v421 = vld [vmem:[%s270 + $0x3c8] sm:$0xff]
      %v422 = vld [vmem:[%s270 + $0x3d0] sm:$0xff]
      %v423 = vld [vmem:[%s270 + $0x3d8] sm:$0xff]
      %v424 = vld [vmem:[%s270 + $0x3e0] sm:$0xff]
      %v425 = vld [vmem:[%s270 + $0x3e8] sm:$0xff]
      %v426 = vld [vmem:[%s270 + $0x3f0] sm:$0xff]
      %v427 = vld [vmem:[%s270 + $0x3f8] sm:$0xff]
      %v428 = vld [vmem:[%s270 + $0x400] sm:$0xff]
      %v429 = vld [vmem:[%s270 + $0x408] sm:$0xff]
      %v430 = vld [vmem:[%s270 + $0x410] sm:$0xff]
      %v431 = vld [vmem:[%s270 + $0x418] sm:$0xff]
      %v432 = vld [vmem:[%s270 + $0x420] sm:$0xff]
      %v433 = vld [vmem:[%s270 + $0x428] sm:$0xff]
      %v434 = vld [vmem:[%s270 + $0x430] sm:$0xff]
      %v435 = vld [vmem:[%s270 + $0x438] sm:$0xff]
      %v436 = vld [vmem:[%s270 + $0x440] sm:$0xff]
      %v437 = vld [vmem:[%s270 + $0x448] sm:$0xff]
      %v438 = vld [vmem:[%s270 + $0x450] sm:$0xff]
      %v439 = vld [vmem:[%s270 + $0x458] sm:$0xff]
      %v440 = vld [vmem:[%s270 + $0x460] sm:$0xff]
      %v441 = vld [vmem:[%s270 + $0x468] sm:$0xff]
      %v442 = vld [vmem:[%s270 + $0x470] sm:$0xff]
      %v443 = vld [vmem:[%s270 + $0x478] sm:$0xff]
      %v444 = vld [vmem:[%s270 + $0x480] sm:$0xff]
      %v445 = vld [vmem:[%s270 + $0x488] sm:$0xff]
      %v446 = vld [vmem:[%s270 + $0x490] sm:$0xff]
      %v447 = vld [vmem:[%s270 + $0x498] sm:$0xff]
      %v448 = vld [vmem:[%s270 + $0x4a0] sm:$0xff]
      %v449 = vld [vmem:[%s270 + $0x4a8] sm:$0xff]
      %v450 = vld [vmem:[%s270 + $0x4b0] sm:$0xff]
      %v451 = vld [vmem:[%s270 + $0x4b8] sm:$0xff]
      %v452 = vld [vmem:[%s270 + $0x4c0] sm:$0xff]
      %v453 = vld [vmem:[%s270 + $0x4c8] sm:$0xff]
      %v454 = vld [vmem:[%s270 + $0x4d0] sm:$0xff]
      %v455 = vld [vmem:[%s270 + $0x4d8] sm:$0xff]
      %v456 = vld [vmem:[%s270 + $0x4e0] sm:$0xff]
      %v457 = vld [vmem:[%s270 + $0x4e8] sm:$0xff]
      %v458 = vld [vmem:[%s270 + $0x4f0] sm:$0xff]
      %v459 = vld [vmem:[%s270 + $0x4f8] sm:$0xff]
      %v460 = vld [vmem:[%s270 + $0x500] sm:$0xff]
      %v461 = vld [vmem:[%s270 + $0x508] sm:$0xff]
      %v462 = vld [vmem:[%s270 + $0x510] sm:$0xff]
      %v463 = vld [vmem:[%s270 + $0x518] sm:$0xff]
      %v464 = vld [vmem:[%s270 + $0x520] sm:$0xff]
      %v465 = vld [vmem:[%s270 + $0x528] sm:$0xff]
      %v466 = vld [vmem:[%s270 + $0x530] sm:$0xff]
      %v467 = vld [vmem:[%s270 + $0x538] sm:$0xff]
      %v468 = vld [vmem:[%s270 + $0x540] sm:$0xff]
      %v469 = vld [vmem:[%s270 + $0x548] sm:$0xff]
      %v470 = vld [vmem:[%s270 + $0x550] sm:$0xff]
      %v471 = vld [vmem:[%s270 + $0x558] sm:$0xff]
      %v472 = vld [vmem:[%s270 + $0x560] sm:$0xff]
      %v473 = vld [vmem:[%s270 + $0x568] sm:$0xff]
      %v474 = vld [vmem:[%s270 + $0x570] sm:$0xff]
      %v475 = vld [vmem:[%s270 + $0x578] sm:$0xff]
      %v476 = vld [vmem:[%s270 + $0x580] sm:$0xff]
      %v477 = vld [vmem:[%s270 + $0x588] sm:$0xff]
      %v478 = vld [vmem:[%s270 + $0x590] sm:$0xff]
      %v479 = vld [vmem:[%s270 + $0x598] sm:$0xff]
      %v480 = vld [vmem:[%s270 + $0x5a0] sm:$0xff]
      %v481 = vld [vmem:[%s270 + $0x5a8] sm:$0xff]
      %v482 = vld [vmem:[%s270 + $0x5b0] sm:$0xff]
      %v483 = vld [vmem:[%s270 + $0x5b8] sm:$0xff]
      %v484 = vld [vmem:[%s270 + $0x5c0] sm:$0xff]
      %v485 = vld [vmem:[%s270 + $0x5c8] sm:$0xff]
      %v486 = vld [vmem:[%s270 + $0x5d0] sm:$0xff]
      %v487 = vld [vmem:[%s270 + $0x5d8] sm:$0xff]
      %v488 = vld [vmem:[%s270 + $0x5e0] sm:$0xff]
      %v489 = vld [vmem:[%s270 + $0x5e8] sm:$0xff]
      %v490 = vld [vmem:[%s270 + $0x5f0] sm:$0xff]
      %v491 = vld [vmem:[%s270 + $0x5f8] sm:$0xff]
      %v492 = vld [vmem:[%s270 + $0x600] sm:$0xff]
      %v493 = vld [vmem:[%s270 + $0x608] sm:$0xff]
      %v494 = vld [vmem:[%s270 + $0x610] sm:$0xff]
      %v495 = vld [vmem:[%s270 + $0x618] sm:$0xff]
      %v496 = vld [vmem:[%s270 + $0x620] sm:$0xff]
      %v497 = vld [vmem:[%s270 + $0x628] sm:$0xff]
      %v498 = vld [vmem:[%s270 + $0x630] sm:$0xff]
      %v499 = vld [vmem:[%s270 + $0x638] sm:$0xff]
      %v500 = vld [vmem:[%s270 + $0x640] sm:$0xff]
      %v501 = vld [vmem:[%s270 + $0x648] sm:$0xff]
      %v502 = vld [vmem:[%s270 + $0x650] sm:$0xff]
      %v503 = vld [vmem:[%s270 + $0x658] sm:$0xff]
      %v504 = vld [vmem:[%s270 + $0x660] sm:$0xff]
      %v505 = vld [vmem:[%s270 + $0x668] sm:$0xff]
      %v506 = vld [vmem:[%s270 + $0x670] sm:$0xff]
      %v507 = vld [vmem:[%s270 + $0x678] sm:$0xff]
      %v508 = vld [vmem:[%s270 + $0x680] sm:$0xff]
      %v509 = vld [vmem:[%s270 + $0x688] sm:$0xff]
      %v510 = vld [vmem:[%s270 + $0x690] sm:$0xff]
      %v511 = vld [vmem:[%s270 + $0x698] sm:$0xff]
      %v512 = vld [vmem:[%s270 + $0x6a0] sm:$0xff]
      %v513 = vld [vmem:[%s270 + $0x6a8] sm:$0xff]
      %v514 = vld [vmem:[%s270 + $0x6b0] sm:$0xff]
      %v515 = vld [vmem:[%s270 + $0x6b8] sm:$0xff]
      %v516 = vld [vmem:[%s270 + $0x6c0] sm:$0xff]
      %v517 = vld [vmem:[%s270 + $0x6c8] sm:$0xff]
      %v518 = vld [vmem:[%s270 + $0x6d0] sm:$0xff]
      %v519 = vld [vmem:[%s270 + $0x6d8] sm:$0xff]
      %v520 = vld [vmem:[%s270 + $0x6e0] sm:$0xff]
      %v521 = vld [vmem:[%s270 + $0x6e8] sm:$0xff]
      %v522 = vld [vmem:[%s270 + $0x6f0] sm:$0xff]
      %v523 = vld [vmem:[%s270 + $0x6f8] sm:$0xff]
      %v524 = vld [vmem:[%s270 + $0x700] sm:$0xff]
      %v525 = vld [vmem:[%s270 + $0x708] sm:$0xff]
      %v526 = vld [vmem:[%s270 + $0x710] sm:$0xff]
      %v527 = vld [vmem:[%s270 + $0x718] sm:$0xff]
      %v528 = vld [vmem:[%s270 + $0x720] sm:$0xff]
      %v529 = vld [vmem:[%s270 + $0x728] sm:$0xff]
      %v530 = vld [vmem:[%s270 + $0x730] sm:$0xff]
      %v531 = vld [vmem:[%s270 + $0x738] sm:$0xff]
      %v532 = vld [vmem:[%s270 + $0x740] sm:$0xff]
      %v533 = vld [vmem:[%s270 + $0x748] sm:$0xff]
      %v534 = vld [vmem:[%s270 + $0x750] sm:$0xff]
      %v535 = vld [vmem:[%s270 + $0x758] sm:$0xff]
      %v536 = vld [vmem:[%s270 + $0x760] sm:$0xff]
      %v537 = vld [vmem:[%s270 + $0x768] sm:$0xff]
      %v538 = vld [vmem:[%s270 + $0x770] sm:$0xff]
      %v539 = vld [vmem:[%s270 + $0x778] sm:$0xff]
      %v540 = vld [vmem:[%s270 + $0x780] sm:$0xff]
      %v541 = vld [vmem:[%s270 + $0x788] sm:$0xff]
      %v542 = vld [vmem:[%s270 + $0x790] sm:$0xff]
      %v543 = vld [vmem:[%s270 + $0x798] sm:$0xff]
      %v544 = vld [vmem:[%s270 + $0x7a0] sm:$0xff]
      %v545 = vld [vmem:[%s270 + $0x7a8] sm:$0xff]
      %v546 = vld [vmem:[%s270 + $0x7b0] sm:$0xff]
      %v547 = vld [vmem:[%s270 + $0x7b8] sm:$0xff]
      %v548 = vld [vmem:[%s270 + $0x7c0] sm:$0xff]
      %v549 = vld [vmem:[%s270 + $0x7c8] sm:$0xff]
      %v550 = vld [vmem:[%s270 + $0x7d0] sm:$0xff]
      %v551 = vld [vmem:[%s270 + $0x7d8] sm:$0xff]
      %v552 = vld [vmem:[%s270 + $0x7e0] sm:$0xff]
      %v553 = vld [vmem:[%s270 + $0x7e8] sm:$0xff]
      %v554 = vld [vmem:[%s270 + $0x7f0] sm:$0xff]
      %v555 = vld [vmem:[%s270 + $0x7f8] sm:$0xff]
      %v556 = vld [vmem:[%s274] sm:$0xf]
      %v558 = vlaneseq
      %v559 = vshrl.u32 %v558, 7
      %v560 = vsub.s32 0, %v559
      %v561 = vrot.slane %v556, %v560
      %v562 = vlaneseq
      %v563 = vshrl.u32 %v562, 7
      %v564 = vsub.s32 1, %v563
      %v565 = vrot.slane %v556, %v564
      %v566 = vlaneseq
      %v567 = vshrl.u32 %v566, 7
      %v568 = vsub.s32 2, %v567
      %v569 = vrot.slane %v556, %v568
      %v570 = vlaneseq
      %v571 = vshrl.u32 %v570, 7
      %v572 = vsub.s32 3, %v571
      %v573 = vrot.slane %v556, %v572
      %v582 = vunpack.c.l.b16 %v296
      %v583 = vunpack.c.h.b16 %v296
      %v584 = vunpack.c.l.b16 %v297
      %v585 = vunpack.c.h.b16 %v297
      %v586 = vunpack.c.l.b16 %v298
      %v587 = vunpack.c.h.b16 %v298
      %v588 = vunpack.c.l.b16 %v299
      %v589 = vunpack.c.h.b16 %v299
      %v590 = vpack.c.b16 %v582, %v582
      %v591 = vpack.c.b16 %v583, %v583
      %v592 = vpack.c.b16 %v584, %v584
      %v593 = vpack.c.b16 %v585, %v585
      %v594 = vpack.c.b16 %v586, %v586
      %v595 = vpack.c.b16 %v587, %v587
      %v596 = vpack.c.b16 %v588, %v588
      %v597 = vpack.c.b16 %v589, %v589
      %v862 = vunpack.c.l.b16 %v300
      %v863 = vunpack.c.h.b16 %v300
      %v864 = vunpack.c.l.b16 %v301
      %v865 = vunpack.c.h.b16 %v301
      %v866 = vunpack.c.l.b16 %v302
      %v867 = vunpack.c.h.b16 %v302
      %v868 = vunpack.c.l.b16 %v303
      %v869 = vunpack.c.h.b16 %v303
      %v870 = vunpack.c.l.b16 %v304
      %v871 = vunpack.c.h.b16 %v304
      %v872 = vunpack.c.l.b16 %v305
      %v873 = vunpack.c.h.b16 %v305
      %v874 = vunpack.c.l.b16 %v306
      %v875 = vunpack.c.h.b16 %v306
      %v876 = vunpack.c.l.b16 %v307
      %v877 = vunpack.c.h.b16 %v307
      %v878 = vunpack.c.l.b16 %v308
      %v879 = vunpack.c.h.b16 %v308
      %v880 = vunpack.c.l.b16 %v309
      %v881 = vunpack.c.h.b16 %v309
      %v882 = vunpack.c.l.b16 %v310
      %v883 = vunpack.c.h.b16 %v310
      %v884 = vunpack.c.l.b16 %v311
      %v885 = vunpack.c.h.b16 %v311
      %v886 = vunpack.c.l.b16 %v312
      %v887 = vunpack.c.h.b16 %v312
      %v888 = vunpack.c.l.b16 %v313
      %v889 = vunpack.c.h.b16 %v313
      %v890 = vunpack.c.l.b16 %v314
      %v891 = vunpack.c.h.b16 %v314
      %v892 = vunpack.c.l.b16 %v315
      %v893 = vunpack.c.h.b16 %v315
      %v894 = vunpack.c.l.b16 %v316
      %v895 = vunpack.c.h.b16 %v316
      %v896 = vunpack.c.l.b16 %v317
      %v897 = vunpack.c.h.b16 %v317
      %v898 = vunpack.c.l.b16 %v318
      %v899 = vunpack.c.h.b16 %v318
      %v900 = vunpack.c.l.b16 %v319
      %v901 = vunpack.c.h.b16 %v319
      %v902 = vunpack.c.l.b16 %v320
      %v903 = vunpack.c.h.b16 %v320
      %v904 = vunpack.c.l.b16 %v321
      %v905 = vunpack.c.h.b16 %v321
      %v906 = vunpack.c.l.b16 %v322
      %v907 = vunpack.c.h.b16 %v322
      %v908 = vunpack.c.l.b16 %v323
      %v909 = vunpack.c.h.b16 %v323
      %v910 = vunpack.c.l.b16 %v324
      %v911 = vunpack.c.h.b16 %v324
      %v912 = vunpack.c.l.b16 %v325
      %v913 = vunpack.c.h.b16 %v325
      %v914 = vunpack.c.l.b16 %v326
      %v915 = vunpack.c.h.b16 %v326
      %v916 = vunpack.c.l.b16 %v327
      %v917 = vunpack.c.h.b16 %v327
      %v918 = vunpack.c.l.b16 %v328
      %v919 = vunpack.c.h.b16 %v328
      %v920 = vunpack.c.l.b16 %v329
      %v921 = vunpack.c.h.b16 %v329
      %v922 = vunpack.c.l.b16 %v330
      %v923 = vunpack.c.h.b16 %v330
      %v924 = vunpack.c.l.b16 %v331
      %v925 = vunpack.c.h.b16 %v331
      %v926 = vunpack.c.l.b16 %v332
      %v927 = vunpack.c.h.b16 %v332
      %v928 = vunpack.c.l.b16 %v333
      %v929 = vunpack.c.h.b16 %v333
      %v930 = vunpack.c.l.b16 %v334
      %v931 = vunpack.c.h.b16 %v334
      %v932 = vunpack.c.l.b16 %v335
      %v933 = vunpack.c.h.b16 %v335
      %v934 = vunpack.c.l.b16 %v336
      %v935 = vunpack.c.h.b16 %v336
      %v936 = vunpack.c.l.b16 %v337
      %v937 = vunpack.c.h.b16 %v337
      %v938 = vunpack.c.l.b16 %v338
      %v939 = vunpack.c.h.b16 %v338
      %v940 = vunpack.c.l.b16 %v339
      %v941 = vunpack.c.h.b16 %v339
      %v942 = vunpack.c.l.b16 %v340
      %v943 = vunpack.c.h.b16 %v340
      %v944 = vunpack.c.l.b16 %v341
      %v945 = vunpack.c.h.b16 %v341
      %v946 = vunpack.c.l.b16 %v342
      %v947 = vunpack.c.h.b16 %v342
      %v948 = vunpack.c.l.b16 %v343
      %v949 = vunpack.c.h.b16 %v343
      %v950 = vunpack.c.l.b16 %v344
      %v951 = vunpack.c.h.b16 %v344
      %v952 = vunpack.c.l.b16 %v345
      %v953 = vunpack.c.h.b16 %v345
      %v954 = vunpack.c.l.b16 %v346
      %v955 = vunpack.c.h.b16 %v346
      %v956 = vunpack.c.l.b16 %v347
      %v957 = vunpack.c.h.b16 %v347
      %v958 = vunpack.c.l.b16 %v348
      %v959 = vunpack.c.h.b16 %v348
      %v960 = vunpack.c.l.b16 %v349
      %v961 = vunpack.c.h.b16 %v349
      %v962 = vunpack.c.l.b16 %v350
      %v963 = vunpack.c.h.b16 %v350
      %v964 = vunpack.c.l.b16 %v351
      %v965 = vunpack.c.h.b16 %v351
      %v966 = vunpack.c.l.b16 %v352
      %v967 = vunpack.c.h.b16 %v352
      %v968 = vunpack.c.l.b16 %v353
      %v969 = vunpack.c.h.b16 %v353
      %v970 = vunpack.c.l.b16 %v354
      %v971 = vunpack.c.h.b16 %v354
      %v972 = vunpack.c.l.b16 %v355
      %v973 = vunpack.c.h.b16 %v355
      %v974 = vunpack.c.l.b16 %v356
      %v975 = vunpack.c.h.b16 %v356
      %v976 = vunpack.c.l.b16 %v357
      %v977 = vunpack.c.h.b16 %v357
      %v978 = vunpack.c.l.b16 %v358
      %v979 = vunpack.c.h.b16 %v358
      %v980 = vunpack.c.l.b16 %v359
      %v981 = vunpack.c.h.b16 %v359
      %v982 = vunpack.c.l.b16 %v360
      %v983 = vunpack.c.h.b16 %v360
      %v984 = vunpack.c.l.b16 %v361
      %v985 = vunpack.c.h.b16 %v361
      %v986 = vunpack.c.l.b16 %v362
      %v987 = vunpack.c.h.b16 %v362
      %v988 = vunpack.c.l.b16 %v363
      %v989 = vunpack.c.h.b16 %v363
      %v990 = vunpack.c.l.b16 %v364
      %v991 = vunpack.c.h.b16 %v364
      %v992 = vunpack.c.l.b16 %v365
      %v993 = vunpack.c.h.b16 %v365
      %v994 = vunpack.c.l.b16 %v366
      %v995 = vunpack.c.h.b16 %v366
      %v996 = vunpack.c.l.b16 %v367
      %v997 = vunpack.c.h.b16 %v367
      %v998 = vunpack.c.l.b16 %v368
      %v999 = vunpack.c.h.b16 %v368
      %v1000 = vunpack.c.l.b16 %v369
      %v1001 = vunpack.c.h.b16 %v369
      %v1002 = vunpack.c.l.b16 %v370
      %v1003 = vunpack.c.h.b16 %v370
      %v1004 = vunpack.c.l.b16 %v371
      %v1005 = vunpack.c.h.b16 %v371
      %v1006 = vunpack.c.l.b16 %v372
      %v1007 = vunpack.c.h.b16 %v372
      %v1008 = vunpack.c.l.b16 %v373
      %v1009 = vunpack.c.h.b16 %v373
      %v1010 = vunpack.c.l.b16 %v374
      %v1011 = vunpack.c.h.b16 %v374
      %v1012 = vunpack.c.l.b16 %v375
      %v1013 = vunpack.c.h.b16 %v375
      %v1014 = vunpack.c.l.b16 %v376
      %v1015 = vunpack.c.h.b16 %v376
      %v1016 = vunpack.c.l.b16 %v377
      %v1017 = vunpack.c.h.b16 %v377
      %v1018 = vunpack.c.l.b16 %v378
      %v1019 = vunpack.c.h.b16 %v378
      %v1020 = vunpack.c.l.b16 %v379
      %v1021 = vunpack.c.h.b16 %v379
      %v1022 = vunpack.c.l.b16 %v380
      %v1023 = vunpack.c.h.b16 %v380
      %v1024 = vunpack.c.l.b16 %v381
      %v1025 = vunpack.c.h.b16 %v381
      %v1026 = vunpack.c.l.b16 %v382
      %v1027 = vunpack.c.h.b16 %v382
      %v1028 = vunpack.c.l.b16 %v383
      %v1029 = vunpack.c.h.b16 %v383
      %v1030 = vunpack.c.l.b16 %v384
      %v1031 = vunpack.c.h.b16 %v384
      %v1032 = vunpack.c.l.b16 %v385
      %v1033 = vunpack.c.h.b16 %v385
      %v1034 = vunpack.c.l.b16 %v386
      %v1035 = vunpack.c.h.b16 %v386
      %v1036 = vunpack.c.l.b16 %v387
      %v1037 = vunpack.c.h.b16 %v387
      %v1038 = vunpack.c.l.b16 %v388
      %v1039 = vunpack.c.h.b16 %v388
      %v1040 = vunpack.c.l.b16 %v389
      %v1041 = vunpack.c.h.b16 %v389
      %v1042 = vunpack.c.l.b16 %v390
      %v1043 = vunpack.c.h.b16 %v390
      %v1044 = vunpack.c.l.b16 %v391
      %v1045 = vunpack.c.h.b16 %v391
      %v1046 = vunpack.c.l.b16 %v392
      %v1047 = vunpack.c.h.b16 %v392
      %v1048 = vunpack.c.l.b16 %v393
      %v1049 = vunpack.c.h.b16 %v393
      %v1050 = vunpack.c.l.b16 %v394
      %v1051 = vunpack.c.h.b16 %v394
      %v1052 = vunpack.c.l.b16 %v395
      %v1053 = vunpack.c.h.b16 %v395
      %v1054 = vunpack.c.l.b16 %v396
      %v1055 = vunpack.c.h.b16 %v396
      %v1056 = vunpack.c.l.b16 %v397
      %v1057 = vunpack.c.h.b16 %v397
      %v1058 = vunpack.c.l.b16 %v398
      %v1059 = vunpack.c.h.b16 %v398
      %v1060 = vunpack.c.l.b16 %v399
      %v1061 = vunpack.c.h.b16 %v399
      %v1062 = vunpack.c.l.b16 %v400
      %v1063 = vunpack.c.h.b16 %v400
      %v1064 = vunpack.c.l.b16 %v401
      %v1065 = vunpack.c.h.b16 %v401
      %v1066 = vunpack.c.l.b16 %v402
      %v1067 = vunpack.c.h.b16 %v402
      %v1068 = vunpack.c.l.b16 %v403
      %v1069 = vunpack.c.h.b16 %v403
      %v1070 = vunpack.c.l.b16 %v404
      %v1071 = vunpack.c.h.b16 %v404
      %v1072 = vunpack.c.l.b16 %v405
      %v1073 = vunpack.c.h.b16 %v405
      %v1074 = vunpack.c.l.b16 %v406
      %v1075 = vunpack.c.h.b16 %v406
      %v1076 = vunpack.c.l.b16 %v407
      %v1077 = vunpack.c.h.b16 %v407
      %v1078 = vunpack.c.l.b16 %v408
      %v1079 = vunpack.c.h.b16 %v408
      %v1080 = vunpack.c.l.b16 %v409
      %v1081 = vunpack.c.h.b16 %v409
      %v1082 = vunpack.c.l.b16 %v410
      %v1083 = vunpack.c.h.b16 %v410
      %v1084 = vunpack.c.l.b16 %v411
      %v1085 = vunpack.c.h.b16 %v411
      %v1086 = vunpack.c.l.b16 %v412
      %v1087 = vunpack.c.h.b16 %v412
      %v1088 = vunpack.c.l.b16 %v413
      %v1089 = vunpack.c.h.b16 %v413
      %v1090 = vunpack.c.l.b16 %v414
      %v1091 = vunpack.c.h.b16 %v414
      %v1092 = vunpack.c.l.b16 %v415
      %v1093 = vunpack.c.h.b16 %v415
      %v1094 = vunpack.c.l.b16 %v416
      %v1095 = vunpack.c.h.b16 %v416
      %v1096 = vunpack.c.l.b16 %v417
      %v1097 = vunpack.c.h.b16 %v417
      %v1098 = vunpack.c.l.b16 %v418
      %v1099 = vunpack.c.h.b16 %v418
      %v1100 = vunpack.c.l.b16 %v419
      %v1101 = vunpack.c.h.b16 %v419
      %v1102 = vunpack.c.l.b16 %v420
      %v1103 = vunpack.c.h.b16 %v420
      %v1104 = vunpack.c.l.b16 %v421
      %v1105 = vunpack.c.h.b16 %v421
      %v1106 = vunpack.c.l.b16 %v422
      %v1107 = vunpack.c.h.b16 %v422
      %v1108 = vunpack.c.l.b16 %v423
      %v1109 = vunpack.c.h.b16 %v423
      %v1110 = vunpack.c.l.b16 %v424
      %v1111 = vunpack.c.h.b16 %v424
      %v1112 = vunpack.c.l.b16 %v425
      %v1113 = vunpack.c.h.b16 %v425
      %v1114 = vunpack.c.l.b16 %v426
      %v1115 = vunpack.c.h.b16 %v426
      %v1116 = vunpack.c.l.b16 %v427
      %v1117 = vunpack.c.h.b16 %v427
      %v1118 = vunpack.c.l.b16 %v428
      %v1119 = vunpack.c.h.b16 %v428
      %v1120 = vunpack.c.l.b16 %v429
      %v1121 = vunpack.c.h.b16 %v429
      %v1122 = vunpack.c.l.b16 %v430
      %v1123 = vunpack.c.h.b16 %v430
      %v1124 = vunpack.c.l.b16 %v431
      %v1125 = vunpack.c.h.b16 %v431
      %v1126 = vunpack.c.l.b16 %v432
      %v1127 = vunpack.c.h.b16 %v432
      %v1128 = vunpack.c.l.b16 %v433
      %v1129 = vunpack.c.h.b16 %v433
      %v1130 = vunpack.c.l.b16 %v434
      %v1131 = vunpack.c.h.b16 %v434
      %v1132 = vunpack.c.l.b16 %v435
      %v1133 = vunpack.c.h.b16 %v435
      %v1134 = vunpack.c.l.b16 %v436
      %v1135 = vunpack.c.h.b16 %v436
      %v1136 = vunpack.c.l.b16 %v437
      %v1137 = vunpack.c.h.b16 %v437
      %v1138 = vunpack.c.l.b16 %v438
      %v1139 = vunpack.c.h.b16 %v438
      %v1140 = vunpack.c.l.b16 %v439
      %v1141 = vunpack.c.h.b16 %v439
      %v1142 = vunpack.c.l.b16 %v440
      %v1143 = vunpack.c.h.b16 %v440
      %v1144 = vunpack.c.l.b16 %v441
      %v1145 = vunpack.c.h.b16 %v441
      %v1146 = vunpack.c.l.b16 %v442
      %v1147 = vunpack.c.h.b16 %v442
      %v1148 = vunpack.c.l.b16 %v443
      %v1149 = vunpack.c.h.b16 %v443
      %v1150 = vunpack.c.l.b16 %v444
      %v1151 = vunpack.c.h.b16 %v444
      %v1152 = vunpack.c.l.b16 %v445
      %v1153 = vunpack.c.h.b16 %v445
      %v1154 = vunpack.c.l.b16 %v446
      %v1155 = vunpack.c.h.b16 %v446
      %v1156 = vunpack.c.l.b16 %v447
      %v1157 = vunpack.c.h.b16 %v447
      %v1158 = vunpack.c.l.b16 %v448
      %v1159 = vunpack.c.h.b16 %v448
      %v1160 = vunpack.c.l.b16 %v449
      %v1161 = vunpack.c.h.b16 %v449
      %v1162 = vunpack.c.l.b16 %v450
      %v1163 = vunpack.c.h.b16 %v450
      %v1164 = vunpack.c.l.b16 %v451
      %v1165 = vunpack.c.h.b16 %v451
      %v1166 = vunpack.c.l.b16 %v452
      %v1167 = vunpack.c.h.b16 %v452
      %v1168 = vunpack.c.l.b16 %v453
      %v1169 = vunpack.c.h.b16 %v453
      %v1170 = vunpack.c.l.b16 %v454
      %v1171 = vunpack.c.h.b16 %v454
      %v1172 = vunpack.c.l.b16 %v455
      %v1173 = vunpack.c.h.b16 %v455
      %v1174 = vunpack.c.l.b16 %v456
      %v1175 = vunpack.c.h.b16 %v456
      %v1176 = vunpack.c.l.b16 %v457
      %v1177 = vunpack.c.h.b16 %v457
      %v1178 = vunpack.c.l.b16 %v458
      %v1179 = vunpack.c.h.b16 %v458
      %v1180 = vunpack.c.l.b16 %v459
      %v1181 = vunpack.c.h.b16 %v459
      %v1182 = vunpack.c.l.b16 %v460
      %v1183 = vunpack.c.h.b16 %v460
      %v1184 = vunpack.c.l.b16 %v461
      %v1185 = vunpack.c.h.b16 %v461
      %v1186 = vunpack.c.l.b16 %v462
      %v1187 = vunpack.c.h.b16 %v462
      %v1188 = vunpack.c.l.b16 %v463
      %v1189 = vunpack.c.h.b16 %v463
      %v1190 = vunpack.c.l.b16 %v464
      %v1191 = vunpack.c.h.b16 %v464
      %v1192 = vunpack.c.l.b16 %v465
      %v1193 = vunpack.c.h.b16 %v465
      %v1194 = vunpack.c.l.b16 %v466
      %v1195 = vunpack.c.h.b16 %v466
      %v1196 = vunpack.c.l.b16 %v467
      %v1197 = vunpack.c.h.b16 %v467
      %v1198 = vunpack.c.l.b16 %v468
      %v1199 = vunpack.c.h.b16 %v468
      %v1200 = vunpack.c.l.b16 %v469
      %v1201 = vunpack.c.h.b16 %v469
      %v1202 = vunpack.c.l.b16 %v470
      %v1203 = vunpack.c.h.b16 %v470
      %v1204 = vunpack.c.l.b16 %v471
      %v1205 = vunpack.c.h.b16 %v471
      %v1206 = vunpack.c.l.b16 %v472
      %v1207 = vunpack.c.h.b16 %v472
      %v1208 = vunpack.c.l.b16 %v473
      %v1209 = vunpack.c.h.b16 %v473
      %v1210 = vunpack.c.l.b16 %v474
      %v1211 = vunpack.c.h.b16 %v474
      %v1212 = vunpack.c.l.b16 %v475
      %v1213 = vunpack.c.h.b16 %v475
      %v1214 = vunpack.c.l.b16 %v476
      %v1215 = vunpack.c.h.b16 %v476
      %v1216 = vunpack.c.l.b16 %v477
      %v1217 = vunpack.c.h.b16 %v477
      %v1218 = vunpack.c.l.b16 %v478
      %v1219 = vunpack.c.h.b16 %v478
      %v1220 = vunpack.c.l.b16 %v479
      %v1221 = vunpack.c.h.b16 %v479
      %v1222 = vunpack.c.l.b16 %v480
      %v1223 = vunpack.c.h.b16 %v480
      %v1224 = vunpack.c.l.b16 %v481
      %v1225 = vunpack.c.h.b16 %v481
      %v1226 = vunpack.c.l.b16 %v482
      %v1227 = vunpack.c.h.b16 %v482
      %v1228 = vunpack.c.l.b16 %v483
      %v1229 = vunpack.c.h.b16 %v483
      %v1230 = vunpack.c.l.b16 %v484
      %v1231 = vunpack.c.h.b16 %v484
      %v1232 = vunpack.c.l.b16 %v485
      %v1233 = vunpack.c.h.b16 %v485
      %v1234 = vunpack.c.l.b16 %v486
      %v1235 = vunpack.c.h.b16 %v486
      %v1236 = vunpack.c.l.b16 %v487
      %v1237 = vunpack.c.h.b16 %v487
      %v1238 = vunpack.c.l.b16 %v488
      %v1239 = vunpack.c.h.b16 %v488
      %v1240 = vunpack.c.l.b16 %v489
      %v1241 = vunpack.c.h.b16 %v489
      %v1242 = vunpack.c.l.b16 %v490
      %v1243 = vunpack.c.h.b16 %v490
      %v1244 = vunpack.c.l.b16 %v491
      %v1245 = vunpack.c.h.b16 %v491
      %v1246 = vunpack.c.l.b16 %v492
      %v1247 = vunpack.c.h.b16 %v492
      %v1248 = vunpack.c.l.b16 %v493
      %v1249 = vunpack.c.h.b16 %v493
      %v1250 = vunpack.c.l.b16 %v494
      %v1251 = vunpack.c.h.b16 %v494
      %v1252 = vunpack.c.l.b16 %v495
      %v1253 = vunpack.c.h.b16 %v495
      %v1254 = vunpack.c.l.b16 %v496
      %v1255 = vunpack.c.h.b16 %v496
      %v1256 = vunpack.c.l.b16 %v497
      %v1257 = vunpack.c.h.b16 %v497
      %v1258 = vunpack.c.l.b16 %v498
      %v1259 = vunpack.c.h.b16 %v498
      %v1260 = vunpack.c.l.b16 %v499
      %v1261 = vunpack.c.h.b16 %v499
      %v1262 = vunpack.c.l.b16 %v500
      %v1263 = vunpack.c.h.b16 %v500
      %v1264 = vunpack.c.l.b16 %v501
      %v1265 = vunpack.c.h.b16 %v501
      %v1266 = vunpack.c.l.b16 %v502
      %v1267 = vunpack.c.h.b16 %v502
      %v1268 = vunpack.c.l.b16 %v503
      %v1269 = vunpack.c.h.b16 %v503
      %v1270 = vunpack.c.l.b16 %v504
      %v1271 = vunpack.c.h.b16 %v504
      %v1272 = vunpack.c.l.b16 %v505
      %v1273 = vunpack.c.h.b16 %v505
      %v1274 = vunpack.c.l.b16 %v506
      %v1275 = vunpack.c.h.b16 %v506
      %v1276 = vunpack.c.l.b16 %v507
      %v1277 = vunpack.c.h.b16 %v507
      %v1278 = vunpack.c.l.b16 %v508
      %v1279 = vunpack.c.h.b16 %v508
      %v1280 = vunpack.c.l.b16 %v509
      %v1281 = vunpack.c.h.b16 %v509
      %v1282 = vunpack.c.l.b16 %v510
      %v1283 = vunpack.c.h.b16 %v510
      %v1284 = vunpack.c.l.b16 %v511
      %v1285 = vunpack.c.h.b16 %v511
      %v1286 = vunpack.c.l.b16 %v512
      %v1287 = vunpack.c.h.b16 %v512
      %v1288 = vunpack.c.l.b16 %v513
      %v1289 = vunpack.c.h.b16 %v513
      %v1290 = vunpack.c.l.b16 %v514
      %v1291 = vunpack.c.h.b16 %v514
      %v1292 = vunpack.c.l.b16 %v515
      %v1293 = vunpack.c.h.b16 %v515
      %v1294 = vunpack.c.l.b16 %v516
      %v1295 = vunpack.c.h.b16 %v516
      %v1296 = vunpack.c.l.b16 %v517
      %v1297 = vunpack.c.h.b16 %v517
      %v1298 = vunpack.c.l.b16 %v518
      %v1299 = vunpack.c.h.b16 %v518
      %v1300 = vunpack.c.l.b16 %v519
      %v1301 = vunpack.c.h.b16 %v519
      %v1302 = vunpack.c.l.b16 %v520
      %v1303 = vunpack.c.h.b16 %v520
      %v1304 = vunpack.c.l.b16 %v521
      %v1305 = vunpack.c.h.b16 %v521
      %v1306 = vunpack.c.l.b16 %v522
      %v1307 = vunpack.c.h.b16 %v522
      %v1308 = vunpack.c.l.b16 %v523
      %v1309 = vunpack.c.h.b16 %v523
      %v1310 = vunpack.c.l.b16 %v524
      %v1311 = vunpack.c.h.b16 %v524
      %v1312 = vunpack.c.l.b16 %v525
      %v1313 = vunpack.c.h.b16 %v525
      %v1314 = vunpack.c.l.b16 %v526
      %v1315 = vunpack.c.h.b16 %v526
      %v1316 = vunpack.c.l.b16 %v527
      %v1317 = vunpack.c.h.b16 %v527
      %v1318 = vunpack.c.l.b16 %v528
      %v1319 = vunpack.c.h.b16 %v528
      %v1320 = vunpack.c.l.b16 %v529
      %v1321 = vunpack.c.h.b16 %v529
      %v1322 = vunpack.c.l.b16 %v530
      %v1323 = vunpack.c.h.b16 %v530
      %v1324 = vunpack.c.l.b16 %v531
      %v1325 = vunpack.c.h.b16 %v531
      %v1326 = vunpack.c.l.b16 %v532
      %v1327 = vunpack.c.h.b16 %v532
      %v1328 = vunpack.c.l.b16 %v533
      %v1329 = vunpack.c.h.b16 %v533
      %v1330 = vunpack.c.l.b16 %v534
      %v1331 = vunpack.c.h.b16 %v534
      %v1332 = vunpack.c.l.b16 %v535
      %v1333 = vunpack.c.h.b16 %v535
      %v1334 = vunpack.c.l.b16 %v536
      %v1335 = vunpack.c.h.b16 %v536
      %v1336 = vunpack.c.l.b16 %v537
      %v1337 = vunpack.c.h.b16 %v537
      %v1338 = vunpack.c.l.b16 %v538
      %v1339 = vunpack.c.h.b16 %v538
      %v1340 = vunpack.c.l.b16 %v539
      %v1341 = vunpack.c.h.b16 %v539
      %v1342 = vunpack.c.l.b16 %v540
      %v1343 = vunpack.c.h.b16 %v540
      %v1344 = vunpack.c.l.b16 %v541
      %v1345 = vunpack.c.h.b16 %v541
      %v1346 = vunpack.c.l.b16 %v542
      %v1347 = vunpack.c.h.b16 %v542
      %v1348 = vunpack.c.l.b16 %v543
      %v1349 = vunpack.c.h.b16 %v543
      %v1350 = vunpack.c.l.b16 %v544
      %v1351 = vunpack.c.h.b16 %v544
      %v1352 = vunpack.c.l.b16 %v545
      %v1353 = vunpack.c.h.b16 %v545
      %v1354 = vunpack.c.l.b16 %v546
      %v1355 = vunpack.c.h.b16 %v546
      %v1356 = vunpack.c.l.b16 %v547
      %v1357 = vunpack.c.h.b16 %v547
      %v1358 = vunpack.c.l.b16 %v548
      %v1359 = vunpack.c.h.b16 %v548
      %v1360 = vunpack.c.l.b16 %v549
      %v1361 = vunpack.c.h.b16 %v549
      %v1362 = vunpack.c.l.b16 %v550
      %v1363 = vunpack.c.h.b16 %v550
      %v1364 = vunpack.c.l.b16 %v551
      %v1365 = vunpack.c.h.b16 %v551
      %v1366 = vunpack.c.l.b16 %v552
      %v1367 = vunpack.c.h.b16 %v552
      %v1368 = vunpack.c.l.b16 %v553
      %v1369 = vunpack.c.h.b16 %v553
      %v1370 = vunpack.c.l.b16 %v554
      %v1371 = vunpack.c.h.b16 %v554
      %v1372 = vunpack.c.l.b16 %v555
      %v1373 = vunpack.c.h.b16 %v555
      %v1374 = vpack.c.b16 %v866, %v862
      %v1375 = vpack.c.b16 %v867, %v863
      %v1376 = vpack.c.b16 %v868, %v864
      %v1377 = vpack.c.b16 %v869, %v865
      %v1378 = vpack.c.b16 %v874, %v870
      %v1379 = vpack.c.b16 %v875, %v871
      %v1380 = vpack.c.b16 %v876, %v872
      %v1381 = vpack.c.b16 %v877, %v873
      %v1382 = vpack.c.b16 %v882, %v878
      %v1383 = vpack.c.b16 %v883, %v879
      %v1384 = vpack.c.b16 %v884, %v880
      %v1385 = vpack.c.b16 %v885, %v881
      %v1386 = vpack.c.b16 %v890, %v886
      %v1387 = vpack.c.b16 %v891, %v887
      %v1388 = vpack.c.b16 %v892, %v888
      %v1389 = vpack.c.b16 %v893, %v889
      %v1390 = vpack.c.b16 %v898, %v894
      %v1391 = vpack.c.b16 %v899, %v895
      %v1392 = vpack.c.b16 %v900, %v896
      %v1393 = vpack.c.b16 %v901, %v897
      %v1394 = vpack.c.b16 %v906, %v902
      %v1395 = vpack.c.b16 %v907, %v903
      %v1396 = vpack.c.b16 %v908, %v904
      %v1397 = vpack.c.b16 %v909, %v905
      %v1398 = vpack.c.b16 %v914, %v910
      %v1399 = vpack.c.b16 %v915, %v911
      %v1400 = vpack.c.b16 %v916, %v912
      %v1401 = vpack.c.b16 %v917, %v913
      %v1402 = vpack.c.b16 %v922, %v918
      %v1403 = vpack.c.b16 %v923, %v919
      %v1404 = vpack.c.b16 %v924, %v920
      %v1405 = vpack.c.b16 %v925, %v921
      %v1406 = vpack.c.b16 %v930, %v926
      %v1407 = vpack.c.b16 %v931, %v927
      %v1408 = vpack.c.b16 %v932, %v928
      %v1409 = vpack.c.b16 %v933, %v929
      %v1410 = vpack.c.b16 %v938, %v934
      %v1411 = vpack.c.b16 %v939, %v935
      %v1412 = vpack.c.b16 %v940, %v936
      %v1413 = vpack.c.b16 %v941, %v937
      %v1414 = vpack.c.b16 %v946, %v942
      %v1415 = vpack.c.b16 %v947, %v943
      %v1416 = vpack.c.b16 %v948, %v944
      %v1417 = vpack.c.b16 %v949, %v945
      %v1418 = vpack.c.b16 %v954, %v950
      %v1419 = vpack.c.b16 %v955, %v951
      %v1420 = vpack.c.b16 %v956, %v952
      %v1421 = vpack.c.b16 %v957, %v953
      %v1422 = vpack.c.b16 %v962, %v958
      %v1423 = vpack.c.b16 %v963, %v959
      %v1424 = vpack.c.b16 %v964, %v960
      %v1425 = vpack.c.b16 %v965, %v961
      %v1426 = vpack.c.b16 %v970, %v966
      %v1427 = vpack.c.b16 %v971, %v967
      %v1428 = vpack.c.b16 %v972, %v968
      %v1429 = vpack.c.b16 %v973, %v969
      %v1430 = vpack.c.b16 %v978, %v974
      %v1431 = vpack.c.b16 %v979, %v975
      %v1432 = vpack.c.b16 %v980, %v976
      %v1433 = vpack.c.b16 %v981, %v977
      %v1434 = vpack.c.b16 %v986, %v982
      %v1435 = vpack.c.b16 %v987, %v983
      %v1436 = vpack.c.b16 %v988, %v984
      %v1437 = vpack.c.b16 %v989, %v985
      %v1438 = vpack.c.b16 %v994, %v990
      %v1439 = vpack.c.b16 %v995, %v991
      %v1440 = vpack.c.b16 %v996, %v992
      %v1441 = vpack.c.b16 %v997, %v993
      %v1442 = vpack.c.b16 %v1002, %v998
      %v1443 = vpack.c.b16 %v1003, %v999
      %v1444 = vpack.c.b16 %v1004, %v1000
      %v1445 = vpack.c.b16 %v1005, %v1001
      %v1446 = vpack.c.b16 %v1010, %v1006
      %v1447 = vpack.c.b16 %v1011, %v1007
      %v1448 = vpack.c.b16 %v1012, %v1008
      %v1449 = vpack.c.b16 %v1013, %v1009
      %v1450 = vpack.c.b16 %v1018, %v1014
      %v1451 = vpack.c.b16 %v1019, %v1015
      %v1452 = vpack.c.b16 %v1020, %v1016
      %v1453 = vpack.c.b16 %v1021, %v1017
      %v1454 = vpack.c.b16 %v1026, %v1022
      %v1455 = vpack.c.b16 %v1027, %v1023
      %v1456 = vpack.c.b16 %v1028, %v1024
      %v1457 = vpack.c.b16 %v1029, %v1025
      %v1458 = vpack.c.b16 %v1034, %v1030
      %v1459 = vpack.c.b16 %v1035, %v1031
      %v1460 = vpack.c.b16 %v1036, %v1032
      %v1461 = vpack.c.b16 %v1037, %v1033
      %v1462 = vpack.c.b16 %v1042, %v1038
      %v1463 = vpack.c.b16 %v1043, %v1039
      %v1464 = vpack.c.b16 %v1044, %v1040
      %v1465 = vpack.c.b16 %v1045, %v1041
      %v1466 = vpack.c.b16 %v1050, %v1046
      %v1467 = vpack.c.b16 %v1051, %v1047
      %v1468 = vpack.c.b16 %v1052, %v1048
      %v1469 = vpack.c.b16 %v1053, %v1049
      %v1470 = vpack.c.b16 %v1058, %v1054
      %v1471 = vpack.c.b16 %v1059, %v1055
      %v1472 = vpack.c.b16 %v1060, %v1056
      %v1473 = vpack.c.b16 %v1061, %v1057
      %v1474 = vpack.c.b16 %v1066, %v1062
      %v1475 = vpack.c.b16 %v1067, %v1063
      %v1476 = vpack.c.b16 %v1068, %v1064
      %v1477 = vpack.c.b16 %v1069, %v1065
      %v1478 = vpack.c.b16 %v1074, %v1070
      %v1479 = vpack.c.b16 %v1075, %v1071
      %v1480 = vpack.c.b16 %v1076, %v1072
      %v1481 = vpack.c.b16 %v1077, %v1073
      %v1482 = vpack.c.b16 %v1082, %v1078
      %v1483 = vpack.c.b16 %v1083, %v1079
      %v1484 = vpack.c.b16 %v1084, %v1080
      %v1485 = vpack.c.b16 %v1085, %v1081
      %v1486 = vpack.c.b16 %v1090, %v1086
      %v1487 = vpack.c.b16 %v1091, %v1087
      %v1488 = vpack.c.b16 %v1092, %v1088
      %v1489 = vpack.c.b16 %v1093, %v1089
      %v1490 = vpack.c.b16 %v1098, %v1094
      %v1491 = vpack.c.b16 %v1099, %v1095
      %v1492 = vpack.c.b16 %v1100, %v1096
      %v1493 = vpack.c.b16 %v1101, %v1097
      %v1494 = vpack.c.b16 %v1106, %v1102
      %v1495 = vpack.c.b16 %v1107, %v1103
      %v1496 = vpack.c.b16 %v1108, %v1104
      %v1497 = vpack.c.b16 %v1109, %v1105
      %v1498 = vpack.c.b16 %v1114, %v1110
      %v1499 = vpack.c.b16 %v1115, %v1111
      %v1500 = vpack.c.b16 %v1116, %v1112
      %v1501 = vpack.c.b16 %v1117, %v1113
      %v1502 = vpack.c.b16 %v1122, %v1118
      %v1503 = vpack.c.b16 %v1123, %v1119
      %v1504 = vpack.c.b16 %v1124, %v1120
      %v1505 = vpack.c.b16 %v1125, %v1121
      %v1506 = vpack.c.b16 %v1130, %v1126
      %v1507 = vpack.c.b16 %v1131, %v1127
      %v1508 = vpack.c.b16 %v1132, %v1128
      %v1509 = vpack.c.b16 %v1133, %v1129
      %v1510 = vpack.c.b16 %v1138, %v1134
      %v1511 = vpack.c.b16 %v1139, %v1135
      %v1512 = vpack.c.b16 %v1140, %v1136
      %v1513 = vpack.c.b16 %v1141, %v1137
      %v1514 = vpack.c.b16 %v1146, %v1142
      %v1515 = vpack.c.b16 %v1147, %v1143
      %v1516 = vpack.c.b16 %v1148, %v1144
      %v1517 = vpack.c.b16 %v1149, %v1145
      %v1518 = vpack.c.b16 %v1154, %v1150
      %v1519 = vpack.c.b16 %v1155, %v1151
      %v1520 = vpack.c.b16 %v1156, %v1152
      %v1521 = vpack.c.b16 %v1157, %v1153
      %v1522 = vpack.c.b16 %v1162, %v1158
      %v1523 = vpack.c.b16 %v1163, %v1159
      %v1524 = vpack.c.b16 %v1164, %v1160
      %v1525 = vpack.c.b16 %v1165, %v1161
      %v1526 = vpack.c.b16 %v1170, %v1166
      %v1527 = vpack.c.b16 %v1171, %v1167
      %v1528 = vpack.c.b16 %v1172, %v1168
      %v1529 = vpack.c.b16 %v1173, %v1169
      %v1530 = vpack.c.b16 %v1178, %v1174
      %v1531 = vpack.c.b16 %v1179, %v1175
      %v1532 = vpack.c.b16 %v1180, %v1176
      %v1533 = vpack.c.b16 %v1181, %v1177
      %v1534 = vpack.c.b16 %v1186, %v1182
      %v1535 = vpack.c.b16 %v1187, %v1183
      %v1536 = vpack.c.b16 %v1188, %v1184
      %v1537 = vpack.c.b16 %v1189, %v1185
      %v1538 = vpack.c.b16 %v1194, %v1190
      %v1539 = vpack.c.b16 %v1195, %v1191
      %v1540 = vpack.c.b16 %v1196, %v1192
      %v1541 = vpack.c.b16 %v1197, %v1193
      %v1542 = vpack.c.b16 %v1202, %v1198
      %v1543 = vpack.c.b16 %v1203, %v1199
      %v1544 = vpack.c.b16 %v1204, %v1200
      %v1545 = vpack.c.b16 %v1205, %v1201
      %v1546 = vpack.c.b16 %v1210, %v1206
      %v1547 = vpack.c.b16 %v1211, %v1207
      %v1548 = vpack.c.b16 %v1212, %v1208
      %v1549 = vpack.c.b16 %v1213, %v1209
      %v1550 = vpack.c.b16 %v1218, %v1214
      %v1551 = vpack.c.b16 %v1219, %v1215
      %v1552 = vpack.c.b16 %v1220, %v1216
      %v1553 = vpack.c.b16 %v1221, %v1217
      %v1554 = vpack.c.b16 %v1226, %v1222
      %v1555 = vpack.c.b16 %v1227, %v1223
      %v1556 = vpack.c.b16 %v1228, %v1224
      %v1557 = vpack.c.b16 %v1229, %v1225
      %v1558 = vpack.c.b16 %v1234, %v1230
      %v1559 = vpack.c.b16 %v1235, %v1231
      %v1560 = vpack.c.b16 %v1236, %v1232
      %v1561 = vpack.c.b16 %v1237, %v1233
      %v1562 = vpack.c.b16 %v1242, %v1238
      %v1563 = vpack.c.b16 %v1243, %v1239
      %v1564 = vpack.c.b16 %v1244, %v1240
      %v1565 = vpack.c.b16 %v1245, %v1241
      %v1566 = vpack.c.b16 %v1250, %v1246
      %v1567 = vpack.c.b16 %v1251, %v1247
      %v1568 = vpack.c.b16 %v1252, %v1248
      %v1569 = vpack.c.b16 %v1253, %v1249
      %v1570 = vpack.c.b16 %v1258, %v1254
      %v1571 = vpack.c.b16 %v1259, %v1255
      %v1572 = vpack.c.b16 %v1260, %v1256
      %v1573 = vpack.c.b16 %v1261, %v1257
      %v1574 = vpack.c.b16 %v1266, %v1262
      %v1575 = vpack.c.b16 %v1267, %v1263
      %v1576 = vpack.c.b16 %v1268, %v1264
      %v1577 = vpack.c.b16 %v1269, %v1265
      %v1578 = vpack.c.b16 %v1274, %v1270
      %v1579 = vpack.c.b16 %v1275, %v1271
      %v1580 = vpack.c.b16 %v1276, %v1272
      %v1581 = vpack.c.b16 %v1277, %v1273
      %v1582 = vpack.c.b16 %v1282, %v1278
      %v1583 = vpack.c.b16 %v1283, %v1279
      %v1584 = vpack.c.b16 %v1284, %v1280
      %v1585 = vpack.c.b16 %v1285, %v1281
      %v1586 = vpack.c.b16 %v1290, %v1286
      %v1587 = vpack.c.b16 %v1291, %v1287
      %v1588 = vpack.c.b16 %v1292, %v1288
      %v1589 = vpack.c.b16 %v1293, %v1289
      %v1590 = vpack.c.b16 %v1298, %v1294
      %v1591 = vpack.c.b16 %v1299, %v1295
      %v1592 = vpack.c.b16 %v1300, %v1296
      %v1593 = vpack.c.b16 %v1301, %v1297
      %v1594 = vpack.c.b16 %v1306, %v1302
      %v1595 = vpack.c.b16 %v1307, %v1303
      %v1596 = vpack.c.b16 %v1308, %v1304
      %v1597 = vpack.c.b16 %v1309, %v1305
      %v1598 = vpack.c.b16 %v1314, %v1310
      %v1599 = vpack.c.b16 %v1315, %v1311
      %v1600 = vpack.c.b16 %v1316, %v1312
      %v1601 = vpack.c.b16 %v1317, %v1313
      %v1602 = vpack.c.b16 %v1322, %v1318
      %v1603 = vpack.c.b16 %v1323, %v1319
      %v1604 = vpack.c.b16 %v1324, %v1320
      %v1605 = vpack.c.b16 %v1325, %v1321
      %v1606 = vpack.c.b16 %v1330, %v1326
      %v1607 = vpack.c.b16 %v1331, %v1327
      %v1608 = vpack.c.b16 %v1332, %v1328
      %v1609 = vpack.c.b16 %v1333, %v1329
      %v1610 = vpack.c.b16 %v1338, %v1334
      %v1611 = vpack.c.b16 %v1339, %v1335
      %v1612 = vpack.c.b16 %v1340, %v1336
      %v1613 = vpack.c.b16 %v1341, %v1337
      %v1614 = vpack.c.b16 %v1346, %v1342
      %v1615 = vpack.c.b16 %v1347, %v1343
      %v1616 = vpack.c.b16 %v1348, %v1344
      %v1617 = vpack.c.b16 %v1349, %v1345
      %v1618 = vpack.c.b16 %v1354, %v1350
      %v1619 = vpack.c.b16 %v1355, %v1351
      %v1620 = vpack.c.b16 %v1356, %v1352
      %v1621 = vpack.c.b16 %v1357, %v1353
      %v1622 = vpack.c.b16 %v1362, %v1358
      %v1623 = vpack.c.b16 %v1363, %v1359
      %v1624 = vpack.c.b16 %v1364, %v1360
      %v1625 = vpack.c.b16 %v1365, %v1361
      %v1626 = vpack.c.b16 %v1370, %v1366
      %v1627 = vpack.c.b16 %v1371, %v1367
      %v1628 = vpack.c.b16 %v1372, %v1368
      %v1629 = vpack.c.b16 %v1373, %v1369
      %1886 = vmatprep.subr.bf16.mxu0 %v1375
      %1887 = vmatpush1.bf16.msra.mxu0 %v1374
      %1888 = vmatprep.subr.bf16.mxu0 %v1379
      %1889 = vmatpush1.bf16.msra.mxu0 %v1378
      %1890 = vmatprep.subr.bf16.mxu0 %v1383
      %1891 = vmatpush1.bf16.msra.mxu0 %v1382
      %1892 = vmatprep.subr.bf16.mxu0 %v1387
      %1893 = vmatpush1.bf16.msra.mxu0 %v1386
      %1894 = vmatprep.subr.bf16.mxu0 %v1391
      %1895 = vmatpush1.bf16.msra.mxu0 %v1390
      %1896 = vmatprep.subr.bf16.mxu0 %v1395
      %1897 = vmatpush1.bf16.msra.mxu0 %v1394
      %1898 = vmatprep.subr.bf16.mxu0 %v1399
      %1899 = vmatpush1.bf16.msra.mxu0 %v1398
      %1900 = vmatprep.subr.bf16.mxu0 %v1403
      %1901 = vmatpush1.bf16.msra.mxu0 %v1402
      %1902 = vmatprep.subr.bf16.mxu0 %v1407
      %1903 = vmatpush1.bf16.msra.mxu0 %v1406
      %1904 = vmatprep.subr.bf16.mxu0 %v1411
      %1905 = vmatpush1.bf16.msra.mxu0 %v1410
      %1906 = vmatprep.subr.bf16.mxu0 %v1415
      %1907 = vmatpush1.bf16.msra.mxu0 %v1414
      %1908 = vmatprep.subr.bf16.mxu0 %v1419
      %1909 = vmatpush1.bf16.msra.mxu0 %v1418
      %1910 = vmatprep.subr.bf16.mxu0 %v1423
      %1911 = vmatpush1.bf16.msra.mxu0 %v1422
      %1912 = vmatprep.subr.bf16.mxu0 %v1427
      %1913 = vmatpush1.bf16.msra.mxu0 %v1426
      %1914 = vmatprep.subr.bf16.mxu0 %v1431
      %1915 = vmatpush1.bf16.msra.mxu0 %v1430
      %1916 = vmatprep.subr.bf16.mxu0 %v1435
      %1917 = vmatpush1.bf16.msra.mxu0 %v1434
      %1918 = vmatprep.mubr.bf16.mxu0 %v591
      %1919 = vmatmul.mubr.bf16.gmra.mrb[0].mxu0 %v590
      %v1920 = vpop.f32.mrb[0].mxu0
      %v1921 = vadd.f32 %v561, %v1920
      %v1922 = vpop.f32.mrb[0].mxu0
      %v1923 = vadd.f32 %v565, %v1922
      %v1924 = vpop.f32.mrb[0].mxu0
      %v1925 = vpop.f32.mrb[0].mxu0
      %1926 = vdwg.mxu0
      %1927 = vmatprep.subr.bf16.mxu0 %v1439
      %1928 = vmatpush1.bf16.msra.mxu0 %v1438
      %1929 = vmatprep.subr.bf16.mxu0 %v1443
      %1930 = vmatpush1.bf16.msra.mxu0 %v1442
      %1931 = vmatprep.subr.bf16.mxu0 %v1447
      %1932 = vmatpush1.bf16.msra.mxu0 %v1446
      %1933 = vmatprep.subr.bf16.mxu0 %v1451
      %1934 = vmatpush1.bf16.msra.mxu0 %v1450
      %1935 = vmatprep.subr.bf16.mxu0 %v1455
      %1936 = vmatpush1.bf16.msra.mxu0 %v1454
      %1937 = vmatprep.subr.bf16.mxu0 %v1459
      %1938 = vmatpush1.bf16.msra.mxu0 %v1458
      %1939 = vmatprep.subr.bf16.mxu0 %v1463
      %1940 = vmatpush1.bf16.msra.mxu0 %v1462
      %1941 = vmatprep.subr.bf16.mxu0 %v1467
      %1942 = vmatpush1.bf16.msra.mxu0 %v1466
      %1943 = vmatprep.subr.bf16.mxu0 %v1471
      %1944 = vmatpush1.bf16.msra.mxu0 %v1470
      %1945 = vmatprep.subr.bf16.mxu0 %v1475
      %1946 = vmatpush1.bf16.msra.mxu0 %v1474
      %1947 = vmatprep.subr.bf16.mxu0 %v1479
      %1948 = vmatpush1.bf16.msra.mxu0 %v1478
      %1949 = vmatprep.subr.bf16.mxu0 %v1483
      %1950 = vmatpush1.bf16.msra.mxu0 %v1482
      %1951 = vmatprep.subr.bf16.mxu0 %v1487
      %1952 = vmatpush1.bf16.msra.mxu0 %v1486
      %1953 = vmatprep.subr.bf16.mxu0 %v1491
      %1954 = vmatpush1.bf16.msra.mxu0 %v1490
      %1955 = vmatprep.subr.bf16.mxu0 %v1495
      %1956 = vmatpush1.bf16.msra.mxu0 %v1494
      %1957 = vmatprep.subr.bf16.mxu0 %v1499
      %1958 = vmatpush1.bf16.msra.mxu0 %v1498
      %1959 = vmatprep.mubr.bf16.mxu0 %v593
      %1960 = vmatmul.mubr.bf16.gmra.mrb[0].mxu0 %v592
      %v1961 = vpop.f32.mrb[0].mxu0
      %v1962 = vadd.f32 %v1921, %v1961
      %v1963 = vpop.f32.mrb[0].mxu0
      %v1964 = vadd.f32 %v1923, %v1963
      %v1965 = vpop.f32.mrb[0].mxu0
      %v1966 = vpop.f32.mrb[0].mxu0
      %1967 = vdwg.mxu0
      %1968 = vmatprep.subr.bf16.mxu0 %v1503
      %1969 = vmatpush1.bf16.msra.mxu0 %v1502
      %1970 = vmatprep.subr.bf16.mxu0 %v1507
      %1971 = vmatpush1.bf16.msra.mxu0 %v1506
      %1972 = vmatprep.subr.bf16.mxu0 %v1511
      %1973 = vmatpush1.bf16.msra.mxu0 %v1510
      %1974 = vmatprep.subr.bf16.mxu0 %v1515
      %1975 = vmatpush1.bf16.msra.mxu0 %v1514
      %1976 = vmatprep.subr.bf16.mxu0 %v1519
      %1977 = vmatpush1.bf16.msra.mxu0 %v1518
      %1978 = vmatprep.subr.bf16.mxu0 %v1523
      %1979 = vmatpush1.bf16.msra.mxu0 %v1522
      %1980 = vmatprep.subr.bf16.mxu0 %v1527
      %1981 = vmatpush1.bf16.msra.mxu0 %v1526
      %1982 = vmatprep.subr.bf16.mxu0 %v1531
      %1983 = vmatpush1.bf16.msra.mxu0 %v1530
      %1984 = vmatprep.subr.bf16.mxu0 %v1535
      %1985 = vmatpush1.bf16.msra.mxu0 %v1534
      %1986 = vmatprep.subr.bf16.mxu0 %v1539
      %1987 = vmatpush1.bf16.msra.mxu0 %v1538
      %1988 = vmatprep.subr.bf16.mxu0 %v1543
      %1989 = vmatpush1.bf16.msra.mxu0 %v1542
      %1990 = vmatprep.subr.bf16.mxu0 %v1547
      %1991 = vmatpush1.bf16.msra.mxu0 %v1546
      %1992 = vmatprep.subr.bf16.mxu0 %v1551
      %1993 = vmatpush1.bf16.msra.mxu0 %v1550
      %1994 = vmatprep.subr.bf16.mxu0 %v1555
      %1995 = vmatpush1.bf16.msra.mxu0 %v1554
      %1996 = vmatprep.subr.bf16.mxu0 %v1559
      %1997 = vmatpush1.bf16.msra.mxu0 %v1558
      %1998 = vmatprep.subr.bf16.mxu0 %v1563
      %1999 = vmatpush1.bf16.msra.mxu0 %v1562
      %2000 = vmatprep.mubr.bf16.mxu0 %v595
      %2001 = vmatmul.mubr.bf16.gmra.mrb[0].mxu0 %v594
      %v2002 = vpop.f32.mrb[0].mxu0
      %v2003 = vadd.f32 %v1962, %v2002
      %v2004 = vpop.f32.mrb[0].mxu0
      %v2005 = vadd.f32 %v1964, %v2004
      %v2006 = vpop.f32.mrb[0].mxu0
      %v2007 = vpop.f32.mrb[0].mxu0
      %2008 = vdwg.mxu0
      %2009 = vmatprep.subr.bf16.mxu0 %v1567
      %2010 = vmatpush1.bf16.msra.mxu0 %v1566
      %2011 = vmatprep.subr.bf16.mxu0 %v1571
      %2012 = vmatpush1.bf16.msra.mxu0 %v1570
      %2013 = vmatprep.subr.bf16.mxu0 %v1575
      %2014 = vmatpush1.bf16.msra.mxu0 %v1574
      %2015 = vmatprep.subr.bf16.mxu0 %v1579
      %2016 = vmatpush1.bf16.msra.mxu0 %v1578
      %2017 = vmatprep.subr.bf16.mxu0 %v1583
      %2018 = vmatpush1.bf16.msra.mxu0 %v1582
      %2019 = vmatprep.subr.bf16.mxu0 %v1587
      %2020 = vmatpush1.bf16.msra.mxu0 %v1586
      %2021 = vmatprep.subr.bf16.mxu0 %v1591
      %2022 = vmatpush1.bf16.msra.mxu0 %v1590
      %2023 = vmatprep.subr.bf16.mxu0 %v1595
      %2024 = vmatpush1.bf16.msra.mxu0 %v1594
      %2025 = vmatprep.subr.bf16.mxu0 %v1599
      %2026 = vmatpush1.bf16.msra.mxu0 %v1598
      %2027 = vmatprep.subr.bf16.mxu0 %v1603
      %2028 = vmatpush1.bf16.msra.mxu0 %v1602
      %2029 = vmatprep.subr.bf16.mxu0 %v1607
      %2030 = vmatpush1.bf16.msra.mxu0 %v1606
      %2031 = vmatprep.subr.bf16.mxu0 %v1611
      %2032 = vmatpush1.bf16.msra.mxu0 %v1610
      %2033 = vmatprep.subr.bf16.mxu0 %v1615
      %2034 = vmatpush1.bf16.msra.mxu0 %v1614
      %2035 = vmatprep.subr.bf16.mxu0 %v1619
      %2036 = vmatpush1.bf16.msra.mxu0 %v1618
      %2037 = vmatprep.subr.bf16.mxu0 %v1623
      %2038 = vmatpush1.bf16.msra.mxu0 %v1622
      %2039 = vmatprep.subr.bf16.mxu0 %v1627
      %2040 = vmatpush1.bf16.msra.mxu0 %v1626
      %2041 = vmatprep.mubr.bf16.mxu0 %v597
      %2042 = vmatmul.mubr.bf16.gmra.mrb[0].mxu0 %v596
      %v2043 = vpop.f32.mrb[0].mxu0
      %v2044 = vadd.f32 %v2003, %v2043
      %v2045 = vpop.f32.mrb[0].mxu0
      %v2046 = vadd.f32 %v2005, %v2045
      %v2047 = vpop.f32.mrb[0].mxu0
      %v2048 = vpop.f32.mrb[0].mxu0
      %2049 = vdwg.mxu0
      %2050 = vmatprep.subr.bf16.mxu0 %v1377
      %2051 = vmatpush1.bf16.msra.mxu0 %v1376
      %2052 = vmatprep.subr.bf16.mxu0 %v1381
      %2053 = vmatpush1.bf16.msra.mxu0 %v1380
      %2054 = vmatprep.subr.bf16.mxu0 %v1385
      %2055 = vmatpush1.bf16.msra.mxu0 %v1384
      %2056 = vmatprep.subr.bf16.mxu0 %v1389
      %2057 = vmatpush1.bf16.msra.mxu0 %v1388
      %2058 = vmatprep.subr.bf16.mxu0 %v1393
      %2059 = vmatpush1.bf16.msra.mxu0 %v1392
      %2060 = vmatprep.subr.bf16.mxu0 %v1397
      %2061 = vmatpush1.bf16.msra.mxu0 %v1396
      %2062 = vmatprep.subr.bf16.mxu0 %v1401
      %2063 = vmatpush1.bf16.msra.mxu0 %v1400
      %2064 = vmatprep.subr.bf16.mxu0 %v1405
      %2065 = vmatpush1.bf16.msra.mxu0 %v1404
      %2066 = vmatprep.subr.bf16.mxu0 %v1409
      %2067 = vmatpush1.bf16.msra.mxu0 %v1408
      %2068 = vmatprep.subr.bf16.mxu0 %v1413
      %2069 = vmatpush1.bf16.msra.mxu0 %v1412
      %2070 = vmatprep.subr.bf16.mxu0 %v1417
      %2071 = vmatpush1.bf16.msra.mxu0 %v1416
      %2072 = vmatprep.subr.bf16.mxu0 %v1421
      %2073 = vmatpush1.bf16.msra.mxu0 %v1420
      %2074 = vmatprep.subr.bf16.mxu0 %v1425
      %2075 = vmatpush1.bf16.msra.mxu0 %v1424
      %2076 = vmatprep.subr.bf16.mxu0 %v1429
      %2077 = vmatpush1.bf16.msra.mxu0 %v1428
      %2078 = vmatprep.subr.bf16.mxu0 %v1433
      %2079 = vmatpush1.bf16.msra.mxu0 %v1432
      %2080 = vmatprep.subr.bf16.mxu0 %v1437
      %2081 = vmatpush1.bf16.msra.mxu0 %v1436
      %2082 = vmatprep.mubr.bf16.mxu0 %v591
      %2083 = vmatmul.mubr.bf16.gmra.mrb[0].mxu0 %v590
      %v2084 = vpop.f32.mrb[0].mxu0
      %v2085 = vadd.f32 %v569, %v2084
      %v2086 = vpop.f32.mrb[0].mxu0
      %v2087 = vadd.f32 %v573, %v2086
      %v2088 = vpop.f32.mrb[0].mxu0
      %v2089 = vpop.f32.mrb[0].mxu0
      %2090 = vdwg.mxu0
      %2091 = vmatprep.subr.bf16.mxu0 %v1441
      %2092 = vmatpush1.bf16.msra.mxu0 %v1440
      %2093 = vmatprep.subr.bf16.mxu0 %v1445
      %2094 = vmatpush1.bf16.msra.mxu0 %v1444
      %2095 = vmatprep.subr.bf16.mxu0 %v1449
      %2096 = vmatpush1.bf16.msra.mxu0 %v1448
      %2097 = vmatprep.subr.bf16.mxu0 %v1453
      %2098 = vmatpush1.bf16.msra.mxu0 %v1452
      %2099 = vmatprep.subr.bf16.mxu0 %v1457
      %2100 = vmatpush1.bf16.msra.mxu0 %v1456
      %2101 = vmatprep.subr.bf16.mxu0 %v1461
      %2102 = vmatpush1.bf16.msra.mxu0 %v1460
      %2103 = vmatprep.subr.bf16.mxu0 %v1465
      %2104 = vmatpush1.bf16.msra.mxu0 %v1464
      %2105 = vmatprep.subr.bf16.mxu0 %v1469
      %2106 = vmatpush1.bf16.msra.mxu0 %v1468
      %2107 = vmatprep.subr.bf16.mxu0 %v1473
      %2108 = vmatpush1.bf16.msra.mxu0 %v1472
      %2109 = vmatprep.subr.bf16.mxu0 %v1477
      %2110 = vmatpush1.bf16.msra.mxu0 %v1476
      %2111 = vmatprep.subr.bf16.mxu0 %v1481
      %2112 = vmatpush1.bf16.msra.mxu0 %v1480
      %2113 = vmatprep.subr.bf16.mxu0 %v1485
      %2114 = vmatpush1.bf16.msra.mxu0 %v1484
      %2115 = vmatprep.subr.bf16.mxu0 %v1489
      %2116 = vmatpush1.bf16.msra.mxu0 %v1488
      %2117 = vmatprep.subr.bf16.mxu0 %v1493
      %2118 = vmatpush1.bf16.msra.mxu0 %v1492
      %2119 = vmatprep.subr.bf16.mxu0 %v1497
      %2120 = vmatpush1.bf16.msra.mxu0 %v1496
      %2121 = vmatprep.subr.bf16.mxu0 %v1501
      %2122 = vmatpush1.bf16.msra.mxu0 %v1500
      %2123 = vmatprep.mubr.bf16.mxu0 %v593
      %2124 = vmatmul.mubr.bf16.gmra.mrb[0].mxu0 %v592
      %v2125 = vpop.f32.mrb[0].mxu0
      %v2126 = vadd.f32 %v2085, %v2125
      %v2127 = vpop.f32.mrb[0].mxu0
      %v2128 = vadd.f32 %v2087, %v2127
      %v2129 = vpop.f32.mrb[0].mxu0
      %v2130 = vpop.f32.mrb[0].mxu0
      %2131 = vdwg.mxu0
      %2132 = vmatprep.subr.bf16.mxu0 %v1505
      %2133 = vmatpush1.bf16.msra.mxu0 %v1504
      %2134 = vmatprep.subr.bf16.mxu0 %v1509
      %2135 = vmatpush1.bf16.msra.mxu0 %v1508
      %2136 = vmatprep.subr.bf16.mxu0 %v1513
      %2137 = vmatpush1.bf16.msra.mxu0 %v1512
      %2138 = vmatprep.subr.bf16.mxu0 %v1517
      %2139 = vmatpush1.bf16.msra.mxu0 %v1516
      %2140 = vmatprep.subr.bf16.mxu0 %v1521
      %2141 = vmatpush1.bf16.msra.mxu0 %v1520
      %2142 = vmatprep.subr.bf16.mxu0 %v1525
      %2143 = vmatpush1.bf16.msra.mxu0 %v1524
      %2144 = vmatprep.subr.bf16.mxu0 %v1529
      %2145 = vmatpush1.bf16.msra.mxu0 %v1528
      %2146 = vmatprep.subr.bf16.mxu0 %v1533
      %2147 = vmatpush1.bf16.msra.mxu0 %v1532
      %2148 = vmatprep.subr.bf16.mxu0 %v1537
      %2149 = vmatpush1.bf16.msra.mxu0 %v1536
      %2150 = vmatprep.subr.bf16.mxu0 %v1541
      %2151 = vmatpush1.bf16.msra.mxu0 %v1540
      %2152 = vmatprep.subr.bf16.mxu0 %v1545
      %2153 = vmatpush1.bf16.msra.mxu0 %v1544
      %2154 = vmatprep.subr.bf16.mxu0 %v1549
      %2155 = vmatpush1.bf16.msra.mxu0 %v1548
      %2156 = vmatprep.subr.bf16.mxu0 %v1553
      %2157 = vmatpush1.bf16.msra.mxu0 %v1552
      %2158 = vmatprep.subr.bf16.mxu0 %v1557
      %2159 = vmatpush1.bf16.msra.mxu0 %v1556
      %2160 = vmatprep.subr.bf16.mxu0 %v1561
      %2161 = vmatpush1.bf16.msra.mxu0 %v1560
      %2162 = vmatprep.subr.bf16.mxu0 %v1565
      %2163 = vmatpush1.bf16.msra.mxu0 %v1564
      %2164 = vmatprep.mubr.bf16.mxu0 %v595
      %2165 = vmatmul.mubr.bf16.gmra.mrb[0].mxu0 %v594
      %v2166 = vpop.f32.mrb[0].mxu0
      %v2167 = vadd.f32 %v2126, %v2166
      %v2168 = vpop.f32.mrb[0].mxu0
      %v2169 = vadd.f32 %v2128, %v2168
      %v2170 = vpop.f32.mrb[0].mxu0
      %v2171 = vpop.f32.mrb[0].mxu0
      %2172 = vdwg.mxu0
      %2173 = vmatprep.subr.bf16.mxu0 %v1569
      %2174 = vmatpush1.bf16.msra.mxu0 %v1568
      %2175 = vmatprep.subr.bf16.mxu0 %v1573
      %2176 = vmatpush1.bf16.msra.mxu0 %v1572
      %2177 = vmatprep.subr.bf16.mxu0 %v1577
      %2178 = vmatpush1.bf16.msra.mxu0 %v1576
      %2179 = vmatprep.subr.bf16.mxu0 %v1581
      %2180 = vmatpush1.bf16.msra.mxu0 %v1580
      %2181 = vmatprep.subr.bf16.mxu0 %v1585
      %2182 = vmatpush1.bf16.msra.mxu0 %v1584
      %2183 = vmatprep.subr.bf16.mxu0 %v1589
      %2184 = vmatpush1.bf16.msra.mxu0 %v1588
      %2185 = vmatprep.subr.bf16.mxu0 %v1593
      %2186 = vmatpush1.bf16.msra.mxu0 %v1592
      %2187 = vmatprep.subr.bf16.mxu0 %v1597
      %2188 = vmatpush1.bf16.msra.mxu0 %v1596
      %2189 = vmatprep.subr.bf16.mxu0 %v1601
      %2190 = vmatpush1.bf16.msra.mxu0 %v1600
      %2191 = vmatprep.subr.bf16.mxu0 %v1605
      %2192 = vmatpush1.bf16.msra.mxu0 %v1604
      %2193 = vmatprep.subr.bf16.mxu0 %v1609
      %2194 = vmatpush1.bf16.msra.mxu0 %v1608
      %2195 = vmatprep.subr.bf16.mxu0 %v1613
      %2196 = vmatpush1.bf16.msra.mxu0 %v1612
      %2197 = vmatprep.subr.bf16.mxu0 %v1617
      %2198 = vmatpush1.bf16.msra.mxu0 %v1616
      %2199 = vmatprep.subr.bf16.mxu0 %v1621
      %2200 = vmatpush1.bf16.msra.mxu0 %v1620
      %2201 = vmatprep.subr.bf16.mxu0 %v1625
      %2202 = vmatpush1.bf16.msra.mxu0 %v1624
      %2203 = vmatprep.subr.bf16.mxu0 %v1629
      %2204 = vmatpush1.bf16.msra.mxu0 %v1628
      %2205 = vmatprep.mubr.bf16.mxu0 %v597
      %2206 = vmatmul.mubr.bf16.gmra.mrb[0].mxu0 %v596
      %v2207 = vpop.f32.mrb[0].mxu0
      %v2208 = vadd.f32 %v2167, %v2207
      %v2209 = vpop.f32.mrb[0].mxu0
      %v2210 = vadd.f32 %v2169, %v2209
      %v2211 = vpop.f32.mrb[0].mxu0
      %v2212 = vpop.f32.mrb[0].mxu0
      %2213 = vdwg.mxu0
      %v2214 = vld [vmem:[%s284] sm:$0xff]
      %v2215 = vld [vmem:[%s284 + $0x8] sm:$0xff]
      %v2216 = vld [vmem:[%s284 + $0x10] sm:$0xff]
      %v2217 = vld [vmem:[%s284 + $0x18] sm:$0xff]
      %v2218 = vadd.f32 %v2044, %v2214
      %v2219 = vadd.f32 %v2046, %v2215
      %v2220 = vadd.f32 %v2208, %v2216
      %v2221 = vadd.f32 %v2210, %v2217
      %2222 = vst [vmem:[%s294] sm:$0xff] %v2218
      %2223 = vst [vmem:[%s294 + $0x8] sm:$0xff] %v2219
      %2224 = vst [vmem:[%s294 + $0x10] sm:$0xff] %v2220
      %2225 = vst [vmem:[%s294 + $0x18] sm:$0xff] %v2221
      %s2226 = smul.u32 4, %s19
      %p2227 = scmp.lt.s32.totalorder %s20, 0
      %s2228 = scalar_select %p2227, %s20, 0
      %p2229 = scmp.lt.s32.totalorder %s2226, 7
      %s2230 = scalar_select %p2229, %s2226, 7
      %s2231 = smul.addr %s2228, 8
      %s2232 = sadd.s32 %s2230, %s2231
      %s2233 = smul.addr %s2232, 8
      %s2234 = scalar_lea.vmem %s4, %s2233
      // Predicated region
      $region37: #{_forward_impl.3} parent=35 // pred_check
        %p2235 = pneg %p153
      $region38: #{_forward_impl.3} parent=35 // pred_check_branch
        %2237 = sbr.rel (%p2235) target = $region40
      $region39: #{_forward_impl.3} parent=35 // pred_region
        %s2238 = smul.u32 4, %s19
      $region40: #{_forward_impl.3} parent=35 // pred_fallthru
        _
    $region36: #{_forward_impl.3} parent=5 // pred_fallthru
      _
    %p2239 = scmp.le.s32.totalorder 2, %s10
    // Predicated region
    $region41: #{_forward_impl.3} parent=5 // pred_check
      %p2240 = pneg %p2239
    $region42: #{_forward_impl.3} parent=5 // pred_check_branch
      %2242 = sbr.rel (%p2240) target = $region44
    $region43: #{_forward_impl.3} parent=5 // pred_region
      %s2243 = ssub.s32 %s10, 2
      // Predicated region
      $region45: #{_forward_impl.3} parent=43 // pred_check
        %p2244 = pneg %p159
      $region46: #{_forward_impl.3} parent=43 // pred_check_branch
        %2246 = sbr.rel (%p2244) target = $region48
      $region47: #{_forward_impl.3} parent=43 // pred_region
        %s2247 = smul.u32 4, %s21
        %p2248 = scmp.lt.s32.totalorder %s22, 0
        %s2249 = scalar_select %p2248, %s22, 0
        %p2250 = scmp.lt.s32.totalorder %s2247, 7
        %s2251 = scalar_select %p2250, %s2247, 7
        %s2252 = smul.addr %s2249, 8
        %s2253 = sadd.s32 %s2251, %s2252
        %s2254 = smul.addr %s2253, 8
        %s2255 = scalar_lea.vmem %s4, %s2254
      $region48: #{_forward_impl.3} parent=43 // pred_fallthru
        _
    $region44: #{_forward_impl.3} parent=5 // pred_fallthru
      _
  $region6: #{_forward_impl.3} parent=0 // loop_footer
    %s14 = sadd.s32 1, %s10
  $region7: #{_forward_impl.3} parent=0 // loop_footer_branch
    %9 = sbr.rel target = $region3
  $region8: #{_forward_impl.3} parent=0 // loop_exit
    _

// kernel: _forward_impl.2
$region0: #{_forward_impl.2}
  #allocation0 [shape = 'u32[]', space=smem, size = 0x4, offset = 0x4, fixed_abs, tag = 'smem constant byte address 0x4 - core index']
  #allocation1 [shape = 'u32[144,128]{1,0:T(1,128)}', space=vmem, size = 0x12000, scoped, tag = 'internal scratch']
  %s0 = inlined_call_operand.vmem [shape: bf16[8,1008], index: 0, kind: input, shape index: {}]
  %s1 = inlined_call_operand.hbm [shape: bf16[2,1008,512], index: 1, kind: input, shape index: {}]
  %s2 = inlined_call_operand.hbm [shape: f32[1,1024], index: 2, kind: input, shape index: {}]
  %s3 = inlined_call_operand.vmem [shape: bf16[8,1024], index: 3, kind: output, shape index: {}]
  %s4 = sld [smem:[#allocation0]]
  $region53: #{_forward_impl.2} parent=0
    _
  %s6 = ssub.s32 1, %s4
  %s7 = scalar_select 0, %s6, %s4
  $region1: #{_forward_impl.2} parent=0
    #allocation2 [shape = 'u8[2064384]{0}', space=vmem, size = 0x1f8000, scoped, tag = 'input window, operand 1']
    #allocation3 [shape = 's32[2]{0}', space=sflag, size = 0x8, scoped, tag = 'scoped memory for _forward_impl.2']
    #allocation4 [shape = 'u8[4096]{0}', space=vmem, size = 0x1000, scoped, tag = 'input window, operand 2']
    #allocation5 [shape = 's32[2]{0}', space=sflag, size = 0x8, scoped, tag = 'scoped memory for _forward_impl.2']
    %8 = vsyncpa [#allocation3], 0
    %s9 = scalar_lea.sflag [#allocation3], 1
    %10 = vsyncpa %s9, 0
    %11 = vsyncpa [#allocation5], 0
    %s12 = scalar_lea.sflag [#allocation5], 1
    %13 = vsyncpa %s12, 0
    loop: start=0, step=1, limit=4
    $region2: #{_forward_impl.2} parent=1 // loop_pre_header
      _
    $region3: #{_forward_impl.2} parent=1 // loop_header
      %s15 = sphi 0, %s19
      %p16 = scmp.ge.s32.totalorder %s15, 4
      %s22 = sphi 0, %s34
      %s23 = sphi 0, %s30
      %s24 = sphi 0, %s22
      %s25 = sphi 0, %s23
      %s26 = sphi 0, %s24
      %s27 = sphi 0, %s25
      %s37 = sphi 0, %s39
      %s40 = sphi 0, %s37
      %s41 = sphi 0, %s40
      %s57 = sphi 0, %s41
      %s63 = sphi 0, %s65
      %s66 = sphi 0, %s63
      %s67 = sphi 0, %s66
      %s83 = sphi 0, %s67
      %s89 = sphi 0, %s91
      %s92 = sphi 0, %s89
      %s93 = sphi 0, %s92
      %s109 = sphi 0, %s93
      %s117 = sphi 0, %s119
      %s120 = sphi 0, %s117
      %s121 = sphi 0, %s120
      %s137 = sphi 0, %s121
    $region4: #{_forward_impl.2} parent=1 // loop_header_branch
      %18 = sbr.rel (%p16) target = $region8
    $region5: #{_forward_impl.2} parent=1 // loop_body
      %s20 = ssub.s32 %s15, 1
      %s21 = ssub.s32 %s15, 2
      %s28 = sadd.s32 1, %s23
      %p29 = scmp.ge.s32.totalorder %s28, 1
      %s30 = scalar_select %p29, 0, %s28
      %s31 = sadd.s32 1, %s22
      %s32 = scalar_select %p29, %s31, %s22
      %p33 = scmp.ge.s32.totalorder %s32, 2
      %s34 = scalar_select %p33, 0, %s32
      %s35 = ssub.s32 %s23, %s30
      %p36 = scmp.eq.s32.totalorder %s35, 0
      %s38 = sadd.s32 %s37, 1
      %s39 = scalar_select %p36, %s37, %s38
      %p42 = pneg %p36
      %p43 = scmp.eq.s32.totalorder %s15, 1
      %p44 = por %p42, %p43
      %p45 = scmp.ne.s32.totalorder %s37, %s40
      %p46 = scmp.eq.s32.totalorder %s15, 0
      %p47 = por %p45, %p46
      %p48 = scmp.ne.s32.totalorder %s37, %s40
      %p49 = scmp.eq.s32.totalorder %s20, 1
      %p50 = por %p48, %p49
      %p51 = scmp.ne.s32.totalorder %s40, %s41
      %p52 = scmp.eq.s32.totalorder %s20, 0
      %p53 = por %p51, %p52
      %p54 = scmp.ne.s32.totalorder %s40, %s41
      %p55 = scmp.eq.s32.totalorder %s21, 1
      %p56 = por %p54, %p55
      %p58 = scmp.ne.s32.totalorder %s41, %s57
      %p59 = scmp.eq.s32.totalorder %s21, 0
      %p60 = por %p58, %p59
      %s61 = ssub.s32 %s22, %s34
      %p62 = scmp.eq.s32.totalorder %s61, 0
      %s64 = sadd.s32 %s63, 1
      %s65 = scalar_select %p62, %s63, %s64
      %p68 = pneg %p62
      %p69 = scmp.eq.s32.totalorder %s15, 1
      %p70 = por %p68, %p69
      %p71 = scmp.ne.s32.totalorder %s63, %s66
      %p72 = scmp.eq.s32.totalorder %s15, 0
      %p73 = por %p71, %p72
      %p74 = scmp.ne.s32.totalorder %s63, %s66
      %p75 = scmp.eq.s32.totalorder %s20, 1
      %p76 = por %p74, %p75
      %p77 = scmp.ne.s32.totalorder %s66, %s67
      %p78 = scmp.eq.s32.totalorder %s20, 0
      %p79 = por %p77, %p78
      %p80 = scmp.ne.s32.totalorder %s66, %s67
      %p81 = scmp.eq.s32.totalorder %s21, 1
      %p82 = por %p80, %p81
      %p84 = scmp.ne.s32.totalorder %s67, %s83
      %p85 = scmp.eq.s32.totalorder %s21, 0
      %p86 = por %p84, %p85
      %s87 = ssub.s32 %s22, %s34
      %p88 = scmp.eq.s32.totalorder %s87, 0
      %s90 = sadd.s32 %s89, 1
      %s91 = scalar_select %p88, %s89, %s90
      %p94 = pneg %p88
      %p95 = scmp.eq.s32.totalorder %s15, 1
      %p96 = por %p94, %p95
      %p97 = scmp.ne.s32.totalorder %s89, %s92
      %p98 = scmp.eq.s32.totalorder %s15, 0
      %p99 = por %p97, %p98
      %p100 = scmp.ne.s32.totalorder %s89, %s92
      %p101 = scmp.eq.s32.totalorder %s20, 1
      %p102 = por %p100, %p101
      %p103 = scmp.ne.s32.totalorder %s92, %s93
      %p104 = scmp.eq.s32.totalorder %s20, 0
      %p105 = por %p103, %p104
      %p106 = scmp.ne.s32.totalorder %s92, %s93
      %p107 = scmp.eq.s32.totalorder %s21, 1
      %p108 = por %p106, %p107
      %p110 = scmp.ne.s32.totalorder %s93, %s109
      %p111 = scmp.eq.s32.totalorder %s21, 0
      %p112 = por %p110, %p111
      %s113 = ssub.s32 %s23, %s30
      %s114 = ssub.s32 %s22, %s34
      %s115 = sor.u32 %s113, %s114
      %p116 = scmp.eq.s32.totalorder %s115, 0
      %s118 = sadd.s32 %s117, 1
      %s119 = scalar_select %p116, %s117, %s118
      %p122 = pneg %p116
      %p123 = scmp.eq.s32.totalorder %s15, 1
      %p124 = por %p122, %p123
      %p125 = scmp.ne.s32.totalorder %s117, %s120
      %p126 = scmp.eq.s32.totalorder %s15, 0
      %p127 = por %p125, %p126
      %p128 = scmp.ne.s32.totalorder %s117, %s120
      %p129 = scmp.eq.s32.totalorder %s20, 1
      %p130 = por %p128, %p129
      %p131 = scmp.ne.s32.totalorder %s120, %s121
      %p132 = scmp.eq.s32.totalorder %s20, 0
      %p133 = por %p131, %p132
      %p134 = scmp.ne.s32.totalorder %s120, %s121
      %p135 = scmp.eq.s32.totalorder %s21, 1
      %p136 = por %p134, %p135
      %p138 = scmp.ne.s32.totalorder %s121, %s137
      %p139 = scmp.eq.s32.totalorder %s21, 0
      %p140 = por %p138, %p139
      %p141 = scmp.le.s32.totalorder 1, %s15
      %p142 = scmp.lt.s32.totalorder %s15, 3
      %p143 = pnand %p141, %p142
      %p144 = pneg %p143
      // Predicated region
      $region9: #{_forward_impl.2} parent=5 // pred_check
        _
      $region10: #{_forward_impl.2} parent=5 // pred_check_branch
        %146 = sbr.rel (%p143) target = $region12
      $region11: #{_forward_impl.2} parent=5 // pred_region
        %s147 = ssub.s32 %s15, 1
        // Predicated region
        $region13: #{_forward_impl.2} parent=11 // pred_check
          %p148 = pneg %p53
        $region14: #{_forward_impl.2} parent=11 // pred_check_branch
          %150 = sbr.rel (%p148) target = $region16
        $region15: #{_forward_impl.2} parent=11 // pred_region
          %p151 = scmp.lt.s32.totalorder %s25, 0
          %s152 = scalar_select %p151, %s25, 0
          %s153 = smul.addr %s152, 8
          %s154 = smul.addr %s153, 4
          %s155 = scalar_lea.vmem %s0, %s154
        $region16: #{_forward_impl.2} parent=11 // pred_fallthru
          _
      $region12: #{_forward_impl.2} parent=5 // pred_fallthru
        _
      %p156 = scmp.lt.s32.totalorder %s15, 2
      // Predicated region
      $region17: #{_forward_impl.2} parent=5 // pred_check
        %p157 = pneg %p156
      $region18: #{_forward_impl.2} parent=5 // pred_check_branch
        %159 = sbr.rel (%p157) target = $region20
      $region19: #{_forward_impl.2} parent=5 // pred_region
        // Predicated region
        $region21: #{_forward_impl.2} parent=19 // pred_check
          %p160 = pneg %p73
        $region22: #{_forward_impl.2} parent=19 // pred_check_branch
          %162 = sbr.rel (%p160) target = $region24
        $region23: #{_forward_impl.2} parent=19 // pred_region
          %s163 = sand.u32 %s63, 1
          %s164 = scalar_lea.sflag [#allocation3], %s163
          %s165 = sand.u32 %s63, 1
          %s166 = smul.addr %s165, 2016
          %s167 = scalar_lea.vmem [#allocation2], %s166
          %s169 = ssub.s32 32256, 32256
          %170 = vsyncadd %s164, %s169
          %s171 = smul.addr %s22, 504
          %s172 = smul.addr %s171, 64
          %s173 = scalar_lea.hbm %s1, %s172
          %s174 = sshll.u32 %s167, 4
          %s175 = int_to_ptr.vmem [resolvable:$true] %s174
          %180 = dma.hbm_to_vmem [thread:$0]  %s173, 32256, %s175, %s164, 256, 256, 16
        $region24: #{_forward_impl.2} parent=19 // pred_fallthru
          _
        // Predicated region
        $region25: #{_forward_impl.2} parent=19 // pred_check
          %p181 = pneg %p99
        $region26: #{_forward_impl.2} parent=19 // pred_check_branch
          %183 = sbr.rel (%p181) target = $region28
        $region27: #{_forward_impl.2} parent=19 // pred_region
          %s184 = sand.u32 %s89, 1
          %s185 = scalar_lea.sflag [#allocation5], %s184
          %s186 = sand.u32 %s89, 1
          %s187 = smul.addr %s186, 4
          %s188 = scalar_lea.vmem [#allocation4], %s187
          %s189 = smul.u32 4, %s22
          %s191 = ssub.s32 64, 64
          %192 = vsyncadd %s185, %s191
          %s193 = smul.addr %s189, 16
          %s194 = scalar_lea.hbm %s2, %s193
          %s196 = sshll.u32 %s188, 4
          %s197 = int_to_ptr.vmem [resolvable:$true] %s196
          %199 = dma.hbm_to_vmem [thread:$0]  %s194, 64, %s197, %s185
        $region28: #{_forward_impl.2} parent=19 // pred_fallthru
          _
      $region20: #{_forward_impl.2} parent=5 // pred_fallthru
        _
      %p200 = scmp.le.s32.totalorder 1, %s15
      %p201 = scmp.lt.s32.totalorder %s15, 3
      %p202 = pnand %p200, %p201
      %p203 = pneg %p202
      // Predicated region
      $region29: #{_forward_impl.2} parent=5 // pred_check
        _
      $region30: #{_forward_impl.2} parent=5 // pred_check_branch
        %205 = sbr.rel (%p202) target = $region32
      $region31: #{_forward_impl.2} parent=5 // pred_region
        %s206 = ssub.s32 %s15, 1
        %s207 = sand.u32 %s66, 1
        %s208 = scalar_lea.sflag [#allocation3], %s207
        %s209 = sand.u32 %s66, 1
        %s210 = smul.addr %s209, 2016
        %s211 = scalar_lea.vmem [#allocation2], %s210
        // Predicated region
        $region33: #{_forward_impl.2} parent=31 // pred_check
          %p212 = pneg %p79
        $region34: #{_forward_impl.2} parent=31 // pred_check_branch
          %214 = sbr.rel (%p212) target = $region36
        $region35: #{_forward_impl.2} parent=31 // pred_region
          %215 = dma.done %s208, 32256
        $region36: #{_forward_impl.2} parent=31 // pred_fallthru
          _
        %s216 = sand.u32 %s92, 1
        %s217 = scalar_lea.sflag [#allocation5], %s216
        %s218 = sand.u32 %s92, 1
        %s219 = smul.addr %s218, 4
        %s220 = scalar_lea.vmem [#allocation4], %s219
        // Predicated region
        $region37: #{_forward_impl.2} parent=31 // pred_check
          %p221 = pneg %p105
        $region38: #{_forward_impl.2} parent=31 // pred_check_branch
          %223 = sbr.rel (%p221) target = $region40
        $region39: #{_forward_impl.2} parent=31 // pred_region
          %224 = dma.done %s217, 64
        $region40: #{_forward_impl.2} parent=31 // pred_fallthru
          _
        %p225 = scmp.lt.s32.totalorder %s25, 0
        %s226 = scalar_select %p225, %s25, 0
        %s227 = smul.addr %s226, 8
        %s228 = smul.addr %s227, 4
        %s229 = scalar_lea.vmem %s0, %s228
        %p230 = pneg %p53
        %p231 = pneg %p50
        %s232 = sand.u32 %s66, 1
        %s233 = scalar_lea.sflag [#allocation3], %s232
        %s234 = sand.u32 %s66, 1
        %s235 = smul.addr %s234, 2016
        %s236 = scalar_lea.vmem [#allocation2], %s235
        %p237 = pneg %p79
        %p238 = pneg %p76
        %s239 = sand.u32 %s92, 1
        %s240 = scalar_lea.sflag [#allocation5], %s239
        %s241 = sand.u32 %s92, 1
        %s242 = smul.addr %s241, 4
        %s243 = scalar_lea.vmem [#allocation4], %s242
        %p244 = pneg %p105
        %p245 = pneg %p102
        %p246 = pneg %p133
        %p247 = pneg %p130
        %s248 = smul.u32 4, %s24
        %p249 = scmp.lt.s32.totalorder %s25, 0
        %s250 = scalar_select %p249, %s25, 0
        %p251 = scmp.lt.s32.totalorder %s248, 7
        %s252 = scalar_select %p251, %s248, 7
        %s253 = smul.addr %s250, 8
        %s254 = sadd.s32 %s252, %s253
        %s255 = smul.addr %s254, 4
        %s256 = scalar_lea.vmem %s3, %s255
        %p257 = scmp.lt.s32.totalorder %s25, 0
        %s258 = scalar_select %p257, %s25, 0
        %s259 = smul.addr %s258, 8
        %s260 = smul.addr %s259, 4
        %s261 = scalar_lea.vmem %s0, %s260
        %s262 = smul.u32 4, %s24
        %s263 = smul.u32 4, %s24
        %p264 = scmp.lt.s32.totalorder %s25, 0
        %s265 = scalar_select %p264, %s25, 0
        %p266 = scmp.lt.s32.totalorder %s263, 7
        %s267 = scalar_select %p266, %s263, 7
        %s268 = smul.addr %s265, 8
        %s269 = sadd.s32 %s267, %s268
        %s270 = smul.addr %s269, 4
        %s271 = scalar_lea.vmem %s3, %s270
        %s272 = smul.u32 4, %s24
        %v274 = vld [vmem:[%s261] sm:$0xff]
        %v275 = vld [vmem:[%s261 + $0x8] sm:$0xff]
        %v276 = vld [vmem:[%s261 + $0x10] sm:$0xff]
        %v277 = vld [vmem:[%s261 + $0x18] sm:$0xff]
        %v278 = vld [vmem:[%s211] sm:$0xff]
        %v279 = vld [vmem:[%s211 + $0x8] sm:$0xff]
        %v280 = vld [vmem:[%s211 + $0x10] sm:$0xff]
        %v281 = vld [vmem:[%s211 + $0x18] sm:$0xff]
        %v282 = vld [vmem:[%s211 + $0x20] sm:$0xff]
        %v283 = vld [vmem:[%s211 + $0x28] sm:$0xff]
        %v284 = vld [vmem:[%s211 + $0x30] sm:$0xff]
        %v285 = vld [vmem:[%s211 + $0x38] sm:$0xff]
        %v286 = vld [vmem:[%s211 + $0x40] sm:$0xff]
        %v287 = vld [vmem:[%s211 + $0x48] sm:$0xff]
        %v288 = vld [vmem:[%s211 + $0x50] sm:$0xff]
        %v289 = vld [vmem:[%s211 + $0x58] sm:$0xff]
        %v290 = vld [vmem:[%s211 + $0x60] sm:$0xff]
        %v291 = vld [vmem:[%s211 + $0x68] sm:$0xff]
        %v292 = vld [vmem:[%s211 + $0x70] sm:$0xff]
        %v293 = vld [vmem:[%s211 + $0x78] sm:$0xff]
        %v294 = vld [vmem:[%s211 + $0x80] sm:$0xff]
        %v295 = vld [vmem:[%s211 + $0x88] sm:$0xff]
        %v296 = vld [vmem:[%s211 + $0x90] sm:$0xff]
        %v297 = vld [vmem:[%s211 + $0x98] sm:$0xff]
        %v298 = vld [vmem:[%s211 + $0xa0] sm:$0xff]
        %v299 = vld [vmem:[%s211 + $0xa8] sm:$0xff]
        %v300 = vld [vmem:[%s211 + $0xb0] sm:$0xff]
        %v301 = vld [vmem:[%s211 + $0xb8] sm:$0xff]
        %v302 = vld [vmem:[%s211 + $0xc0] sm:$0xff]
        %v303 = vld [vmem:[%s211 + $0xc8] sm:$0xff]
        %v304 = vld [vmem:[%s211 + $0xd0] sm:$0xff]
        %v305 = vld [vmem:[%s211 + $0xd8] sm:$0xff]
        %v306 = vld [vmem:[%s211 + $0xe0] sm:$0xff]
        %v307 = vld [vmem:[%s211 + $0xe8] sm:$0xff]
        %v308 = vld [vmem:[%s211 + $0xf0] sm:$0xff]
        %v309 = vld [vmem:[%s211 + $0xf8] sm:$0xff]
        %v310 = vld [vmem:[%s211 + $0x100] sm:$0xff]
        %v311 = vld [vmem:[%s211 + $0x108] sm:$0xff]
        %v312 = vld [vmem:[%s211 + $0x110] sm:$0xff]
        %v313 = vld [vmem:[%s211 + $0x118] sm:$0xff]
        %v314 = vld [vmem:[%s211 + $0x120] sm:$0xff]
        %v315 = vld [vmem:[%s211 + $0x128] sm:$0xff]
        %v316 = vld [vmem:[%s211 + $0x130] sm:$0xff]
        %v317 = vld [vmem:[%s211 + $0x138] sm:$0xff]
        %v318 = vld [vmem:[%s211 + $0x140] sm:$0xff]
        %v319 = vld [vmem:[%s211 + $0x148] sm:$0xff]
        %v320 = vld [vmem:[%s211 + $0x150] sm:$0xff]
        %v321 = vld [vmem:[%s211 + $0x158] sm:$0xff]
        %v322 = vld [vmem:[%s211 + $0x160] sm:$0xff]
        %v323 = vld [vmem:[%s211 + $0x168] sm:$0xff]
        %v324 = vld [vmem:[%s211 + $0x170] sm:$0xff]
        %v325 = vld [vmem:[%s211 + $0x178] sm:$0xff]
        %v326 = vld [vmem:[%s211 + $0x180] sm:$0xff]
        %v327 = vld [vmem:[%s211 + $0x188] sm:$0xff]
        %v328 = vld [vmem:[%s211 + $0x190] sm:$0xff]
        %v329 = vld [vmem:[%s211 + $0x198] sm:$0xff]
        %v330 = vld [vmem:[%s211 + $0x1a0] sm:$0xff]
        %v331 = vld [vmem:[%s211 + $0x1a8] sm:$0xff]
        %v332 = vld [vmem:[%s211 + $0x1b0] sm:$0xff]
        %v333 = vld [vmem:[%s211 + $0x1b8] sm:$0xff]
        %v334 = vld [vmem:[%s211 + $0x1c0] sm:$0xff]
        %v335 = vld [vmem:[%s211 + $0x1c8] sm:$0xff]
        %v336 = vld [vmem:[%s211 + $0x1d0] sm:$0xff]
        %v337 = vld [vmem:[%s211 + $0x1d8] sm:$0xff]
        %v338 = vld [vmem:[%s211 + $0x1e0] sm:$0xff]
        %v339 = vld [vmem:[%s211 + $0x1e8] sm:$0xff]
        %v340 = vld [vmem:[%s211 + $0x1f0] sm:$0xff]
        %v341 = vld [vmem:[%s211 + $0x1f8] sm:$0xff]
        %v342 = vld [vmem:[%s211 + $0x200] sm:$0xff]
        %v343 = vld [vmem:[%s211 + $0x208] sm:$0xff]
        %v344 = vld [vmem:[%s211 + $0x210] sm:$0xff]
        %v345 = vld [vmem:[%s211 + $0x218] sm:$0xff]
        %v346 = vld [vmem:[%s211 + $0x220] sm:$0xff]
        %v347 = vld [vmem:[%s211 + $0x228] sm:$0xff]
        %v348 = vld [vmem:[%s211 + $0x230] sm:$0xff]
        %v349 = vld [vmem:[%s211 + $0x238] sm:$0xff]
        %v350 = vld [vmem:[%s211 + $0x240] sm:$0xff]
        %v351 = vld [vmem:[%s211 + $0x248] sm:$0xff]
        %v352 = vld [vmem:[%s211 + $0x250] sm:$0xff]
        %v353 = vld [vmem:[%s211 + $0x258] sm:$0xff]
        %v354 = vld [vmem:[%s211 + $0x260] sm:$0xff]
        %v355 = vld [vmem:[%s211 + $0x268] sm:$0xff]
        %v356 = vld [vmem:[%s211 + $0x270] sm:$0xff]
        %v357 = vld [vmem:[%s211 + $0x278] sm:$0xff]
        %v358 = vld [vmem:[%s211 + $0x280] sm:$0xff]
        %v359 = vld [vmem:[%s211 + $0x288] sm:$0xff]
        %v360 = vld [vmem:[%s211 + $0x290] sm:$0xff]
        %v361 = vld [vmem:[%s211 + $0x298] sm:$0xff]
        %v362 = vld [vmem:[%s211 + $0x2a0] sm:$0xff]
        %v363 = vld [vmem:[%s211 + $0x2a8] sm:$0xff]
        %v364 = vld [vmem:[%s211 + $0x2b0] sm:$0xff]
        %v365 = vld [vmem:[%s211 + $0x2b8] sm:$0xff]
        %v366 = vld [vmem:[%s211 + $0x2c0] sm:$0xff]
        %v367 = vld [vmem:[%s211 + $0x2c8] sm:$0xff]
        %v368 = vld [vmem:[%s211 + $0x2d0] sm:$0xff]
        %v369 = vld [vmem:[%s211 + $0x2d8] sm:$0xff]
        %v370 = vld [vmem:[%s211 + $0x2e0] sm:$0xff]
        %v371 = vld [vmem:[%s211 + $0x2e8] sm:$0xff]
        %v372 = vld [vmem:[%s211 + $0x2f0] sm:$0xff]
        %v373 = vld [vmem:[%s211 + $0x2f8] sm:$0xff]
        %v374 = vld [vmem:[%s211 + $0x300] sm:$0xff]
        %v375 = vld [vmem:[%s211 + $0x308] sm:$0xff]
        %v376 = vld [vmem:[%s211 + $0x310] sm:$0xff]
        %v377 = vld [vmem:[%s211 + $0x318] sm:$0xff]
        %v378 = vld [vmem:[%s211 + $0x320] sm:$0xff]
        %v379 = vld [vmem:[%s211 + $0x328] sm:$0xff]
        %v380 = vld [vmem:[%s211 + $0x330] sm:$0xff]
        %v381 = vld [vmem:[%s211 + $0x338] sm:$0xff]
        %v382 = vld [vmem:[%s211 + $0x340] sm:$0xff]
        %v383 = vld [vmem:[%s211 + $0x348] sm:$0xff]
        %v384 = vld [vmem:[%s211 + $0x350] sm:$0xff]
        %v385 = vld [vmem:[%s211 + $0x358] sm:$0xff]
        %v386 = vld [vmem:[%s211 + $0x360] sm:$0xff]
        %v387 = vld [vmem:[%s211 + $0x368] sm:$0xff]
        %v388 = vld [vmem:[%s211 + $0x370] sm:$0xff]
        %v389 = vld [vmem:[%s211 + $0x378] sm:$0xff]
        %v390 = vld [vmem:[%s211 + $0x380] sm:$0xff]
        %v391 = vld [vmem:[%s211 + $0x388] sm:$0xff]
        %v392 = vld [vmem:[%s211 + $0x390] sm:$0xff]
        %v393 = vld [vmem:[%s211 + $0x398] sm:$0xff]
        %v394 = vld [vmem:[%s211 + $0x3a0] sm:$0xff]
        %v395 = vld [vmem:[%s211 + $0x3a8] sm:$0xff]
        %v396 = vld [vmem:[%s211 + $0x3b0] sm:$0xff]
        %v397 = vld [vmem:[%s211 + $0x3b8] sm:$0xff]
        %v398 = vld [vmem:[%s211 + $0x3c0] sm:$0xff]
        %v399 = vld [vmem:[%s211 + $0x3c8] sm:$0xff]
        %v400 = vld [vmem:[%s211 + $0x3d0] sm:$0xff]
        %v401 = vld [vmem:[%s211 + $0x3d8] sm:$0xff]
        %v402 = vld [vmem:[%s211 + $0x3e0] sm:$0xff]
        %v403 = vld [vmem:[%s211 + $0x3e8] sm:$0xff]
        %v404 = vld [vmem:[%s211 + $0x3f0] sm:$0xff]
        %v405 = vld [vmem:[%s211 + $0x3f8] sm:$0xff]
        %v406 = vld [vmem:[%s211 + $0x400] sm:$0xff]
        %v407 = vld [vmem:[%s211 + $0x408] sm:$0xff]
        %v408 = vld [vmem:[%s211 + $0x410] sm:$0xff]
        %v409 = vld [vmem:[%s211 + $0x418] sm:$0xff]
        %v410 = vld [vmem:[%s211 + $0x420] sm:$0xff]
        %v411 = vld [vmem:[%s211 + $0x428] sm:$0xff]
        %v412 = vld [vmem:[%s211 + $0x430] sm:$0xff]
        %v413 = vld [vmem:[%s211 + $0x438] sm:$0xff]
        %v414 = vld [vmem:[%s211 + $0x440] sm:$0xff]
        %v415 = vld [vmem:[%s211 + $0x448] sm:$0xff]
        %v416 = vld [vmem:[%s211 + $0x450] sm:$0xff]
        %v417 = vld [vmem:[%s211 + $0x458] sm:$0xff]
        %v418 = vld [vmem:[%s211 + $0x460] sm:$0xff]
        %v419 = vld [vmem:[%s211 + $0x468] sm:$0xff]
        %v420 = vld [vmem:[%s211 + $0x470] sm:$0xff]
        %v421 = vld [vmem:[%s211 + $0x478] sm:$0xff]
        %v422 = vld [vmem:[%s211 + $0x480] sm:$0xff]
        %v423 = vld [vmem:[%s211 + $0x488] sm:$0xff]
        %v424 = vld [vmem:[%s211 + $0x490] sm:$0xff]
        %v425 = vld [vmem:[%s211 + $0x498] sm:$0xff]
        %v426 = vld [vmem:[%s211 + $0x4a0] sm:$0xff]
        %v427 = vld [vmem:[%s211 + $0x4a8] sm:$0xff]
        %v428 = vld [vmem:[%s211 + $0x4b0] sm:$0xff]
        %v429 = vld [vmem:[%s211 + $0x4b8] sm:$0xff]
        %v430 = vld [vmem:[%s211 + $0x4c0] sm:$0xff]
        %v431 = vld [vmem:[%s211 + $0x4c8] sm:$0xff]
        %v432 = vld [vmem:[%s211 + $0x4d0] sm:$0xff]
        %v433 = vld [vmem:[%s211 + $0x4d8] sm:$0xff]
        %v434 = vld [vmem:[%s211 + $0x4e0] sm:$0xff]
        %v435 = vld [vmem:[%s211 + $0x4e8] sm:$0xff]
        %v436 = vld [vmem:[%s211 + $0x4f0] sm:$0xff]
        %v437 = vld [vmem:[%s211 + $0x4f8] sm:$0xff]
        %v438 = vld [vmem:[%s211 + $0x500] sm:$0xff]
        %v439 = vld [vmem:[%s211 + $0x508] sm:$0xff]
        %v440 = vld [vmem:[%s211 + $0x510] sm:$0xff]
        %v441 = vld [vmem:[%s211 + $0x518] sm:$0xff]
        %v442 = vld [vmem:[%s211 + $0x520] sm:$0xff]
        %v443 = vld [vmem:[%s211 + $0x528] sm:$0xff]
        %v444 = vld [vmem:[%s211 + $0x530] sm:$0xff]
        %v445 = vld [vmem:[%s211 + $0x538] sm:$0xff]
        %v446 = vld [vmem:[%s211 + $0x540] sm:$0xff]
        %v447 = vld [vmem:[%s211 + $0x548] sm:$0xff]
        %v448 = vld [vmem:[%s211 + $0x550] sm:$0xff]
        %v449 = vld [vmem:[%s211 + $0x558] sm:$0xff]
        %v450 = vld [vmem:[%s211 + $0x560] sm:$0xff]
        %v451 = vld [vmem:[%s211 + $0x568] sm:$0xff]
        %v452 = vld [vmem:[%s211 + $0x570] sm:$0xff]
        %v453 = vld [vmem:[%s211 + $0x578] sm:$0xff]
        %v454 = vld [vmem:[%s211 + $0x580] sm:$0xff]
        %v455 = vld [vmem:[%s211 + $0x588] sm:$0xff]
        %v456 = vld [vmem:[%s211 + $0x590] sm:$0xff]
        %v457 = vld [vmem:[%s211 + $0x598] sm:$0xff]
        %v458 = vld [vmem:[%s211 + $0x5a0] sm:$0xff]
        %v459 = vld [vmem:[%s211 + $0x5a8] sm:$0xff]
        %v460 = vld [vmem:[%s211 + $0x5b0] sm:$0xff]
        %v461 = vld [vmem:[%s211 + $0x5b8] sm:$0xff]
        %v462 = vld [vmem:[%s211 + $0x5c0] sm:$0xff]
        %v463 = vld [vmem:[%s211 + $0x5c8] sm:$0xff]
        %v464 = vld [vmem:[%s211 + $0x5d0] sm:$0xff]
        %v465 = vld [vmem:[%s211 + $0x5d8] sm:$0xff]
        %v466 = vld [vmem:[%s211 + $0x5e0] sm:$0xff]
        %v467 = vld [vmem:[%s211 + $0x5e8] sm:$0xff]
        %v468 = vld [vmem:[%s211 + $0x5f0] sm:$0xff]
        %v469 = vld [vmem:[%s211 + $0x5f8] sm:$0xff]
        %v470 = vld [vmem:[%s211 + $0x600] sm:$0xff]
        %v471 = vld [vmem:[%s211 + $0x608] sm:$0xff]
        %v472 = vld [vmem:[%s211 + $0x610] sm:$0xff]
        %v473 = vld [vmem:[%s211 + $0x618] sm:$0xff]
        %v474 = vld [vmem:[%s211 + $0x620] sm:$0xff]
        %v475 = vld [vmem:[%s211 + $0x628] sm:$0xff]
        %v476 = vld [vmem:[%s211 + $0x630] sm:$0xff]
        %v477 = vld [vmem:[%s211 + $0x638] sm:$0xff]
        %v478 = vld [vmem:[%s211 + $0x640] sm:$0xff]
        %v479 = vld [vmem:[%s211 + $0x648] sm:$0xff]
        %v480 = vld [vmem:[%s211 + $0x650] sm:$0xff]
        %v481 = vld [vmem:[%s211 + $0x658] sm:$0xff]
        %v482 = vld [vmem:[%s211 + $0x660] sm:$0xff]
        %v483 = vld [vmem:[%s211 + $0x668] sm:$0xff]
        %v484 = vld [vmem:[%s211 + $0x670] sm:$0xff]
        %v485 = vld [vmem:[%s211 + $0x678] sm:$0xff]
        %v486 = vld [vmem:[%s211 + $0x680] sm:$0xff]
        %v487 = vld [vmem:[%s211 + $0x688] sm:$0xff]
        %v488 = vld [vmem:[%s211 + $0x690] sm:$0xff]
        %v489 = vld [vmem:[%s211 + $0x698] sm:$0xff]
        %v490 = vld [vmem:[%s211 + $0x6a0] sm:$0xff]
        %v491 = vld [vmem:[%s211 + $0x6a8] sm:$0xff]
        %v492 = vld [vmem:[%s211 + $0x6b0] sm:$0xff]
        %v493 = vld [vmem:[%s211 + $0x6b8] sm:$0xff]
        %v494 = vld [vmem:[%s211 + $0x6c0] sm:$0xff]
        %v495 = vld [vmem:[%s211 + $0x6c8] sm:$0xff]
        %v496 = vld [vmem:[%s211 + $0x6d0] sm:$0xff]
        %v497 = vld [vmem:[%s211 + $0x6d8] sm:$0xff]
        %v498 = vld [vmem:[%s211 + $0x6e0] sm:$0xff]
        %v499 = vld [vmem:[%s211 + $0x6e8] sm:$0xff]
        %v500 = vld [vmem:[%s211 + $0x6f0] sm:$0xff]
        %v501 = vld [vmem:[%s211 + $0x6f8] sm:$0xff]
        %v502 = vld [vmem:[%s211 + $0x700] sm:$0xff]
        %v503 = vld [vmem:[%s211 + $0x708] sm:$0xff]
        %v504 = vld [vmem:[%s211 + $0x710] sm:$0xff]
        %v505 = vld [vmem:[%s211 + $0x718] sm:$0xff]
        %v506 = vld [vmem:[%s211 + $0x720] sm:$0xff]
        %v507 = vld [vmem:[%s211 + $0x728] sm:$0xff]
        %v508 = vld [vmem:[%s211 + $0x730] sm:$0xff]
        %v509 = vld [vmem:[%s211 + $0x738] sm:$0xff]
        %v510 = vld [vmem:[%s211 + $0x740] sm:$0xff]
        %v511 = vld [vmem:[%s211 + $0x748] sm:$0xff]
        %v512 = vld [vmem:[%s211 + $0x750] sm:$0xff]
        %v513 = vld [vmem:[%s211 + $0x758] sm:$0xff]
        %v514 = vld [vmem:[%s211 + $0x760] sm:$0xff]
        %v515 = vld [vmem:[%s211 + $0x768] sm:$0xff]
        %v516 = vld [vmem:[%s211 + $0x770] sm:$0xff]
        %v517 = vld [vmem:[%s211 + $0x778] sm:$0xff]
        %v518 = vld [vmem:[%s211 + $0x780] sm:$0xff]
        %v519 = vld [vmem:[%s211 + $0x788] sm:$0xff]
        %v520 = vld [vmem:[%s211 + $0x790] sm:$0xff]
        %v521 = vld [vmem:[%s211 + $0x798] sm:$0xff]
        %v522 = vld [vmem:[%s211 + $0x7a0] sm:$0xff]
        %v523 = vld [vmem:[%s211 + $0x7a8] sm:$0xff]
        %v524 = vld [vmem:[%s211 + $0x7b0] sm:$0xff]
        %v525 = vld [vmem:[%s211 + $0x7b8] sm:$0xff]
        %v526 = vld [vmem:[%s211 + $0x7c0] sm:$0xff]
        %v527 = vld [vmem:[%s211 + $0x7c8] sm:$0xff]
        %v528 = vld [vmem:[%s211 + $0x7d0] sm:$0xff]
        %v529 = vld [vmem:[%s211 + $0x7d8] sm:$0xff]
        %v530 = vld [vmem:[%s220] sm:$0xf]
        %v532 = vlaneseq
        %v533 = vshrl.u32 %v532, 7
        %v534 = vsub.s32 0, %v533
        %v535 = vrot.slane %v530, %v534
        %v536 = vlaneseq
        %v537 = vshrl.u32 %v536, 7
        %v538 = vsub.s32 1, %v537
        %v539 = vrot.slane %v530, %v538
        %v540 = vlaneseq
        %v541 = vshrl.u32 %v540, 7
        %v542 = vsub.s32 2, %v541
        %v543 = vrot.slane %v530, %v542
        %v544 = vlaneseq
        %v545 = vshrl.u32 %v544, 7
        %v546 = vsub.s32 3, %v545
        %v547 = vrot.slane %v530, %v546
        %v556 = vunpack.c.l.b16 %v274
        %v557 = vunpack.c.h.b16 %v274
        %v558 = vunpack.c.l.b16 %v275
        %v559 = vunpack.c.h.b16 %v275
        %v560 = vunpack.c.l.b16 %v276
        %v561 = vunpack.c.h.b16 %v276
        %v562 = vunpack.c.l.b16 %v277
        %v563 = vunpack.c.h.b16 %v277
        %v564 = vpack.c.b16 %v556, %v556
        %v565 = vpack.c.b16 %v557, %v557
        %v566 = vpack.c.b16 %v558, %v558
        %v567 = vpack.c.b16 %v559, %v559
        %v568 = vpack.c.b16 %v560, %v560
        %v569 = vpack.c.b16 %v561, %v561
        %v570 = vpack.c.b16 %v562, %v562
        %v571 = vpack.c.b16 %v563, %v563
        %v831 = vunpack.c.l.b16 %v278
        %v832 = vunpack.c.h.b16 %v278
        %v833 = vunpack.c.l.b16 %v279
        %v834 = vunpack.c.h.b16 %v279
        %v835 = vunpack.c.l.b16 %v280
        %v836 = vunpack.c.h.b16 %v280
        %v837 = vunpack.c.l.b16 %v281
        %v838 = vunpack.c.h.b16 %v281
        %v839 = vunpack.c.l.b16 %v282
        %v840 = vunpack.c.h.b16 %v282
        %v841 = vunpack.c.l.b16 %v283
        %v842 = vunpack.c.h.b16 %v283
        %v843 = vunpack.c.l.b16 %v284
        %v844 = vunpack.c.h.b16 %v284
        %v845 = vunpack.c.l.b16 %v285
        %v846 = vunpack.c.h.b16 %v285
        %v847 = vunpack.c.l.b16 %v286
        %v848 = vunpack.c.h.b16 %v286
        %v849 = vunpack.c.l.b16 %v287
        %v850 = vunpack.c.h.b16 %v287
        %v851 = vunpack.c.l.b16 %v288
        %v852 = vunpack.c.h.b16 %v288
        %v853 = vunpack.c.l.b16 %v289
        %v854 = vunpack.c.h.b16 %v289
        %v855 = vunpack.c.l.b16 %v290
        %v856 = vunpack.c.h.b16 %v290
        %v857 = vunpack.c.l.b16 %v291
        %v858 = vunpack.c.h.b16 %v291
        %v859 = vunpack.c.l.b16 %v292
        %v860 = vunpack.c.h.b16 %v292
        %v861 = vunpack.c.l.b16 %v293
        %v862 = vunpack.c.h.b16 %v293
        %v863 = vunpack.c.l.b16 %v294
        %v864 = vunpack.c.h.b16 %v294
        %v865 = vunpack.c.l.b16 %v295
        %v866 = vunpack.c.h.b16 %v295
        %v867 = vunpack.c.l.b16 %v296
        %v868 = vunpack.c.h.b16 %v296
        %v869 = vunpack.c.l.b16 %v297
        %v870 = vunpack.c.h.b16 %v297
        %v871 = vunpack.c.l.b16 %v298
        %v872 = vunpack.c.h.b16 %v298
        %v873 = vunpack.c.l.b16 %v299
        %v874 = vunpack.c.h.b16 %v299
        %v875 = vunpack.c.l.b16 %v300
        %v876 = vunpack.c.h.b16 %v300
        %v877 = vunpack.c.l.b16 %v301
        %v878 = vunpack.c.h.b16 %v301
        %v879 = vunpack.c.l.b16 %v302
        %v880 = vunpack.c.h.b16 %v302
        %v881 = vunpack.c.l.b16 %v303
        %v882 = vunpack.c.h.b16 %v303
        %v883 = vunpack.c.l.b16 %v304
        %v884 = vunpack.c.h.b16 %v304
        %v885 = vunpack.c.l.b16 %v305
        %v886 = vunpack.c.h.b16 %v305
        %v887 = vunpack.c.l.b16 %v306
        %v888 = vunpack.c.h.b16 %v306
        %v889 = vunpack.c.l.b16 %v307
        %v890 = vunpack.c.h.b16 %v307
        %v891 = vunpack.c.l.b16 %v308
        %v892 = vunpack.c.h.b16 %v308
        %v893 = vunpack.c.l.b16 %v309
        %v894 = vunpack.c.h.b16 %v309
        %v895 = vunpack.c.l.b16 %v310
        %v896 = vunpack.c.h.b16 %v310
        %v897 = vunpack.c.l.b16 %v311
        %v898 = vunpack.c.h.b16 %v311
        %v899 = vunpack.c.l.b16 %v312
        %v900 = vunpack.c.h.b16 %v312
        %v901 = vunpack.c.l.b16 %v313
        %v902 = vunpack.c.h.b16 %v313
        %v903 = vunpack.c.l.b16 %v314
        %v904 = vunpack.c.h.b16 %v314
        %v905 = vunpack.c.l.b16 %v315
        %v906 = vunpack.c.h.b16 %v315
        %v907 = vunpack.c.l.b16 %v316
        %v908 = vunpack.c.h.b16 %v316
        %v909 = vunpack.c.l.b16 %v317
        %v910 = vunpack.c.h.b16 %v317
        %v911 = vunpack.c.l.b16 %v318
        %v912 = vunpack.c.h.b16 %v318
        %v913 = vunpack.c.l.b16 %v319
        %v914 = vunpack.c.h.b16 %v319
        %v915 = vunpack.c.l.b16 %v320
        %v916 = vunpack.c.h.b16 %v320
        %v917 = vunpack.c.l.b16 %v321
        %v918 = vunpack.c.h.b16 %v321
        %v919 = vunpack.c.l.b16 %v322
        %v920 = vunpack.c.h.b16 %v322
        %v921 = vunpack.c.l.b16 %v323
        %v922 = vunpack.c.h.b16 %v323
        %v923 = vunpack.c.l.b16 %v324
        %v924 = vunpack.c.h.b16 %v324
        %v925 = vunpack.c.l.b16 %v325
        %v926 = vunpack.c.h.b16 %v325
        %v927 = vunpack.c.l.b16 %v326
        %v928 = vunpack.c.h.b16 %v326
        %v929 = vunpack.c.l.b16 %v327
        %v930 = vunpack.c.h.b16 %v327
        %v931 = vunpack.c.l.b16 %v328
        %v932 = vunpack.c.h.b16 %v328
        %v933 = vunpack.c.l.b16 %v329
        %v934 = vunpack.c.h.b16 %v329
        %v935 = vunpack.c.l.b16 %v330
        %v936 = vunpack.c.h.b16 %v330
        %v937 = vunpack.c.l.b16 %v331
        %v938 = vunpack.c.h.b16 %v331
        %v939 = vunpack.c.l.b16 %v332
        %v940 = vunpack.c.h.b16 %v332
        %v941 = vunpack.c.l.b16 %v333
        %v942 = vunpack.c.h.b16 %v333
        %v943 = vunpack.c.l.b16 %v334
        %v944 = vunpack.c.h.b16 %v334
        %v945 = vunpack.c.l.b16 %v335
        %v946 = vunpack.c.h.b16 %v335
        %v947 = vunpack.c.l.b16 %v336
        %v948 = vunpack.c.h.b16 %v336
        %v949 = vunpack.c.l.b16 %v337
        %v950 = vunpack.c.h.b16 %v337
        %v951 = vunpack.c.l.b16 %v338
        %v952 = vunpack.c.h.b16 %v338
        %v953 = vunpack.c.l.b16 %v339
        %v954 = vunpack.c.h.b16 %v339
        %v955 = vunpack.c.l.b16 %v340
        %v956 = vunpack.c.h.b16 %v340
        %v957 = vunpack.c.l.b16 %v341
        %v958 = vunpack.c.h.b16 %v341
        %v959 = vunpack.c.l.b16 %v342
        %v960 = vunpack.c.h.b16 %v342
        %v961 = vunpack.c.l.b16 %v343
        %v962 = vunpack.c.h.b16 %v343
        %v963 = vunpack.c.l.b16 %v344
        %v964 = vunpack.c.h.b16 %v344
        %v965 = vunpack.c.l.b16 %v345
        %v966 = vunpack.c.h.b16 %v345
        %v967 = vunpack.c.l.b16 %v346
        %v968 = vunpack.c.h.b16 %v346
        %v969 = vunpack.c.l.b16 %v347
        %v970 = vunpack.c.h.b16 %v347
        %v971 = vunpack.c.l.b16 %v348
        %v972 = vunpack.c.h.b16 %v348
        %v973 = vunpack.c.l.b16 %v349
        %v974 = vunpack.c.h.b16 %v349
        %v975 = vunpack.c.l.b16 %v350
        %v976 = vunpack.c.h.b16 %v350
        %v977 = vunpack.c.l.b16 %v351
        %v978 = vunpack.c.h.b16 %v351
        %v979 = vunpack.c.l.b16 %v352
        %v980 = vunpack.c.h.b16 %v352
        %v981 = vunpack.c.l.b16 %v353
        %v982 = vunpack.c.h.b16 %v353
        %v983 = vunpack.c.l.b16 %v354
        %v984 = vunpack.c.h.b16 %v354
        %v985 = vunpack.c.l.b16 %v355
        %v986 = vunpack.c.h.b16 %v355
        %v987 = vunpack.c.l.b16 %v356
        %v988 = vunpack.c.h.b16 %v356
        %v989 = vunpack.c.l.b16 %v357
        %v990 = vunpack.c.h.b16 %v357
        %v991 = vunpack.c.l.b16 %v358
        %v992 = vunpack.c.h.b16 %v358
        %v993 = vunpack.c.l.b16 %v359
        %v994 = vunpack.c.h.b16 %v359
        %v995 = vunpack.c.l.b16 %v360
        %v996 = vunpack.c.h.b16 %v360
        %v997 = vunpack.c.l.b16 %v361
        %v998 = vunpack.c.h.b16 %v361
        %v999 = vunpack.c.l.b16 %v362
        %v1000 = vunpack.c.h.b16 %v362
        %v1001 = vunpack.c.l.b16 %v363
        %v1002 = vunpack.c.h.b16 %v363
        %v1003 = vunpack.c.l.b16 %v364
        %v1004 = vunpack.c.h.b16 %v364
        %v1005 = vunpack.c.l.b16 %v365
        %v1006 = vunpack.c.h.b16 %v365
        %v1007 = vunpack.c.l.b16 %v366
        %v1008 = vunpack.c.h.b16 %v366
        %v1009 = vunpack.c.l.b16 %v367
        %v1010 = vunpack.c.h.b16 %v367
        %v1011 = vunpack.c.l.b16 %v368
        %v1012 = vunpack.c.h.b16 %v368
        %v1013 = vunpack.c.l.b16 %v369
        %v1014 = vunpack.c.h.b16 %v369
        %v1015 = vunpack.c.l.b16 %v370
        %v1016 = vunpack.c.h.b16 %v370
        %v1017 = vunpack.c.l.b16 %v371
        %v1018 = vunpack.c.h.b16 %v371
        %v1019 = vunpack.c.l.b16 %v372
        %v1020 = vunpack.c.h.b16 %v372
        %v1021 = vunpack.c.l.b16 %v373
        %v1022 = vunpack.c.h.b16 %v373
        %v1023 = vunpack.c.l.b16 %v374
        %v1024 = vunpack.c.h.b16 %v374
        %v1025 = vunpack.c.l.b16 %v375
        %v1026 = vunpack.c.h.b16 %v375
        %v1027 = vunpack.c.l.b16 %v376
        %v1028 = vunpack.c.h.b16 %v376
        %v1029 = vunpack.c.l.b16 %v377
        %v1030 = vunpack.c.h.b16 %v377
        %v1031 = vunpack.c.l.b16 %v378
        %v1032 = vunpack.c.h.b16 %v378
        %v1033 = vunpack.c.l.b16 %v379
        %v1034 = vunpack.c.h.b16 %v379
        %v1035 = vunpack.c.l.b16 %v380
        %v1036 = vunpack.c.h.b16 %v380
        %v1037 = vunpack.c.l.b16 %v381
        %v1038 = vunpack.c.h.b16 %v381
        %v1039 = vunpack.c.l.b16 %v382
        %v1040 = vunpack.c.h.b16 %v382
        %v1041 = vunpack.c.l.b16 %v383
        %v1042 = vunpack.c.h.b16 %v383
        %v1043 = vunpack.c.l.b16 %v384
        %v1044 = vunpack.c.h.b16 %v384
        %v1045 = vunpack.c.l.b16 %v385
        %v1046 = vunpack.c.h.b16 %v385
        %v1047 = vunpack.c.l.b16 %v386
        %v1048 = vunpack.c.h.b16 %v386
        %v1049 = vunpack.c.l.b16 %v387
        %v1050 = vunpack.c.h.b16 %v387
        %v1051 = vunpack.c.l.b16 %v388
        %v1052 = vunpack.c.h.b16 %v388
        %v1053 = vunpack.c.l.b16 %v389
        %v1054 = vunpack.c.h.b16 %v389
        %v1055 = vunpack.c.l.b16 %v390
        %v1056 = vunpack.c.h.b16 %v390
        %v1057 = vunpack.c.l.b16 %v391
        %v1058 = vunpack.c.h.b16 %v391
        %v1059 = vunpack.c.l.b16 %v392
        %v1060 = vunpack.c.h.b16 %v392
        %v1061 = vunpack.c.l.b16 %v393
        %v1062 = vunpack.c.h.b16 %v393
        %v1063 = vunpack.c.l.b16 %v394
        %v1064 = vunpack.c.h.b16 %v394
        %v1065 = vunpack.c.l.b16 %v395
        %v1066 = vunpack.c.h.b16 %v395
        %v1067 = vunpack.c.l.b16 %v396
        %v1068 = vunpack.c.h.b16 %v396
        %v1069 = vunpack.c.l.b16 %v397
        %v1070 = vunpack.c.h.b16 %v397
        %v1071 = vunpack.c.l.b16 %v398
        %v1072 = vunpack.c.h.b16 %v398
        %v1073 = vunpack.c.l.b16 %v399
        %v1074 = vunpack.c.h.b16 %v399
        %v1075 = vunpack.c.l.b16 %v400
        %v1076 = vunpack.c.h.b16 %v400
        %v1077 = vunpack.c.l.b16 %v401
        %v1078 = vunpack.c.h.b16 %v401
        %v1079 = vunpack.c.l.b16 %v402
        %v1080 = vunpack.c.h.b16 %v402
        %v1081 = vunpack.c.l.b16 %v403
        %v1082 = vunpack.c.h.b16 %v403
        %v1083 = vunpack.c.l.b16 %v404
        %v1084 = vunpack.c.h.b16 %v404
        %v1085 = vunpack.c.l.b16 %v405
        %v1086 = vunpack.c.h.b16 %v405
        %v1087 = vunpack.c.l.b16 %v406
        %v1088 = vunpack.c.h.b16 %v406
        %v1089 = vunpack.c.l.b16 %v407
        %v1090 = vunpack.c.h.b16 %v407
        %v1091 = vunpack.c.l.b16 %v408
        %v1092 = vunpack.c.h.b16 %v408
        %v1093 = vunpack.c.l.b16 %v409
        %v1094 = vunpack.c.h.b16 %v409
        %v1095 = vunpack.c.l.b16 %v410
        %v1096 = vunpack.c.h.b16 %v410
        %v1097 = vunpack.c.l.b16 %v411
        %v1098 = vunpack.c.h.b16 %v411
        %v1099 = vunpack.c.l.b16 %v412
        %v1100 = vunpack.c.h.b16 %v412
        %v1101 = vunpack.c.l.b16 %v413
        %v1102 = vunpack.c.h.b16 %v413
        %v1103 = vunpack.c.l.b16 %v414
        %v1104 = vunpack.c.h.b16 %v414
        %v1105 = vunpack.c.l.b16 %v415
        %v1106 = vunpack.c.h.b16 %v415
        %v1107 = vunpack.c.l.b16 %v416
        %v1108 = vunpack.c.h.b16 %v416
        %v1109 = vunpack.c.l.b16 %v417
        %v1110 = vunpack.c.h.b16 %v417
        %v1111 = vunpack.c.l.b16 %v418
        %v1112 = vunpack.c.h.b16 %v418
        %v1113 = vunpack.c.l.b16 %v419
        %v1114 = vunpack.c.h.b16 %v419
        %v1115 = vunpack.c.l.b16 %v420
        %v1116 = vunpack.c.h.b16 %v420
        %v1117 = vunpack.c.l.b16 %v421
        %v1118 = vunpack.c.h.b16 %v421
        %v1119 = vunpack.c.l.b16 %v422
        %v1120 = vunpack.c.h.b16 %v422
        %v1121 = vunpack.c.l.b16 %v423
        %v1122 = vunpack.c.h.b16 %v423
        %v1123 = vunpack.c.l.b16 %v424
        %v1124 = vunpack.c.h.b16 %v424
        %v1125 = vunpack.c.l.b16 %v425
        %v1126 = vunpack.c.h.b16 %v425
        %v1127 = vunpack.c.l.b16 %v426
        %v1128 = vunpack.c.h.b16 %v426
        %v1129 = vunpack.c.l.b16 %v427
        %v1130 = vunpack.c.h.b16 %v427
        %v1131 = vunpack.c.l.b16 %v428
        %v1132 = vunpack.c.h.b16 %v428
        %v1133 = vunpack.c.l.b16 %v429
        %v1134 = vunpack.c.h.b16 %v429
        %v1135 = vunpack.c.l.b16 %v430
        %v1136 = vunpack.c.h.b16 %v430
        %v1137 = vunpack.c.l.b16 %v431
        %v1138 = vunpack.c.h.b16 %v431
        %v1139 = vunpack.c.l.b16 %v432
        %v1140 = vunpack.c.h.b16 %v432
        %v1141 = vunpack.c.l.b16 %v433
        %v1142 = vunpack.c.h.b16 %v433
        %v1143 = vunpack.c.l.b16 %v434
        %v1144 = vunpack.c.h.b16 %v434
        %v1145 = vunpack.c.l.b16 %v435
        %v1146 = vunpack.c.h.b16 %v435
        %v1147 = vunpack.c.l.b16 %v436
        %v1148 = vunpack.c.h.b16 %v436
        %v1149 = vunpack.c.l.b16 %v437
        %v1150 = vunpack.c.h.b16 %v437
        %v1151 = vunpack.c.l.b16 %v438
        %v1152 = vunpack.c.h.b16 %v438
        %v1153 = vunpack.c.l.b16 %v439
        %v1154 = vunpack.c.h.b16 %v439
        %v1155 = vunpack.c.l.b16 %v440
        %v1156 = vunpack.c.h.b16 %v440
        %v1157 = vunpack.c.l.b16 %v441
        %v1158 = vunpack.c.h.b16 %v441
        %v1159 = vunpack.c.l.b16 %v442
        %v1160 = vunpack.c.h.b16 %v442
        %v1161 = vunpack.c.l.b16 %v443
        %v1162 = vunpack.c.h.b16 %v443
        %v1163 = vunpack.c.l.b16 %v444
        %v1164 = vunpack.c.h.b16 %v444
        %v1165 = vunpack.c.l.b16 %v445
        %v1166 = vunpack.c.h.b16 %v445
        %v1167 = vunpack.c.l.b16 %v446
        %v1168 = vunpack.c.h.b16 %v446
        %v1169 = vunpack.c.l.b16 %v447
        %v1170 = vunpack.c.h.b16 %v447
        %v1171 = vunpack.c.l.b16 %v448
        %v1172 = vunpack.c.h.b16 %v448
        %v1173 = vunpack.c.l.b16 %v449
        %v1174 = vunpack.c.h.b16 %v449
        %v1175 = vunpack.c.l.b16 %v450
        %v1176 = vunpack.c.h.b16 %v450
        %v1177 = vunpack.c.l.b16 %v451
        %v1178 = vunpack.c.h.b16 %v451
        %v1179 = vunpack.c.l.b16 %v452
        %v1180 = vunpack.c.h.b16 %v452
        %v1181 = vunpack.c.l.b16 %v453
        %v1182 = vunpack.c.h.b16 %v453
        %v1183 = vunpack.c.l.b16 %v454
        %v1184 = vunpack.c.h.b16 %v454
        %v1185 = vunpack.c.l.b16 %v455
        %v1186 = vunpack.c.h.b16 %v455
        %v1187 = vunpack.c.l.b16 %v456
        %v1188 = vunpack.c.h.b16 %v456
        %v1189 = vunpack.c.l.b16 %v457
        %v1190 = vunpack.c.h.b16 %v457
        %v1191 = vunpack.c.l.b16 %v458
        %v1192 = vunpack.c.h.b16 %v458
        %v1193 = vunpack.c.l.b16 %v459
        %v1194 = vunpack.c.h.b16 %v459
        %v1195 = vunpack.c.l.b16 %v460
        %v1196 = vunpack.c.h.b16 %v460
        %v1197 = vunpack.c.l.b16 %v461
        %v1198 = vunpack.c.h.b16 %v461
        %v1199 = vunpack.c.l.b16 %v462
        %v1200 = vunpack.c.h.b16 %v462
        %v1201 = vunpack.c.l.b16 %v463
        %v1202 = vunpack.c.h.b16 %v463
        %v1203 = vunpack.c.l.b16 %v464
        %v1204 = vunpack.c.h.b16 %v464
        %v1205 = vunpack.c.l.b16 %v465
        %v1206 = vunpack.c.h.b16 %v465
        %v1207 = vunpack.c.l.b16 %v466
        %v1208 = vunpack.c.h.b16 %v466
        %v1209 = vunpack.c.l.b16 %v467
        %v1210 = vunpack.c.h.b16 %v467
        %v1211 = vunpack.c.l.b16 %v468
        %v1212 = vunpack.c.h.b16 %v468
        %v1213 = vunpack.c.l.b16 %v469
        %v1214 = vunpack.c.h.b16 %v469
        %v1215 = vunpack.c.l.b16 %v470
        %v1216 = vunpack.c.h.b16 %v470
        %v1217 = vunpack.c.l.b16 %v471
        %v1218 = vunpack.c.h.b16 %v471
        %v1219 = vunpack.c.l.b16 %v472
        %v1220 = vunpack.c.h.b16 %v472
        %v1221 = vunpack.c.l.b16 %v473
        %v1222 = vunpack.c.h.b16 %v473
        %v1223 = vunpack.c.l.b16 %v474
        %v1224 = vunpack.c.h.b16 %v474
        %v1225 = vunpack.c.l.b16 %v475
        %v1226 = vunpack.c.h.b16 %v475
        %v1227 = vunpack.c.l.b16 %v476
        %v1228 = vunpack.c.h.b16 %v476
        %v1229 = vunpack.c.l.b16 %v477
        %v1230 = vunpack.c.h.b16 %v477
        %v1231 = vunpack.c.l.b16 %v478
        %v1232 = vunpack.c.h.b16 %v478
        %v1233 = vunpack.c.l.b16 %v479
        %v1234 = vunpack.c.h.b16 %v479
        %v1235 = vunpack.c.l.b16 %v480
        %v1236 = vunpack.c.h.b16 %v480
        %v1237 = vunpack.c.l.b16 %v481
        %v1238 = vunpack.c.h.b16 %v481
        %v1239 = vunpack.c.l.b16 %v482
        %v1240 = vunpack.c.h.b16 %v482
        %v1241 = vunpack.c.l.b16 %v483
        %v1242 = vunpack.c.h.b16 %v483
        %v1243 = vunpack.c.l.b16 %v484
        %v1244 = vunpack.c.h.b16 %v484
        %v1245 = vunpack.c.l.b16 %v485
        %v1246 = vunpack.c.h.b16 %v485
        %v1247 = vunpack.c.l.b16 %v486
        %v1248 = vunpack.c.h.b16 %v486
        %v1249 = vunpack.c.l.b16 %v487
        %v1250 = vunpack.c.h.b16 %v487
        %v1251 = vunpack.c.l.b16 %v488
        %v1252 = vunpack.c.h.b16 %v488
        %v1253 = vunpack.c.l.b16 %v489
        %v1254 = vunpack.c.h.b16 %v489
        %v1255 = vunpack.c.l.b16 %v490
        %v1256 = vunpack.c.h.b16 %v490
        %v1257 = vunpack.c.l.b16 %v491
        %v1258 = vunpack.c.h.b16 %v491
        %v1259 = vunpack.c.l.b16 %v492
        %v1260 = vunpack.c.h.b16 %v492
        %v1261 = vunpack.c.l.b16 %v493
        %v1262 = vunpack.c.h.b16 %v493
        %v1263 = vunpack.c.l.b16 %v494
        %v1264 = vunpack.c.h.b16 %v494
        %v1265 = vunpack.c.l.b16 %v495
        %v1266 = vunpack.c.h.b16 %v495
        %v1267 = vunpack.c.l.b16 %v496
        %v1268 = vunpack.c.h.b16 %v496
        %v1269 = vunpack.c.l.b16 %v497
        %v1270 = vunpack.c.h.b16 %v497
        %v1271 = vunpack.c.l.b16 %v498
        %v1272 = vunpack.c.h.b16 %v498
        %v1273 = vunpack.c.l.b16 %v499
        %v1274 = vunpack.c.h.b16 %v499
        %v1275 = vunpack.c.l.b16 %v500
        %v1276 = vunpack.c.h.b16 %v500
        %v1277 = vunpack.c.l.b16 %v501
        %v1278 = vunpack.c.h.b16 %v501
        %v1279 = vunpack.c.l.b16 %v502
        %v1280 = vunpack.c.h.b16 %v502
        %v1281 = vunpack.c.l.b16 %v503
        %v1282 = vunpack.c.h.b16 %v503
        %v1283 = vunpack.c.l.b16 %v504
        %v1284 = vunpack.c.h.b16 %v504
        %v1285 = vunpack.c.l.b16 %v505
        %v1286 = vunpack.c.h.b16 %v505
        %v1287 = vunpack.c.l.b16 %v506
        %v1288 = vunpack.c.h.b16 %v506
        %v1289 = vunpack.c.l.b16 %v507
        %v1290 = vunpack.c.h.b16 %v507
        %v1291 = vunpack.c.l.b16 %v508
        %v1292 = vunpack.c.h.b16 %v508
        %v1293 = vunpack.c.l.b16 %v509
        %v1294 = vunpack.c.h.b16 %v509
        %v1295 = vunpack.c.l.b16 %v510
        %v1296 = vunpack.c.h.b16 %v510
        %v1297 = vunpack.c.l.b16 %v511
        %v1298 = vunpack.c.h.b16 %v511
        %v1299 = vunpack.c.l.b16 %v512
        %v1300 = vunpack.c.h.b16 %v512
        %v1301 = vunpack.c.l.b16 %v513
        %v1302 = vunpack.c.h.b16 %v513
        %v1303 = vunpack.c.l.b16 %v514
        %v1304 = vunpack.c.h.b16 %v514
        %v1305 = vunpack.c.l.b16 %v515
        %v1306 = vunpack.c.h.b16 %v515
        %v1307 = vunpack.c.l.b16 %v516
        %v1308 = vunpack.c.h.b16 %v516
        %v1309 = vunpack.c.l.b16 %v517
        %v1310 = vunpack.c.h.b16 %v517
        %v1311 = vunpack.c.l.b16 %v518
        %v1312 = vunpack.c.h.b16 %v518
        %v1313 = vunpack.c.l.b16 %v519
        %v1314 = vunpack.c.h.b16 %v519
        %v1315 = vunpack.c.l.b16 %v520
        %v1316 = vunpack.c.h.b16 %v520
        %v1317 = vunpack.c.l.b16 %v521
        %v1318 = vunpack.c.h.b16 %v521
        %v1319 = vunpack.c.l.b16 %v522
        %v1320 = vunpack.c.h.b16 %v522
        %v1321 = vunpack.c.l.b16 %v523
        %v1322 = vunpack.c.h.b16 %v523
        %v1323 = vunpack.c.l.b16 %v524
        %v1324 = vunpack.c.h.b16 %v524
        %v1325 = vunpack.c.l.b16 %v525
        %v1326 = vunpack.c.h.b16 %v525
        %v1327 = vunpack.c.l.b16 %v526
        %v1328 = vunpack.c.h.b16 %v526
        %v1329 = vunpack.c.l.b16 %v527
        %v1330 = vunpack.c.h.b16 %v527
        %v1331 = vunpack.c.l.b16 %v528
        %v1332 = vunpack.c.h.b16 %v528
        %v1333 = vunpack.c.l.b16 %v529
        %v1334 = vunpack.c.h.b16 %v529
        %v1335 = vpack.c.b16 %v835, %v831
        %v1336 = vpack.c.b16 %v836, %v832
        %v1337 = vpack.c.b16 %v837, %v833
        %v1338 = vpack.c.b16 %v838, %v834
        %v1339 = vpack.c.b16 %v843, %v839
        %v1340 = vpack.c.b16 %v844, %v840
        %v1341 = vpack.c.b16 %v845, %v841
        %v1342 = vpack.c.b16 %v846, %v842
        %v1343 = vpack.c.b16 %v851, %v847
        %v1344 = vpack.c.b16 %v852, %v848
        %v1345 = vpack.c.b16 %v853, %v849
        %v1346 = vpack.c.b16 %v854, %v850
        %v1347 = vpack.c.b16 %v859, %v855
        %v1348 = vpack.c.b16 %v860, %v856
        %v1349 = vpack.c.b16 %v861, %v857
        %v1350 = vpack.c.b16 %v862, %v858
        %v1351 = vpack.c.b16 %v867, %v863
        %v1352 = vpack.c.b16 %v868, %v864
        %v1353 = vpack.c.b16 %v869, %v865
        %v1354 = vpack.c.b16 %v870, %v866
        %v1355 = vpack.c.b16 %v875, %v871
        %v1356 = vpack.c.b16 %v876, %v872
        %v1357 = vpack.c.b16 %v877, %v873
        %v1358 = vpack.c.b16 %v878, %v874
        %v1359 = vpack.c.b16 %v883, %v879
        %v1360 = vpack.c.b16 %v884, %v880
        %v1361 = vpack.c.b16 %v885, %v881
        %v1362 = vpack.c.b16 %v886, %v882
        %v1363 = vpack.c.b16 %v891, %v887
        %v1364 = vpack.c.b16 %v892, %v888
        %v1365 = vpack.c.b16 %v893, %v889
        %v1366 = vpack.c.b16 %v894, %v890
        %v1367 = vpack.c.b16 %v899, %v895
        %v1368 = vpack.c.b16 %v900, %v896
        %v1369 = vpack.c.b16 %v901, %v897
        %v1370 = vpack.c.b16 %v902, %v898
        %v1371 = vpack.c.b16 %v907, %v903
        %v1372 = vpack.c.b16 %v908, %v904
        %v1373 = vpack.c.b16 %v909, %v905
        %v1374 = vpack.c.b16 %v910, %v906
        %v1375 = vpack.c.b16 %v915, %v911
        %v1376 = vpack.c.b16 %v916, %v912
        %v1377 = vpack.c.b16 %v917, %v913
        %v1378 = vpack.c.b16 %v918, %v914
        %v1379 = vpack.c.b16 %v923, %v919
        %v1380 = vpack.c.b16 %v924, %v920
        %v1381 = vpack.c.b16 %v925, %v921
        %v1382 = vpack.c.b16 %v926, %v922
        %v1383 = vpack.c.b16 %v931, %v927
        %v1384 = vpack.c.b16 %v932, %v928
        %v1385 = vpack.c.b16 %v933, %v929
        %v1386 = vpack.c.b16 %v934, %v930
        %v1387 = vpack.c.b16 %v939, %v935
        %v1388 = vpack.c.b16 %v940, %v936
        %v1389 = vpack.c.b16 %v941, %v937
        %v1390 = vpack.c.b16 %v942, %v938
        %v1391 = vpack.c.b16 %v947, %v943
        %v1392 = vpack.c.b16 %v948, %v944
        %v1393 = vpack.c.b16 %v949, %v945
        %v1394 = vpack.c.b16 %v950, %v946
        %v1395 = vpack.c.b16 %v955, %v951
        %v1396 = vpack.c.b16 %v956, %v952
        %v1397 = vpack.c.b16 %v957, %v953
        %v1398 = vpack.c.b16 %v958, %v954
        %v1399 = vpack.c.b16 %v963, %v959
        %v1400 = vpack.c.b16 %v964, %v960
        %v1401 = vpack.c.b16 %v965, %v961
        %v1402 = vpack.c.b16 %v966, %v962
        %v1403 = vpack.c.b16 %v971, %v967
        %v1404 = vpack.c.b16 %v972, %v968
        %v1405 = vpack.c.b16 %v973, %v969
        %v1406 = vpack.c.b16 %v974, %v970
        %v1407 = vpack.c.b16 %v979, %v975
        %v1408 = vpack.c.b16 %v980, %v976
        %v1409 = vpack.c.b16 %v981, %v977
        %v1410 = vpack.c.b16 %v982, %v978
        %v1411 = vpack.c.b16 %v987, %v983
        %v1412 = vpack.c.b16 %v988, %v984
        %v1413 = vpack.c.b16 %v989, %v985
        %v1414 = vpack.c.b16 %v990, %v986
        %v1415 = vpack.c.b16 %v995, %v991
        %v1416 = vpack.c.b16 %v996, %v992
        %v1417 = vpack.c.b16 %v997, %v993
        %v1418 = vpack.c.b16 %v998, %v994
        %v1419 = vpack.c.b16 %v1003, %v999
        %v1420 = vpack.c.b16 %v1004, %v1000
        %v1421 = vpack.c.b16 %v1005, %v1001
        %v1422 = vpack.c.b16 %v1006, %v1002
        %v1423 = vpack.c.b16 %v1011, %v1007
        %v1424 = vpack.c.b16 %v1012, %v1008
        %v1425 = vpack.c.b16 %v1013, %v1009
        %v1426 = vpack.c.b16 %v1014, %v1010
        %v1427 = vpack.c.b16 %v1019, %v1015
        %v1428 = vpack.c.b16 %v1020, %v1016
        %v1429 = vpack.c.b16 %v1021, %v1017
        %v1430 = vpack.c.b16 %v1022, %v1018
        %v1431 = vpack.c.b16 %v1027, %v1023
        %v1432 = vpack.c.b16 %v1028, %v1024
        %v1433 = vpack.c.b16 %v1029, %v1025
        %v1434 = vpack.c.b16 %v1030, %v1026
        %v1435 = vpack.c.b16 %v1035, %v1031
        %v1436 = vpack.c.b16 %v1036, %v1032
        %v1437 = vpack.c.b16 %v1037, %v1033
        %v1438 = vpack.c.b16 %v1038, %v1034
        %v1439 = vpack.c.b16 %v1043, %v1039
        %v1440 = vpack.c.b16 %v1044, %v1040
        %v1441 = vpack.c.b16 %v1045, %v1041
        %v1442 = vpack.c.b16 %v1046, %v1042
        %v1443 = vpack.c.b16 %v1051, %v1047
        %v1444 = vpack.c.b16 %v1052, %v1048
        %v1445 = vpack.c.b16 %v1053, %v1049
        %v1446 = vpack.c.b16 %v1054, %v1050
        %v1447 = vpack.c.b16 %v1059, %v1055
        %v1448 = vpack.c.b16 %v1060, %v1056
        %v1449 = vpack.c.b16 %v1061, %v1057
        %v1450 = vpack.c.b16 %v1062, %v1058
        %v1451 = vpack.c.b16 %v1067, %v1063
        %v1452 = vpack.c.b16 %v1068, %v1064
        %v1453 = vpack.c.b16 %v1069, %v1065
        %v1454 = vpack.c.b16 %v1070, %v1066
        %v1455 = vpack.c.b16 %v1075, %v1071
        %v1456 = vpack.c.b16 %v1076, %v1072
        %v1457 = vpack.c.b16 %v1077, %v1073
        %v1458 = vpack.c.b16 %v1078, %v1074
        %v1459 = vpack.c.b16 %v1083, %v1079
        %v1460 = vpack.c.b16 %v1084, %v1080
        %v1461 = vpack.c.b16 %v1085, %v1081
        %v1462 = vpack.c.b16 %v1086, %v1082
        %v1463 = vpack.c.b16 %v1091, %v1087
        %v1464 = vpack.c.b16 %v1092, %v1088
        %v1465 = vpack.c.b16 %v1093, %v1089
        %v1466 = vpack.c.b16 %v1094, %v1090
        %v1467 = vpack.c.b16 %v1099, %v1095
        %v1468 = vpack.c.b16 %v1100, %v1096
        %v1469 = vpack.c.b16 %v1101, %v1097
        %v1470 = vpack.c.b16 %v1102, %v1098
        %v1471 = vpack.c.b16 %v1107, %v1103
        %v1472 = vpack.c.b16 %v1108, %v1104
        %v1473 = vpack.c.b16 %v1109, %v1105
        %v1474 = vpack.c.b16 %v1110, %v1106
        %v1475 = vpack.c.b16 %v1115, %v1111
        %v1476 = vpack.c.b16 %v1116, %v1112
        %v1477 = vpack.c.b16 %v1117, %v1113
        %v1478 = vpack.c.b16 %v1118, %v1114
        %v1479 = vpack.c.b16 %v1123, %v1119
        %v1480 = vpack.c.b16 %v1124, %v1120
        %v1481 = vpack.c.b16 %v1125, %v1121
        %v1482 = vpack.c.b16 %v1126, %v1122
        %v1483 = vpack.c.b16 %v1131, %v1127
        %v1484 = vpack.c.b16 %v1132, %v1128
        %v1485 = vpack.c.b16 %v1133, %v1129
        %v1486 = vpack.c.b16 %v1134, %v1130
        %v1487 = vpack.c.b16 %v1139, %v1135
        %v1488 = vpack.c.b16 %v1140, %v1136
        %v1489 = vpack.c.b16 %v1141, %v1137
        %v1490 = vpack.c.b16 %v1142, %v1138
        %v1491 = vpack.c.b16 %v1147, %v1143
        %v1492 = vpack.c.b16 %v1148, %v1144
        %v1493 = vpack.c.b16 %v1149, %v1145
        %v1494 = vpack.c.b16 %v1150, %v1146
        %v1495 = vpack.c.b16 %v1155, %v1151
        %v1496 = vpack.c.b16 %v1156, %v1152
        %v1497 = vpack.c.b16 %v1157, %v1153
        %v1498 = vpack.c.b16 %v1158, %v1154
        %v1499 = vpack.c.b16 %v1163, %v1159
        %v1500 = vpack.c.b16 %v1164, %v1160
        %v1501 = vpack.c.b16 %v1165, %v1161
        %v1502 = vpack.c.b16 %v1166, %v1162
        %v1503 = vpack.c.b16 %v1171, %v1167
        %v1504 = vpack.c.b16 %v1172, %v1168
        %v1505 = vpack.c.b16 %v1173, %v1169
        %v1506 = vpack.c.b16 %v1174, %v1170
        %v1507 = vpack.c.b16 %v1179, %v1175
        %v1508 = vpack.c.b16 %v1180, %v1176
        %v1509 = vpack.c.b16 %v1181, %v1177
        %v1510 = vpack.c.b16 %v1182, %v1178
        %v1511 = vpack.c.b16 %v1187, %v1183
        %v1512 = vpack.c.b16 %v1188, %v1184
        %v1513 = vpack.c.b16 %v1189, %v1185
        %v1514 = vpack.c.b16 %v1190, %v1186
        %v1515 = vpack.c.b16 %v1195, %v1191
        %v1516 = vpack.c.b16 %v1196, %v1192
        %v1517 = vpack.c.b16 %v1197, %v1193
        %v1518 = vpack.c.b16 %v1198, %v1194
        %v1519 = vpack.c.b16 %v1203, %v1199
        %v1520 = vpack.c.b16 %v1204, %v1200
        %v1521 = vpack.c.b16 %v1205, %v1201
        %v1522 = vpack.c.b16 %v1206, %v1202
        %v1523 = vpack.c.b16 %v1211, %v1207
        %v1524 = vpack.c.b16 %v1212, %v1208
        %v1525 = vpack.c.b16 %v1213, %v1209
        %v1526 = vpack.c.b16 %v1214, %v1210
        %v1527 = vpack.c.b16 %v1219, %v1215
        %v1528 = vpack.c.b16 %v1220, %v1216
        %v1529 = vpack.c.b16 %v1221, %v1217
        %v1530 = vpack.c.b16 %v1222, %v1218
        %v1531 = vpack.c.b16 %v1227, %v1223
        %v1532 = vpack.c.b16 %v1228, %v1224
        %v1533 = vpack.c.b16 %v1229, %v1225
        %v1534 = vpack.c.b16 %v1230, %v1226
        %v1535 = vpack.c.b16 %v1235, %v1231
        %v1536 = vpack.c.b16 %v1236, %v1232
        %v1537 = vpack.c.b16 %v1237, %v1233
        %v1538 = vpack.c.b16 %v1238, %v1234
        %v1539 = vpack.c.b16 %v1243, %v1239
        %v1540 = vpack.c.b16 %v1244, %v1240
        %v1541 = vpack.c.b16 %v1245, %v1241
        %v1542 = vpack.c.b16 %v1246, %v1242
        %v1543 = vpack.c.b16 %v1251, %v1247
        %v1544 = vpack.c.b16 %v1252, %v1248
        %v1545 = vpack.c.b16 %v1253, %v1249
        %v1546 = vpack.c.b16 %v1254, %v1250
        %v1547 = vpack.c.b16 %v1259, %v1255
        %v1548 = vpack.c.b16 %v1260, %v1256
        %v1549 = vpack.c.b16 %v1261, %v1257
        %v1550 = vpack.c.b16 %v1262, %v1258
        %v1551 = vpack.c.b16 %v1267, %v1263
        %v1552 = vpack.c.b16 %v1268, %v1264
        %v1553 = vpack.c.b16 %v1269, %v1265
        %v1554 = vpack.c.b16 %v1270, %v1266
        %v1555 = vpack.c.b16 %v1275, %v1271
        %v1556 = vpack.c.b16 %v1276, %v1272
        %v1557 = vpack.c.b16 %v1277, %v1273
        %v1558 = vpack.c.b16 %v1278, %v1274
        %v1559 = vpack.c.b16 %v1283, %v1279
        %v1560 = vpack.c.b16 %v1284, %v1280
        %v1561 = vpack.c.b16 %v1285, %v1281
        %v1562 = vpack.c.b16 %v1286, %v1282
        %v1563 = vpack.c.b16 %v1291, %v1287
        %v1564 = vpack.c.b16 %v1292, %v1288
        %v1565 = vpack.c.b16 %v1293, %v1289
        %v1566 = vpack.c.b16 %v1294, %v1290
        %v1567 = vpack.c.b16 %v1299, %v1295
        %v1568 = vpack.c.b16 %v1300, %v1296
        %v1569 = vpack.c.b16 %v1301, %v1297
        %v1570 = vpack.c.b16 %v1302, %v1298
        %v1571 = vpack.c.b16 %v1307, %v1303
        %v1572 = vpack.c.b16 %v1308, %v1304
        %v1573 = vpack.c.b16 %v1309, %v1305
        %v1574 = vpack.c.b16 %v1310, %v1306
        %v1575 = vpack.c.b16 %v1315, %v1311
        %v1576 = vpack.c.b16 %v1316, %v1312
        %v1577 = vpack.c.b16 %v1317, %v1313
        %v1578 = vpack.c.b16 %v1318, %v1314
        %v1579 = vpack.c.b16 %v1323, %v1319
        %v1580 = vpack.c.b16 %v1324, %v1320
        %v1581 = vpack.c.b16 %v1325, %v1321
        %v1582 = vpack.c.b16 %v1326, %v1322
        %v1583 = vpack.c.b16 %v1331, %v1327
        %v1584 = vpack.c.b16 %v1332, %v1328
        %v1585 = vpack.c.b16 %v1333, %v1329
        %v1586 = vpack.c.b16 %v1334, %v1330
        %vm1839 = vcmask 916480
        %v1841 = vsel %vm1839, %v571, 0
        %1843 = vmatprep.subr.bf16.mxu0 %v1336
        %1844 = vmatpush1.bf16.msra.mxu0 %v1335
        %1845 = vmatprep.subr.bf16.mxu0 %v1340
        %1846 = vmatpush1.bf16.msra.mxu0 %v1339
        %1847 = vmatprep.subr.bf16.mxu0 %v1344
        %1848 = vmatpush1.bf16.msra.mxu0 %v1343
        %1849 = vmatprep.subr.bf16.mxu0 %v1348
        %1850 = vmatpush1.bf16.msra.mxu0 %v1347
        %1851 = vmatprep.subr.bf16.mxu0 %v1352
        %1852 = vmatpush1.bf16.msra.mxu0 %v1351
        %1853 = vmatprep.subr.bf16.mxu0 %v1356
        %1854 = vmatpush1.bf16.msra.mxu0 %v1355
        %1855 = vmatprep.subr.bf16.mxu0 %v1360
        %1856 = vmatpush1.bf16.msra.mxu0 %v1359
        %1857 = vmatprep.subr.bf16.mxu0 %v1364
        %1858 = vmatpush1.bf16.msra.mxu0 %v1363
        %1859 = vmatprep.subr.bf16.mxu0 %v1368
        %1860 = vmatpush1.bf16.msra.mxu0 %v1367
        %1861 = vmatprep.subr.bf16.mxu0 %v1372
        %1862 = vmatpush1.bf16.msra.mxu0 %v1371
        %1863 = vmatprep.subr.bf16.mxu0 %v1376
        %1864 = vmatpush1.bf16.msra.mxu0 %v1375
        %1865 = vmatprep.subr.bf16.mxu0 %v1380
        %1866 = vmatpush1.bf16.msra.mxu0 %v1379
        %1867 = vmatprep.subr.bf16.mxu0 %v1384
        %1868 = vmatpush1.bf16.msra.mxu0 %v1383
        %1869 = vmatprep.subr.bf16.mxu0 %v1388
        %1870 = vmatpush1.bf16.msra.mxu0 %v1387
        %1871 = vmatprep.subr.bf16.mxu0 %v1392
        %1872 = vmatpush1.bf16.msra.mxu0 %v1391
        %1873 = vmatprep.subr.bf16.mxu0 %v1396
        %1874 = vmatpush1.bf16.msra.mxu0 %v1395
        %1875 = vmatprep.mubr.bf16.mxu0 %v565
        %1876 = vmatmul.mubr.bf16.gmra.mrb[0].mxu0 %v564
        %v1877 = vpop.f32.mrb[0].mxu0
        %v1878 = vadd.f32 %v535, %v1877
        %v1879 = vpop.f32.mrb[0].mxu0
        %v1880 = vadd.f32 %v539, %v1879
        %v1881 = vpop.f32.mrb[0].mxu0
        %v1882 = vpop.f32.mrb[0].mxu0
        %1883 = vdwg.mxu0
        %1884 = vmatprep.subr.bf16.mxu0 %v1400
        %1885 = vmatpush1.bf16.msra.mxu0 %v1399
        %1886 = vmatprep.subr.bf16.mxu0 %v1404
        %1887 = vmatpush1.bf16.msra.mxu0 %v1403
        %1888 = vmatprep.subr.bf16.mxu0 %v1408
        %1889 = vmatpush1.bf16.msra.mxu0 %v1407
        %1890 = vmatprep.subr.bf16.mxu0 %v1412
        %1891 = vmatpush1.bf16.msra.mxu0 %v1411
        %1892 = vmatprep.subr.bf16.mxu0 %v1416
        %1893 = vmatpush1.bf16.msra.mxu0 %v1415
        %1894 = vmatprep.subr.bf16.mxu0 %v1420
        %1895 = vmatpush1.bf16.msra.mxu0 %v1419
        %1896 = vmatprep.subr.bf16.mxu0 %v1424
        %1897 = vmatpush1.bf16.msra.mxu0 %v1423
        %1898 = vmatprep.subr.bf16.mxu0 %v1428
        %1899 = vmatpush1.bf16.msra.mxu0 %v1427
        %1900 = vmatprep.subr.bf16.mxu0 %v1432
        %1901 = vmatpush1.bf16.msra.mxu0 %v1431
        %1902 = vmatprep.subr.bf16.mxu0 %v1436
        %1903 = vmatpush1.bf16.msra.mxu0 %v1435
        %1904 = vmatprep.subr.bf16.mxu0 %v1440
        %1905 = vmatpush1.bf16.msra.mxu0 %v1439
        %1906 = vmatprep.subr.bf16.mxu0 %v1444
        %1907 = vmatpush1.bf16.msra.mxu0 %v1443
        %1908 = vmatprep.subr.bf16.mxu0 %v1448
        %1909 = vmatpush1.bf16.msra.mxu0 %v1447
        %1910 = vmatprep.subr.bf16.mxu0 %v1452
        %1911 = vmatpush1.bf16.msra.mxu0 %v1451
        %1912 = vmatprep.subr.bf16.mxu0 %v1456
        %1913 = vmatpush1.bf16.msra.mxu0 %v1455
        %1914 = vmatprep.subr.bf16.mxu0 %v1460
        %1915 = vmatpush1.bf16.msra.mxu0 %v1459
        %1916 = vmatprep.mubr.bf16.mxu0 %v567
        %1917 = vmatmul.mubr.bf16.gmra.mrb[0].mxu0 %v566
        %v1918 = vpop.f32.mrb[0].mxu0
        %v1919 = vadd.f32 %v1878, %v1918
        %v1920 = vpop.f32.mrb[0].mxu0
        %v1921 = vadd.f32 %v1880, %v1920
        %v1922 = vpop.f32.mrb[0].mxu0
        %v1923 = vpop.f32.mrb[0].mxu0
        %1924 = vdwg.mxu0
        %1925 = vmatprep.subr.bf16.mxu0 %v1464
        %1926 = vmatpush1.bf16.msra.mxu0 %v1463
        %1927 = vmatprep.subr.bf16.mxu0 %v1468
        %1928 = vmatpush1.bf16.msra.mxu0 %v1467
        %1929 = vmatprep.subr.bf16.mxu0 %v1472
        %1930 = vmatpush1.bf16.msra.mxu0 %v1471
        %1931 = vmatprep.subr.bf16.mxu0 %v1476
        %1932 = vmatpush1.bf16.msra.mxu0 %v1475
        %1933 = vmatprep.subr.bf16.mxu0 %v1480
        %1934 = vmatpush1.bf16.msra.mxu0 %v1479
        %1935 = vmatprep.subr.bf16.mxu0 %v1484
        %1936 = vmatpush1.bf16.msra.mxu0 %v1483
        %1937 = vmatprep.subr.bf16.mxu0 %v1488
        %1938 = vmatpush1.bf16.msra.mxu0 %v1487
        %1939 = vmatprep.subr.bf16.mxu0 %v1492
        %1940 = vmatpush1.bf16.msra.mxu0 %v1491
        %1941 = vmatprep.subr.bf16.mxu0 %v1496
        %1942 = vmatpush1.bf16.msra.mxu0 %v1495
        %1943 = vmatprep.subr.bf16.mxu0 %v1500
        %1944 = vmatpush1.bf16.msra.mxu0 %v1499
        %1945 = vmatprep.subr.bf16.mxu0 %v1504
        %1946 = vmatpush1.bf16.msra.mxu0 %v1503
        %1947 = vmatprep.subr.bf16.mxu0 %v1508
        %1948 = vmatpush1.bf16.msra.mxu0 %v1507
        %1949 = vmatprep.subr.bf16.mxu0 %v1512
        %1950 = vmatpush1.bf16.msra.mxu0 %v1511
        %1951 = vmatprep.subr.bf16.mxu0 %v1516
        %1952 = vmatpush1.bf16.msra.mxu0 %v1515
        %1953 = vmatprep.subr.bf16.mxu0 %v1520
        %1954 = vmatpush1.bf16.msra.mxu0 %v1519
        %1955 = vmatprep.subr.bf16.mxu0 %v1524
        %1956 = vmatpush1.bf16.msra.mxu0 %v1523
        %1957 = vmatprep.mubr.bf16.mxu0 %v569
        %1958 = vmatmul.mubr.bf16.gmra.mrb[0].mxu0 %v568
        %v1959 = vpop.f32.mrb[0].mxu0
        %v1960 = vadd.f32 %v1919, %v1959
        %v1961 = vpop.f32.mrb[0].mxu0
        %v1962 = vadd.f32 %v1921, %v1961
        %v1963 = vpop.f32.mrb[0].mxu0
        %v1964 = vpop.f32.mrb[0].mxu0
        %1965 = vdwg.mxu0
        %1966 = vmatprep.subr.bf16.mxu0 %v1528
        %1967 = vmatpush1.bf16.msra.mxu0 %v1527
        %1968 = vmatprep.subr.bf16.mxu0 %v1532
        %1969 = vmatpush1.bf16.msra.mxu0 %v1531
        %1970 = vmatprep.subr.bf16.mxu0 %v1536
        %1971 = vmatpush1.bf16.msra.mxu0 %v1535
        %1972 = vmatprep.subr.bf16.mxu0 %v1540
        %1973 = vmatpush1.bf16.msra.mxu0 %v1539
        %1974 = vmatprep.subr.bf16.mxu0 %v1544
        %1975 = vmatpush1.bf16.msra.mxu0 %v1543
        %1976 = vmatprep.subr.bf16.mxu0 %v1548
        %1977 = vmatpush1.bf16.msra.mxu0 %v1547
        %1978 = vmatprep.subr.bf16.mxu0 %v1552
        %1979 = vmatpush1.bf16.msra.mxu0 %v1551
        %1980 = vmatprep.subr.bf16.mxu0 %v1556
        %1981 = vmatpush1.bf16.msra.mxu0 %v1555
        %1982 = vmatprep.subr.bf16.mxu0 %v1560
        %1983 = vmatpush1.bf16.msra.mxu0 %v1559
        %1984 = vmatprep.subr.bf16.mxu0 %v1564
        %1985 = vmatpush1.bf16.msra.mxu0 %v1563
        %1986 = vmatprep.subr.bf16.mxu0 %v1568
        %1987 = vmatpush1.bf16.msra.mxu0 %v1567
        %1988 = vmatprep.subr.bf16.mxu0 %v1572
        %1989 = vmatpush1.bf16.msra.mxu0 %v1571
        %1990 = vmatprep.subr.bf16.mxu0 %v1576
        %1991 = vmatpush1.bf16.msra.mxu0 %v1575
        %1992 = vmatprep.subr.bf16.mxu0 %v1580
        %1993 = vmatpush1.bf16.msra.mxu0 %v1579
        %1994 = vmatprep.subr.bf16.mxu0 %v1584
        %1995 = vmatpush1.bf16.msra.mxu0 %v1583
        %1996 = vmatprep.subr.bf16.mxu0 0
        %1997 = vmatpush1.bf16.msra.mxu0 0
        %1998 = vmatprep.mubr.bf16.mxu0 %v1841
        %1999 = vmatmul.mubr.bf16.gmra.mrb[0].mxu0 %v570
        %v2000 = vpop.f32.mrb[0].mxu0
        %v2001 = vadd.f32 %v1960, %v2000
        %v2002 = vpop.f32.mrb[0].mxu0
        %v2003 = vadd.f32 %v1962, %v2002
        %v2004 = vpop.f32.mrb[0].mxu0
        %v2005 = vpop.f32.mrb[0].mxu0
        %2006 = vdwg.mxu0
        %2007 = vmatprep.subr.bf16.mxu0 %v1338
        %2008 = vmatpush1.bf16.msra.mxu0 %v1337
        %2009 = vmatprep.subr.bf16.mxu0 %v1342
        %2010 = vmatpush1.bf16.msra.mxu0 %v1341
        %2011 = vmatprep.subr.bf16.mxu0 %v1346
        %2012 = vmatpush1.bf16.msra.mxu0 %v1345
        %2013 = vmatprep.subr.bf16.mxu0 %v1350
        %2014 = vmatpush1.bf16.msra.mxu0 %v1349
        %2015 = vmatprep.subr.bf16.mxu0 %v1354
        %2016 = vmatpush1.bf16.msra.mxu0 %v1353
        %2017 = vmatprep.subr.bf16.mxu0 %v1358
        %2018 = vmatpush1.bf16.msra.mxu0 %v1357
        %2019 = vmatprep.subr.bf16.mxu0 %v1362
        %2020 = vmatpush1.bf16.msra.mxu0 %v1361
        %2021 = vmatprep.subr.bf16.mxu0 %v1366
        %2022 = vmatpush1.bf16.msra.mxu0 %v1365
        %2023 = vmatprep.subr.bf16.mxu0 %v1370
        %2024 = vmatpush1.bf16.msra.mxu0 %v1369
        %2025 = vmatprep.subr.bf16.mxu0 %v1374
        %2026 = vmatpush1.bf16.msra.mxu0 %v1373
        %2027 = vmatprep.subr.bf16.mxu0 %v1378
        %2028 = vmatpush1.bf16.msra.mxu0 %v1377
        %2029 = vmatprep.subr.bf16.mxu0 %v1382
        %2030 = vmatpush1.bf16.msra.mxu0 %v1381
        %2031 = vmatprep.subr.bf16.mxu0 %v1386
        %2032 = vmatpush1.bf16.msra.mxu0 %v1385
        %2033 = vmatprep.subr.bf16.mxu0 %v1390
        %2034 = vmatpush1.bf16.msra.mxu0 %v1389
        %2035 = vmatprep.subr.bf16.mxu0 %v1394
        %2036 = vmatpush1.bf16.msra.mxu0 %v1393
        %2037 = vmatprep.subr.bf16.mxu0 %v1398
        %2038 = vmatpush1.bf16.msra.mxu0 %v1397
        %2039 = vmatprep.mubr.bf16.mxu0 %v565
        %2040 = vmatmul.mubr.bf16.gmra.mrb[0].mxu0 %v564
        %v2041 = vpop.f32.mrb[0].mxu0
        %v2042 = vadd.f32 %v543, %v2041
        %v2043 = vpop.f32.mrb[0].mxu0
        %v2044 = vadd.f32 %v547, %v2043
        %v2045 = vpop.f32.mrb[0].mxu0
        %v2046 = vpop.f32.mrb[0].mxu0
        %2047 = vdwg.mxu0
        %2048 = vmatprep.subr.bf16.mxu0 %v1402
        %2049 = vmatpush1.bf16.msra.mxu0 %v1401
        %2050 = vmatprep.subr.bf16.mxu0 %v1406
        %2051 = vmatpush1.bf16.msra.mxu0 %v1405
        %2052 = vmatprep.subr.bf16.mxu0 %v1410
        %2053 = vmatpush1.bf16.msra.mxu0 %v1409
        %2054 = vmatprep.subr.bf16.mxu0 %v1414
        %2055 = vmatpush1.bf16.msra.mxu0 %v1413
        %2056 = vmatprep.subr.bf16.mxu0 %v1418
        %2057 = vmatpush1.bf16.msra.mxu0 %v1417
        %2058 = vmatprep.subr.bf16.mxu0 %v1422
        %2059 = vmatpush1.bf16.msra.mxu0 %v1421
        %2060 = vmatprep.subr.bf16.mxu0 %v1426
        %2061 = vmatpush1.bf16.msra.mxu0 %v1425
        %2062 = vmatprep.subr.bf16.mxu0 %v1430
        %2063 = vmatpush1.bf16.msra.mxu0 %v1429
        %2064 = vmatprep.subr.bf16.mxu0 %v1434
        %2065 = vmatpush1.bf16.msra.mxu0 %v1433
        %2066 = vmatprep.subr.bf16.mxu0 %v1438
        %2067 = vmatpush1.bf16.msra.mxu0 %v1437
        %2068 = vmatprep.subr.bf16.mxu0 %v1442
        %2069 = vmatpush1.bf16.msra.mxu0 %v1441
        %2070 = vmatprep.subr.bf16.mxu0 %v1446
        %2071 = vmatpush1.bf16.msra.mxu0 %v1445
        %2072 = vmatprep.subr.bf16.mxu0 %v1450
        %2073 = vmatpush1.bf16.msra.mxu0 %v1449
        %2074 = vmatprep.subr.bf16.mxu0 %v1454
        %2075 = vmatpush1.bf16.msra.mxu0 %v1453
        %2076 = vmatprep.subr.bf16.mxu0 %v1458
        %2077 = vmatpush1.bf16.msra.mxu0 %v1457
        %2078 = vmatprep.subr.bf16.mxu0 %v1462
        %2079 = vmatpush1.bf16.msra.mxu0 %v1461
        %2080 = vmatprep.mubr.bf16.mxu0 %v567
        %2081 = vmatmul.mubr.bf16.gmra.mrb[0].mxu0 %v566
        %v2082 = vpop.f32.mrb[0].mxu0
        %v2083 = vadd.f32 %v2042, %v2082
        %v2084 = vpop.f32.mrb[0].mxu0
        %v2085 = vadd.f32 %v2044, %v2084
        %v2086 = vpop.f32.mrb[0].mxu0
        %v2087 = vpop.f32.mrb[0].mxu0
        %2088 = vdwg.mxu0
        %2089 = vmatprep.subr.bf16.mxu0 %v1466
        %2090 = vmatpush1.bf16.msra.mxu0 %v1465
        %2091 = vmatprep.subr.bf16.mxu0 %v1470
        %2092 = vmatpush1.bf16.msra.mxu0 %v1469
        %2093 = vmatprep.subr.bf16.mxu0 %v1474
        %2094 = vmatpush1.bf16.msra.mxu0 %v1473
        %2095 = vmatprep.subr.bf16.mxu0 %v1478
        %2096 = vmatpush1.bf16.msra.mxu0 %v1477
        %2097 = vmatprep.subr.bf16.mxu0 %v1482
        %2098 = vmatpush1.bf16.msra.mxu0 %v1481
        %2099 = vmatprep.subr.bf16.mxu0 %v1486
        %2100 = vmatpush1.bf16.msra.mxu0 %v1485
        %2101 = vmatprep.subr.bf16.mxu0 %v1490
        %2102 = vmatpush1.bf16.msra.mxu0 %v1489
        %2103 = vmatprep.subr.bf16.mxu0 %v1494
        %2104 = vmatpush1.bf16.msra.mxu0 %v1493
        %2105 = vmatprep.subr.bf16.mxu0 %v1498
        %2106 = vmatpush1.bf16.msra.mxu0 %v1497
        %2107 = vmatprep.subr.bf16.mxu0 %v1502
        %2108 = vmatpush1.bf16.msra.mxu0 %v1501
        %2109 = vmatprep.subr.bf16.mxu0 %v1506
        %2110 = vmatpush1.bf16.msra.mxu0 %v1505
        %2111 = vmatprep.subr.bf16.mxu0 %v1510
        %2112 = vmatpush1.bf16.msra.mxu0 %v1509
        %2113 = vmatprep.subr.bf16.mxu0 %v1514
        %2114 = vmatpush1.bf16.msra.mxu0 %v1513
        %2115 = vmatprep.subr.bf16.mxu0 %v1518
        %2116 = vmatpush1.bf16.msra.mxu0 %v1517
        %2117 = vmatprep.subr.bf16.mxu0 %v1522
        %2118 = vmatpush1.bf16.msra.mxu0 %v1521
        %2119 = vmatprep.subr.bf16.mxu0 %v1526
        %2120 = vmatpush1.bf16.msra.mxu0 %v1525
        %2121 = vmatprep.mubr.bf16.mxu0 %v569
        %2122 = vmatmul.mubr.bf16.gmra.mrb[0].mxu0 %v568
        %v2123 = vpop.f32.mrb[0].mxu0
        %v2124 = vadd.f32 %v2083, %v2123
        %v2125 = vpop.f32.mrb[0].mxu0
        %v2126 = vadd.f32 %v2085, %v2125
        %v2127 = vpop.f32.mrb[0].mxu0
        %v2128 = vpop.f32.mrb[0].mxu0
        %2129 = vdwg.mxu0
        %2130 = vmatprep.subr.bf16.mxu0 %v1530
        %2131 = vmatpush1.bf16.msra.mxu0 %v1529
        %2132 = vmatprep.subr.bf16.mxu0 %v1534
        %2133 = vmatpush1.bf16.msra.mxu0 %v1533
        %2134 = vmatprep.subr.bf16.mxu0 %v1538
        %2135 = vmatpush1.bf16.msra.mxu0 %v1537
        %2136 = vmatprep.subr.bf16.mxu0 %v1542
        %2137 = vmatpush1.bf16.msra.mxu0 %v1541
        %2138 = vmatprep.subr.bf16.mxu0 %v1546
        %2139 = vmatpush1.bf16.msra.mxu0 %v1545
        %2140 = vmatprep.subr.bf16.mxu0 %v1550
        %2141 = vmatpush1.bf16.msra.mxu0 %v1549
        %2142 = vmatprep.subr.bf16.mxu0 %v1554
        %2143 = vmatpush1.bf16.msra.mxu0 %v1553
        %2144 = vmatprep.subr.bf16.mxu0 %v1558
        %2145 = vmatpush1.bf16.msra.mxu0 %v1557
        %2146 = vmatprep.subr.bf16.mxu0 %v1562
        %2147 = vmatpush1.bf16.msra.mxu0 %v1561
        %2148 = vmatprep.subr.bf16.mxu0 %v1566
        %2149 = vmatpush1.bf16.msra.mxu0 %v1565
        %2150 = vmatprep.subr.bf16.mxu0 %v1570
        %2151 = vmatpush1.bf16.msra.mxu0 %v1569
        %2152 = vmatprep.subr.bf16.mxu0 %v1574
        %2153 = vmatpush1.bf16.msra.mxu0 %v1573
        %2154 = vmatprep.subr.bf16.mxu0 %v1578
        %2155 = vmatpush1.bf16.msra.mxu0 %v1577
        %2156 = vmatprep.subr.bf16.mxu0 %v1582
        %2157 = vmatpush1.bf16.msra.mxu0 %v1581
        %2158 = vmatprep.subr.bf16.mxu0 %v1586
        %2159 = vmatpush1.bf16.msra.mxu0 %v1585
        %2160 = vmatprep.subr.bf16.mxu0 0
        %2161 = vmatpush1.bf16.msra.mxu0 0
        %2162 = vmatprep.mubr.bf16.mxu0 %v1841
        %2163 = vmatmul.mubr.bf16.gmra.mrb[0].mxu0 %v570
        %v2164 = vpop.f32.mrb[0].mxu0
        %v2165 = vadd.f32 %v2124, %v2164
        %v2166 = vpop.f32.mrb[0].mxu0
        %v2167 = vadd.f32 %v2126, %v2166
        %v2168 = vpop.f32.mrb[0].mxu0
        %v2169 = vpop.f32.mrb[0].mxu0
        %2170 = vdwg.mxu0
        %v2171 = vmax.f32 %v2001, 0.0
        %v2172 = vmax.f32 %v2003, 0.0
        %v2173 = vmax.f32 %v2165, 0.0
        %v2174 = vmax.f32 %v2167, 0.0
        %v2175 = vpack.c.bf16 %v2171, %v2171
        %v2176 = vpack.c.bf16 %v2172, %v2172
        %v2177 = vpack.c.bf16 %v2173, %v2173
        %v2178 = vpack.c.bf16 %v2174, %v2174
        %v2183 = vunpack.c.l.b16 %v2175
        %v2184 = vunpack.c.l.b16 %v2176
        %v2185 = vunpack.c.l.b16 %v2177
        %v2186 = vunpack.c.l.b16 %v2178
        %v2187 = vpack.c.b16 %v2184, %v2183
        %v2188 = vpack.c.b16 %v2186, %v2185
        %2191 = vst [vmem:[%s271] sm:$0xff] %v2187
        %2192 = vst [vmem:[%s271 + $0x8] sm:$0xff] %v2188
        %s2193 = smul.u32 4, %s24
        %p2194 = scmp.lt.s32.totalorder %s25, 0
        %s2195 = scalar_select %p2194, %s25, 0
        %p2196 = scmp.lt.s32.totalorder %s2193, 7
        %s2197 = scalar_select %p2196, %s2193, 7
        %s2198 = smul.addr %s2195, 8
        %s2199 = sadd.s32 %s2197, %s2198
        %s2200 = smul.addr %s2199, 4
        %s2201 = scalar_lea.vmem %s3, %s2200
        // Predicated region
        $region41: #{_forward_impl.2} parent=31 // pred_check
          %p2202 = pneg %p130
        $region42: #{_forward_impl.2} parent=31 // pred_check_branch
          %2204 = sbr.rel (%p2202) target = $region44
        $region43: #{_forward_impl.2} parent=31 // pred_region
          %s2205 = smul.u32 4, %s24
        $region44: #{_forward_impl.2} parent=31 // pred_fallthru
          _
      $region32: #{_forward_impl.2} parent=5 // pred_fallthru
        _
      %p2206 = scmp.le.s32.totalorder 2, %s15
      // Predicated region
      $region45: #{_forward_impl.2} parent=5 // pred_check
        %p2207 = pneg %p2206
      $region46: #{_forward_impl.2} parent=5 // pred_check_branch
        %2209 = sbr.rel (%p2207) target = $region48
      $region47: #{_forward_impl.2} parent=5 // pred_region
        %s2210 = ssub.s32 %s15, 2
        // Predicated region
        $region49: #{_forward_impl.2} parent=47 // pred_check
          %p2211 = pneg %p136
        $region50: #{_forward_impl.2} parent=47 // pred_check_branch
          %2213 = sbr.rel (%p2211) target = $region52
        $region51: #{_forward_impl.2} parent=47 // pred_region
          %s2214 = smul.u32 4, %s26
          %p2215 = scmp.lt.s32.totalorder %s27, 0
          %s2216 = scalar_select %p2215, %s27, 0
          %p2217 = scmp.lt.s32.totalorder %s2214, 7
          %s2218 = scalar_select %p2217, %s2214, 7
          %s2219 = smul.addr %s2216, 8
          %s2220 = sadd.s32 %s2218, %s2219
          %s2221 = smul.addr %s2220, 4
          %s2222 = scalar_lea.vmem %s3, %s2221
        $region52: #{_forward_impl.2} parent=47 // pred_fallthru
          _
      $region48: #{_forward_impl.2} parent=5 // pred_fallthru
        _
    $region6: #{_forward_impl.2} parent=1 // loop_footer
      %s19 = sadd.s32 1, %s15
    $region7: #{_forward_impl.2} parent=1 // loop_footer_branch
      %14 = sbr.rel target = $region3
    $region8: #{_forward_impl.2} parent=1 // loop_exit
      _
    %2223 = vsyncpa [#allocation3], 1
    %s2224 = scalar_lea.sflag [#allocation3], 1
    %2225 = vsyncpa %s2224, 1
    %2226 = vsyncpa [#allocation5], 1
    %s2227 = scalar_lea.sflag [#allocation5], 1
    %2228 = vsyncpa %s2227, 1

</llo_original>
